<compile_context>
chip_gen: v5e
topology: v5e:2x2
jax: 0.10.0
libtpu: 0.0.40
codegen_flags: <defaults>
</compile_context>

<pallas_src>
import functools

import jax
import jax.numpy as jnp
import numpy as np
from jax.experimental import pallas as pl
from jax.experimental.pallas import tpu as pltpu

LANE = 128


def _round_up(x, m):
    return ((x + m - 1) // m) * m


def rnn_kernel(x_ref, w_ih0_ref, *refs, num_layers, t_chunk, n_sub):
    # x_ref:     (t_chunk, block_b, D_in)  bf16, time-major input chunk
    # w_ih0_ref: (D_in, H_pad)             bf16, layer-0 input weights
    # w_rest_ref:(L-1, 2*H_pad, H_pad)     bf16, fused [W_ih ; W_hh] (L > 1)
    # w_hh0_ref: (H_pad, H_pad)            bf16, layer-0 recurrent weights
    # b_ref:     (L, 1, H_pad)             f32, pre-summed b_ih + b_hh
    # w_fc_ref:  (H_pad, Dp)               bf16, fc weights (lane padded)
    # b_fc_ref:  (1, Dp)                   f32, fc bias
    # y_ref:     (block_b, Dp)             f32, lane-dense output tile
    # xp_ref:    (t_chunk*block_b, H_pad)  f32 scratch, hoisted layer-0 proj
    # h_ref:     (L, block_b, H_pad)       f32 scratch, persistent hidden state
    if num_layers > 1:
        (w_rest_ref, w_hh0_ref, b_ref, w_fc_ref, b_fc_ref,
         y_ref, xp_ref, h_ref) = refs
    else:
        (w_hh0_ref, b_ref, w_fc_ref, b_fc_ref,
         y_ref, xp_ref, h_ref) = refs
        w_rest_ref = None

    block_b = y_ref.shape[0]
    sb = block_b // n_sub
    d_in = x_ref.shape[-1]
    t_idx = pl.program_id(1)

    # Fresh hidden state at the first time chunk of each batch tile.
    @pl.when(t_idx == 0)
    def _init():
        h_ref[...] = jnp.zeros_like(h_ref)

    # ---- Hoisted layer-0 input projection for the whole time chunk --------
    # One large MXU matmul (M = t_chunk*block_b) off the serialized path;
    # layer-0 bias folded in.
    x_flat = x_ref[...].reshape(t_chunk * block_b, d_in)
    xp_ref[...] = (jnp.dot(x_flat, w_ih0_ref[...],
                           preferred_element_type=jnp.float32)
                   + b_ref[0])

    # Hoist bias reads (broadcasts are not CSE'd inside the loop).
    b_rest = [b_ref[l] for l in range(1, num_layers)]

    # ---- Sequential recurrence over the chunk ------------------------------
    # Static Python unroll over timesteps/layers/sub-tiles: state is in VMEM
    # scratch, so live ranges stay short and LLO sees the whole chain.
    for tt in range(t_chunk):
        row0 = tt * block_b
        inps = [xp_ref[row0 + s * sb: row0 + (s + 1) * sb, :]
                for s in range(n_sub)]
        for l in range(num_layers):
            pres = []
            for s in range(n_sub):          # independent sub-tiles back-to-back
                h_prev = h_ref[l, s * sb:(s + 1) * sb, :].astype(jnp.bfloat16)
                if l == 0:
                    # pre-activation = xp (bias already added) + h @ W_hh
                    pre = inps[s] + jnp.dot(h_prev, w_hh0_ref[...],
                                            preferred_element_type=jnp.float32)
                else:
                    # fused [inp ; h] @ [W_ih ; W_hh] + b
                    cat = jnp.concatenate(
                        [inps[s].astype(jnp.bfloat16), h_prev], axis=-1)
                    pre = (jnp.dot(cat, w_rest_ref[l - 1],
                                   preferred_element_type=jnp.float32)
                           + b_rest[l - 1])
                pres.append(pre)
            hs = [jnp.tanh(p) for p in pres]
            for s in range(n_sub):
                h_ref[l, s * sb:(s + 1) * sb, :] = hs[s]
            inps = hs

    # ---- fc(relu(h[-1])) after the final time chunk ------------------------
    @pl.when(t_idx == pl.num_programs(1) - 1)
    def _finalize():
        h_last = jnp.maximum(h_ref[num_layers - 1], 0.0).astype(jnp.bfloat16)
        y_ref[...] = (jnp.dot(h_last, w_fc_ref[...],
                              preferred_element_type=jnp.float32)
                      + b_fc_ref[...])


def rnnnet_forward(x, params, *, num_layers, block_b=None, t_chunk_max=32):
    w_ih0, w_ihr, w_hh, b_ih, b_hh, w_fc, b_fc = params
    B, T, D_in = x.shape
    H = w_hh.shape[-1]
    D_out = w_fc.shape[1]

    f32, bf16 = jnp.float32, jnp.bfloat16
    H_pad = _round_up(H, LANE)
    Dp = _round_up(D_out, LANE)

    # --- batch tiling: pad B (no divisibility assert), >=2 tiles when large -
    if block_b is None:
        if B >= 32:
            block_b = min(256, _round_up((B + 1) // 2, 16))  # v7x: 2+ tiles
        else:
            block_b = 16
    block_b = max(16, _round_up(block_b, 16))
    B_pad = _round_up(B, block_b)
    nb = B_pad // block_b
    n_sub = 2 if block_b % 16 == 0 else 1

    # --- time chunking: largest divisor of T that fits the VMEM budget ------
    t_chunk = max(d for d in range(1, min(T, t_chunk_max) + 1) if T % d == 0)
    nt = T // t_chunk

    # --- weight prep: lane-pad H, fuse per-layer weights, pre-sum biases ----
    b_sum = (b_ih + b_hh).astype(f32)                               # (L,1,H)
    b_p = jnp.zeros((num_layers, 1, H_pad), f32).at[:, :, :H].set(b_sum)

    w_ih0_p = jnp.zeros((D_in, H_pad), f32).at[:, :H].set(w_ih0).astype(bf16)
    w_hh0_p = jnp.zeros((H_pad, H_pad), f32).at[:H, :H].set(w_hh[0]).astype(bf16)

    w_rest = None
    if num_layers > 1:
        w_rest = jnp.zeros((num_layers - 1, 2 * H_pad, H_pad), f32)
        w_rest = w_rest.at[:, :H, :H].set(w_ihr)
        w_rest = w_rest.at[:, H_pad:H_pad + H, :H].set(w_hh[1:])
        w_rest = w_rest.astype(bf16)

    w_fc_p = jnp.zeros((H_pad, Dp), f32).at[:H, :D_out].set(w_fc).astype(bf16)
    b_fc_p = jnp.zeros((1, Dp), f32).at[:, :D_out].set(b_fc)

    # --- x: pad batch, time-major, bf16 (halves HBM traffic for x) ----------
    x_p = jnp.zeros((B_pad, T, D_in), x.dtype).at[:B].set(x)
    x_tm = jnp.transpose(x_p, (1, 0, 2)).astype(bf16)               # (T,Bp,Din)

    kernel = functools.partial(rnn_kernel, num_layers=num_layers,
                               t_chunk=t_chunk, n_sub=n_sub)

    in_specs = [
        pl.BlockSpec((t_chunk, block_b, D_in), lambda i, t: (t, i, 0)),  # x
        pl.BlockSpec((D_in, H_pad), lambda i, t: (0, 0)),                # W_ih0
    ]
    operands = [x_tm, w_ih0_p]
    if num_layers > 1:
        in_specs.append(pl.BlockSpec((num_layers - 1, 2 * H_pad, H_pad),
                                     lambda i, t: (0, 0, 0)))
        operands.append(w_rest)
    in_specs += [
        pl.BlockSpec((H_pad, H_pad), lambda i, t: (0, 0)),               # W_hh0
        pl.BlockSpec((num_layers, 1, H_pad), lambda i, t: (0, 0, 0)),    # biases
        pl.BlockSpec((H_pad, Dp), lambda i, t: (0, 0)),                  # W_fc
        pl.BlockSpec((1, Dp), lambda i, t: (0, 0)),                      # b_fc
    ]
    operands += [w_hh0_p, b_p, w_fc_p, b_fc_p]

    y_pad = pl.pallas_call(
        kernel,
        out_shape=jax.ShapeDtypeStruct((B_pad, Dp), jnp.float32),
        grid=(nb, nt),
        in_specs=in_specs,
        out_specs=pl.BlockSpec((block_b, Dp), lambda i, t: (i, 0)),
        scratch_shapes=[
            pltpu.VMEM((t_chunk * block_b, H_pad), jnp.float32),  # xp
            pltpu.VMEM((num_layers, block_b, H_pad), jnp.float32),  # hidden
        ],
        compiler_params=pltpu.CompilerParams(
            dimension_semantics=("parallel", "arbitrary"),
            vmem_limit_bytes=64 * 1024 * 1024),
    )(*operands)

    return y_pad[:B, :D_out]


def init_params(key, input_size, hidden_size, output_size, num_layers):
    """PyTorch-style init (uniform +-1/sqrt(hidden)); weights stored transposed
    as (in_features, out_features)."""
    ks = jax.random.split(key, 7)
    H = hidden_size

    def uni(k, shape, fan):
        bound = 1.0 / np.sqrt(fan)
        return jax.random.uniform(k, shape, jnp.float32, -bound, bound)

    w_ih0 = uni(ks[0], (input_size, H), H)
    w_ihr = (uni(ks[1], (num_layers - 1, H, H), H)
             if num_layers > 1 else jnp.zeros((0, H, H), jnp.float32))
    w_hh = uni(ks[2], (num_layers, H, H), H)
    b_ih = uni(ks[3], (num_layers, 1, H), H)
    b_hh = uni(ks[4], (num_layers, 1, H), H)
    w_fc = uni(ks[5], (H, output_size), H)
    b_fc = uni(ks[6], (1, output_size), H)
    return (w_ih0, w_ihr, w_hh, b_ih, b_hh, w_fc, b_fc)


def rnnnet_reference(x, params, *, num_layers):
    """Pure-JAX f32 reference matching the PyTorch RNNNet forward."""
    w_ih0, w_ihr, w_hh, b_ih, b_hh, w_fc, b_fc = params
    B, T, _ = x.shape
    H = w_hh.shape[-1]
    hs = [jnp.zeros((B, H), jnp.float32) for _ in range(num_layers)]
    for t in range(T):
        inp = x[:, t, :]
        for l in range(num_layers):
            w_in = w_ih0 if l == 0 else w_ihr[l - 1]
            hs[l] = jnp.tanh(inp @ w_in + hs[l] @ w_hh[l] + b_ih[l] + b_hh[l])
            inp = hs[l]
    return jax.nn.relu(hs[-1]) @ w_fc + b_fc


if __name__ == "__main__":
    B, T = 2, 8
    input_size, hidden_size, output_size, num_layers = 16, 32, 4, 2

    key = jax.random.PRNGKey(0)
    k_x, k_p = jax.random.split(key)
    x = jax.random.normal(k_x, (B, T, input_size), dtype=jnp.float32)
    params = init_params(k_p, input_size, hidden_size, output_size, num_layers)

    y = rnnnet_forward(x, params, num_layers=num_layers)
    y = jax.block_until_ready(y)

    y_ref = rnnnet_reference(x, params, num_layers=num_layers)
    # bf16 MXU operands -> relaxed tolerance vs the f32 reference.
    np.testing.assert_allclose(np.asarray(y), np.asarray(y_ref),
                               rtol=3e-2, atol=3e-2)
    assert y.shape == (B, output_size)

    print("KERNEL_OK")
</pallas_src>

<mosaic_0001>
module attributes {stable_mosaic.version = 11 : i64} {
  func.func @rnn_kernel(%arg0: i32, %arg1: i32, %arg2: memref<8x16x16xbf16, #tpu.memory_space<vmem>>, %arg3: memref<16x128xbf16, #tpu.memory_space<vmem>>, %arg4: memref<1x256x128xbf16, #tpu.memory_space<vmem>>, %arg5: memref<128x128xbf16, #tpu.memory_space<vmem>>, %arg6: memref<2x1x128xf32, #tpu.memory_space<vmem>>, %arg7: memref<128x128xbf16, #tpu.memory_space<vmem>>, %arg8: memref<1x128xf32, #tpu.memory_space<vmem>>, %arg9: memref<16x128xf32, #tpu.memory_space<vmem>>, %arg10: memref<128x128xf32, #tpu.memory_space<vmem>>, %arg11: memref<2x16x128xf32, #tpu.memory_space<vmem>>) attributes {dimension_semantics = [#tpu.dimension_semantics<parallel>, #tpu.dimension_semantics<arbitrary>], iteration_bounds = array<i64: 1, 1>, scalar_prefetch = 0 : i64, scratch_operands = 2 : i64, tpu.core_type = #tpu.core_type<tc>, window_params = [{transform_indices = @transform_0, window_bounds = array<i64: 8, 16, 16>}, {pipeline_mode = #tpu.pipeline_mode<synchronous>, transform_indices = @transform_1, window_bounds = array<i64: 16, 128>}, {pipeline_mode = #tpu.pipeline_mode<synchronous>, transform_indices = @transform_2, window_bounds = array<i64: 1, 256, 128>}, {pipeline_mode = #tpu.pipeline_mode<synchronous>, transform_indices = @transform_3, window_bounds = array<i64: 128, 128>}, {pipeline_mode = #tpu.pipeline_mode<synchronous>, transform_indices = @transform_4, window_bounds = array<i64: 2, 1, 128>}, {pipeline_mode = #tpu.pipeline_mode<synchronous>, transform_indices = @transform_5, window_bounds = array<i64: 128, 128>}, {pipeline_mode = #tpu.pipeline_mode<synchronous>, transform_indices = @transform_6, window_bounds = array<i64: 1, 128>}, {transform_indices = @transform_7, window_bounds = array<i64: 16, 128>}]} {
    %c0_i32 = arith.constant 0 : i32
    %0 = arith.cmpi eq, %arg1, %c0_i32 : i32
    %1 = arith.extui %0 : i1 to i32
    %c0_i32_0 = arith.constant 0 : i32
    %2 = arith.cmpi ne, %1, %c0_i32_0 : i32
    scf.if %2 {
      %cst_335 = arith.constant 0.000000e+00 : f32
      %417 = vector.broadcast %cst_335 : f32 to vector<2x16x128xf32>
      %c0_336 = arith.constant 0 : index
      %c0_337 = arith.constant 0 : index
      %c0_338 = arith.constant 0 : index
      %418 = vector.load %arg11[%c0_336, %c0_337, %c0_338] : memref<2x16x128xf32, #tpu.memory_space<vmem>>, vector<2x16x128xf32>
      tpu.vector_store %arg11[%c0_336, %c0_337, %c0_338], %417 {strides = array<i32>} : memref<2x16x128xf32, #tpu.memory_space<vmem>>, vector<2x16x128xf32>,
    } else {
    }
    %c0 = arith.constant 0 : index
    %c0_1 = arith.constant 0 : index
    %c0_2 = arith.constant 0 : index
    %3 = vector.load %arg2[%c0, %c0_1, %c0_2] : memref<8x16x16xbf16, #tpu.memory_space<vmem>>, vector<8x16x16xbf16>
    %4 = vector.shape_cast %3 : vector<8x16x16xbf16> to vector<128x16xbf16>
    %c0_3 = arith.constant 0 : index
    %c0_4 = arith.constant 0 : index
    %5 = vector.load %arg3[%c0_3, %c0_4] : memref<16x128xbf16, #tpu.memory_space<vmem>>, vector<16x128xbf16>
    %cst = arith.constant dense<0.000000e+00> : vector<128x128xf32>
    %6 = tpu.matmul %4, %5, %cst {dimension_numbers = #tpu.dot_dimension_numbers<[1], [0], [0], [1], [0, 0, 1, 1], [], []>} : vector<128x16xbf16>, vector<16x128xbf16>, vector<128x128xf32> -> vector<128x128xf32>
    %c0_5 = arith.constant 0 : index
    %c0_6 = arith.constant 0 : index
    %c0_7 = arith.constant 0 : index
    %7 = vector.load %arg6[%c0_5, %c0_6, %c0_7] : memref<2x1x128xf32, #tpu.memory_space<vmem>>, vector<1x1x128xf32>
    %8 = vector.shape_cast %7 : vector<1x1x128xf32> to vector<1x128xf32>
    %9 = vector.broadcast %8 : vector<1x128xf32> to vector<128x128xf32>
    %10 = arith.addf %6, %9 : vector<128x128xf32>
    %c0_8 = arith.constant 0 : index
    %c0_9 = arith.constant 0 : index
    %11 = vector.load %arg10[%c0_8, %c0_9] : memref<128x128xf32, #tpu.memory_space<vmem>>, vector<128x128xf32>
    tpu.vector_store %arg10[%c0_8, %c0_9], %10 {strides = array<i32>} : memref<128x128xf32, #tpu.memory_space<vmem>>, vector<128x128xf32>,
    %c1 = arith.constant 1 : index
    %c0_10 = arith.constant 0 : index
    %c0_11 = arith.constant 0 : index
    %12 = vector.load %arg6[%c1, %c0_10, %c0_11] : memref<2x1x128xf32, #tpu.memory_space<vmem>>, vector<1x1x128xf32>
    %13 = vector.shape_cast %12 : vector<1x1x128xf32> to vector<1x128xf32>
    %c0_12 = arith.constant 0 : index
    %c0_13 = arith.constant 0 : index
    %14 = vector.load %arg10[%c0_12, %c0_13] : memref<128x128xf32, #tpu.memory_space<vmem>>, vector<8x128xf32>
    %c8 = arith.constant 8 : index
    %c0_14 = arith.constant 0 : index
    %15 = vector.load %arg10[%c8, %c0_14] : memref<128x128xf32, #tpu.memory_space<vmem>>, vector<8x128xf32>
    %c0_15 = arith.constant 0 : index
    %c0_16 = arith.constant 0 : index
    %c0_17 = arith.constant 0 : index
    %16 = vector.load %arg11[%c0_15, %c0_16, %c0_17] : memref<2x16x128xf32, #tpu.memory_space<vmem>>, vector<1x8x128xf32>
    %17 = vector.shape_cast %16 : vector<1x8x128xf32> to vector<8x128xf32>
    %18 = arith.truncf %17 : vector<8x128xf32> to vector<8x128xbf16>
    %c0_18 = arith.constant 0 : index
    %c0_19 = arith.constant 0 : index
    %19 = vector.load %arg5[%c0_18, %c0_19] : memref<128x128xbf16, #tpu.memory_space<vmem>>, vector<128x128xbf16>
    %cst_20 = arith.constant dense<0.000000e+00> : vector<8x128xf32>
    %20 = tpu.matmul %18, %19, %cst_20 {dimension_numbers = #tpu.dot_dimension_numbers<[1], [0], [0], [1], [0, 0, 1, 1], [], []>} : vector<8x128xbf16>, vector<128x128xbf16>, vector<8x128xf32> -> vector<8x128xf32>
    %21 = arith.addf %14, %20 : vector<8x128xf32>
    %c0_21 = arith.constant 0 : index
    %c8_22 = arith.constant 8 : index
    %c0_23 = arith.constant 0 : index
    %22 = vector.load %arg11[%c0_21, %c8_22, %c0_23] : memref<2x16x128xf32, #tpu.memory_space<vmem>>, vector<1x8x128xf32>
    %23 = vector.shape_cast %22 : vector<1x8x128xf32> to vector<8x128xf32>
    %24 = arith.truncf %23 : vector<8x128xf32> to vector<8x128xbf16>
    %c0_24 = arith.constant 0 : index
    %c0_25 = arith.constant 0 : index
    %25 = vector.load %arg5[%c0_24, %c0_25] : memref<128x128xbf16, #tpu.memory_space<vmem>>, vector<128x128xbf16>
    %cst_26 = arith.constant dense<0.000000e+00> : vector<8x128xf32>
    %26 = tpu.matmul %24, %25, %cst_26 {dimension_numbers = #tpu.dot_dimension_numbers<[1], [0], [0], [1], [0, 0, 1, 1], [], []>} : vector<8x128xbf16>, vector<128x128xbf16>, vector<8x128xf32> -> vector<8x128xf32>
    %27 = arith.addf %15, %26 : vector<8x128xf32>
    %28 = math.tanh %21 : vector<8x128xf32>
    %29 = math.tanh %27 : vector<8x128xf32>
    %c0_27 = arith.constant 0 : index
    %c0_28 = arith.constant 0 : index
    %c0_29 = arith.constant 0 : index
    %30 = vector.load %arg11[%c0_27, %c0_28, %c0_29] : memref<2x16x128xf32, #tpu.memory_space<vmem>>, vector<1x8x128xf32>
    %31 = vector.shape_cast %30 : vector<1x8x128xf32> to vector<8x128xf32>
    %32 = vector.shape_cast %28 : vector<8x128xf32> to vector<1x8x128xf32>
    tpu.vector_store %arg11[%c0_27, %c0_28, %c0_29], %32 {strides = array<i32>} : memref<2x16x128xf32, #tpu.memory_space<vmem>>, vector<1x8x128xf32>,
    %c0_30 = arith.constant 0 : index
    %c8_31 = arith.constant 8 : index
    %c0_32 = arith.constant 0 : index
    %33 = vector.load %arg11[%c0_30, %c8_31, %c0_32] : memref<2x16x128xf32, #tpu.memory_space<vmem>>, vector<1x8x128xf32>
    %34 = vector.shape_cast %33 : vector<1x8x128xf32> to vector<8x128xf32>
    %35 = vector.shape_cast %29 : vector<8x128xf32> to vector<1x8x128xf32>
    tpu.vector_store %arg11[%c0_30, %c8_31, %c0_32], %35 {strides = array<i32>} : memref<2x16x128xf32, #tpu.memory_space<vmem>>, vector<1x8x128xf32>,
    %c1_33 = arith.constant 1 : index
    %c0_34 = arith.constant 0 : index
    %c0_35 = arith.constant 0 : index
    %36 = vector.load %arg11[%c1_33, %c0_34, %c0_35] : memref<2x16x128xf32, #tpu.memory_space<vmem>>, vector<1x8x128xf32>
    %37 = vector.shape_cast %36 : vector<1x8x128xf32> to vector<8x128xf32>
    %38 = arith.truncf %37 : vector<8x128xf32> to vector<8x128xbf16>
    %39 = arith.truncf %28 : vector<8x128xf32> to vector<8x128xbf16>
    %40 = tpu.concatenate %39, %38 in 1 : vector<8x128xbf16>, vector<8x128xbf16> -> vector<8x256xbf16>
    %c0_36 = arith.constant 0 : index
    %c0_37 = arith.constant 0 : index
    %c0_38 = arith.constant 0 : index
    %41 = vector.load %arg4[%c0_36, %c0_37, %c0_38] : memref<1x256x128xbf16, #tpu.memory_space<vmem>>, vector<1x256x128xbf16>
    %42 = vector.shape_cast %41 : vector<1x256x128xbf16> to vector<256x128xbf16>
    %cst_39 = arith.constant dense<0.000000e+00> : vector<8x128xf32>
    %43 = tpu.matmul %40, %42, %cst_39 {dimension_numbers = #tpu.dot_dimension_numbers<[1], [0], [0], [1], [0, 0, 1, 1], [], []>} : vector<8x256xbf16>, vector<256x128xbf16>, vector<8x128xf32> -> vector<8x128xf32>
    %44 = vector.broadcast %13 : vector<1x128xf32> to vector<8x128xf32>
    %45 = arith.addf %43, %44 : vector<8x128xf32>
    %c1_40 = arith.constant 1 : index
    %c8_41 = arith.constant 8 : index
    %c0_42 = arith.constant 0 : index
    %46 = vector.load %arg11[%c1_40, %c8_41, %c0_42] : memref<2x16x128xf32, #tpu.memory_space<vmem>>, vector<1x8x128xf32>
    %47 = vector.shape_cast %46 : vector<1x8x128xf32> to vector<8x128xf32>
    %48 = arith.truncf %47 : vector<8x128xf32> to vector<8x128xbf16>
    %49 = arith.truncf %29 : vector<8x128xf32> to vector<8x128xbf16>
    %50 = tpu.concatenate %49, %48 in 1 : vector<8x128xbf16>, vector<8x128xbf16> -> vector<8x256xbf16>
    %c0_43 = arith.constant 0 : index
    %c0_44 = arith.constant 0 : index
    %c0_45 = arith.constant 0 : index
    %51 = vector.load %arg4[%c0_43, %c0_44, %c0_45] : memref<1x256x128xbf16, #tpu.memory_space<vmem>>, vector<1x256x128xbf16>
    %52 = vector.shape_cast %51 : vector<1x256x128xbf16> to vector<256x128xbf16>
    %cst_46 = arith.constant dense<0.000000e+00> : vector<8x128xf32>
    %53 = tpu.matmul %50, %52, %cst_46 {dimension_numbers = #tpu.dot_dimension_numbers<[1], [0], [0], [1], [0, 0, 1, 1], [], []>} : vector<8x256xbf16>, vector<256x128xbf16>, vector<8x128xf32> -> vector<8x128xf32>
    %54 = vector.broadcast %13 : vector<1x128xf32> to vector<8x128xf32>
    %55 = arith.addf %53, %54 : vector<8x128xf32>
    %56 = math.tanh %45 : vector<8x128xf32>
    %57 = math.tanh %55 : vector<8x128xf32>
    %c1_47 = arith.constant 1 : index
    %c0_48 = arith.constant 0 : index
    %c0_49 = arith.constant 0 : index
    %58 = vector.load %arg11[%c1_47, %c0_48, %c0_49] : memref<2x16x128xf32, #tpu.memory_space<vmem>>, vector<1x8x128xf32>
    %59 = vector.shape_cast %58 : vector<1x8x128xf32> to vector<8x128xf32>
    %60 = vector.shape_cast %56 : vector<8x128xf32> to vector<1x8x128xf32>
    tpu.vector_store %arg11[%c1_47, %c0_48, %c0_49], %60 {strides = array<i32>} : memref<2x16x128xf32, #tpu.memory_space<vmem>>, vector<1x8x128xf32>,
    %c1_50 = arith.constant 1 : index
    %c8_51 = arith.constant 8 : index
    %c0_52 = arith.constant 0 : index
    %61 = vector.load %arg11[%c1_50, %c8_51, %c0_52] : memref<2x16x128xf32, #tpu.memory_space<vmem>>, vector<1x8x128xf32>
    %62 = vector.shape_cast %61 : vector<1x8x128xf32> to vector<8x128xf32>
    %63 = vector.shape_cast %57 : vector<8x128xf32> to vector<1x8x128xf32>
    tpu.vector_store %arg11[%c1_50, %c8_51, %c0_52], %63 {strides = array<i32>} : memref<2x16x128xf32, #tpu.memory_space<vmem>>, vector<1x8x128xf32>,
    %c16 = arith.constant 16 : index
    %c0_53 = arith.constant 0 : index
    %64 = vector.load %arg10[%c16, %c0_53] : memref<128x128xf32, #tpu.memory_space<vmem>>, vector<8x128xf32>
    %c24 = arith.constant 24 : index
    %c0_54 = arith.constant 0 : index
    %65 = vector.load %arg10[%c24, %c0_54] : memref<128x128xf32, #tpu.memory_space<vmem>>, vector<8x128xf32>
    %c0_55 = arith.constant 0 : index
    %c0_56 = arith.constant 0 : index
    %c0_57 = arith.constant 0 : index
    %66 = vector.load %arg11[%c0_55, %c0_56, %c0_57] : memref<2x16x128xf32, #tpu.memory_space<vmem>>, vector<1x8x128xf32>
    %67 = vector.shape_cast %66 : vector<1x8x128xf32> to vector<8x128xf32>
    %68 = arith.truncf %67 : vector<8x128xf32> to vector<8x128xbf16>
    %c0_58 = arith.constant 0 : index
    %c0_59 = arith.constant 0 : index
    %69 = vector.load %arg5[%c0_58, %c0_59] : memref<128x128xbf16, #tpu.memory_space<vmem>>, vector<128x128xbf16>
    %cst_60 = arith.constant dense<0.000000e+00> : vector<8x128xf32>
    %70 = tpu.matmul %68, %69, %cst_60 {dimension_numbers = #tpu.dot_dimension_numbers<[1], [0], [0], [1], [0, 0, 1, 1], [], []>} : vector<8x128xbf16>, vector<128x128xbf16>, vector<8x128xf32> -> vector<8x128xf32>
    %71 = arith.addf %64, %70 : vector<8x128xf32>
    %c0_61 = arith.constant 0 : index
    %c8_62 = arith.constant 8 : index
    %c0_63 = arith.constant 0 : index
    %72 = vector.load %arg11[%c0_61, %c8_62, %c0_63] : memref<2x16x128xf32, #tpu.memory_space<vmem>>, vector<1x8x128xf32>
    %73 = vector.shape_cast %72 : vector<1x8x128xf32> to vector<8x128xf32>
    %74 = arith.truncf %73 : vector<8x128xf32> to vector<8x128xbf16>
    %c0_64 = arith.constant 0 : index
    %c0_65 = arith.constant 0 : index
    %75 = vector.load %arg5[%c0_64, %c0_65] : memref<128x128xbf16, #tpu.memory_space<vmem>>, vector<128x128xbf16>
    %cst_66 = arith.constant dense<0.000000e+00> : vector<8x128xf32>
    %76 = tpu.matmul %74, %75, %cst_66 {dimension_numbers = #tpu.dot_dimension_numbers<[1], [0], [0], [1], [0, 0, 1, 1], [], []>} : vector<8x128xbf16>, vector<128x128xbf16>, vector<8x128xf32> -> vector<8x128xf32>
    %77 = arith.addf %65, %76 : vector<8x128xf32>
    %78 = math.tanh %71 : vector<8x128xf32>
    %79 = math.tanh %77 : vector<8x128xf32>
    %c0_67 = arith.constant 0 : index
    %c0_68 = arith.constant 0 : index
    %c0_69 = arith.constant 0 : index
    %80 = vector.load %arg11[%c0_67, %c0_68, %c0_69] : memref<2x16x128xf32, #tpu.memory_space<vmem>>, vector<1x8x128xf32>
    %81 = vector.shape_cast %80 : vector<1x8x128xf32> to vector<8x128xf32>
    %82 = vector.shape_cast %78 : vector<8x128xf32> to vector<1x8x128xf32>
    tpu.vector_store %arg11[%c0_67, %c0_68, %c0_69], %82 {strides = array<i32>} : memref<2x16x128xf32, #tpu.memory_space<vmem>>, vector<1x8x128xf32>,
    %c0_70 = arith.constant 0 : index
    %c8_71 = arith.constant 8 : index
    %c0_72 = arith.constant 0 : index
    %83 = vector.load %arg11[%c0_70, %c8_71, %c0_72] : memref<2x16x128xf32, #tpu.memory_space<vmem>>, vector<1x8x128xf32>
    %84 = vector.shape_cast %83 : vector<1x8x128xf32> to vector<8x128xf32>
    %85 = vector.shape_cast %79 : vector<8x128xf32> to vector<1x8x128xf32>
    tpu.vector_store %arg11[%c0_70, %c8_71, %c0_72], %85 {strides = array<i32>} : memref<2x16x128xf32, #tpu.memory_space<vmem>>, vector<1x8x128xf32>,
    %c1_73 = arith.constant 1 : index
    %c0_74 = arith.constant 0 : index
    %c0_75 = arith.constant 0 : index
    %86 = vector.load %arg11[%c1_73, %c0_74, %c0_75] : memref<2x16x128xf32, #tpu.memory_space<vmem>>, vector<1x8x128xf32>
    %87 = vector.shape_cast %86 : vector<1x8x128xf32> to vector<8x128xf32>
    %88 = arith.truncf %87 : vector<8x128xf32> to vector<8x128xbf16>
    %89 = arith.truncf %78 : vector<8x128xf32> to vector<8x128xbf16>
    %90 = tpu.concatenate %89, %88 in 1 : vector<8x128xbf16>, vector<8x128xbf16> -> vector<8x256xbf16>
    %c0_76 = arith.constant 0 : index
    %c0_77 = arith.constant 0 : index
    %c0_78 = arith.constant 0 : index
    %91 = vector.load %arg4[%c0_76, %c0_77, %c0_78] : memref<1x256x128xbf16, #tpu.memory_space<vmem>>, vector<1x256x128xbf16>
    %92 = vector.shape_cast %91 : vector<1x256x128xbf16> to vector<256x128xbf16>
    %cst_79 = arith.constant dense<0.000000e+00> : vector<8x128xf32>
    %93 = tpu.matmul %90, %92, %cst_79 {dimension_numbers = #tpu.dot_dimension_numbers<[1], [0], [0], [1], [0, 0, 1, 1], [], []>} : vector<8x256xbf16>, vector<256x128xbf16>, vector<8x128xf32> -> vector<8x128xf32>
    %94 = vector.broadcast %13 : vector<1x128xf32> to vector<8x128xf32>
    %95 = arith.addf %93, %94 : vector<8x128xf32>
    %c1_80 = arith.constant 1 : index
    %c8_81 = arith.constant 8 : index
    %c0_82 = arith.constant 0 : index
    %96 = vector.load %arg11[%c1_80, %c8_81, %c0_82] : memref<2x16x128xf32, #tpu.memory_space<vmem>>, vector<1x8x128xf32>
    %97 = vector.shape_cast %96 : vector<1x8x128xf32> to vector<8x128xf32>
    %98 = arith.truncf %97 : vector<8x128xf32> to vector<8x128xbf16>
    %99 = arith.truncf %79 : vector<8x128xf32> to vector<8x128xbf16>
    %100 = tpu.concatenate %99, %98 in 1 : vector<8x128xbf16>, vector<8x128xbf16> -> vector<8x256xbf16>
    %c0_83 = arith.constant 0 : index
    %c0_84 = arith.constant 0 : index
    %c0_85 = arith.constant 0 : index
    %101 = vector.load %arg4[%c0_83, %c0_84, %c0_85] : memref<1x256x128xbf16, #tpu.memory_space<vmem>>, vector<1x256x128xbf16>
    %102 = vector.shape_cast %101 : vector<1x256x128xbf16> to vector<256x128xbf16>
    %cst_86 = arith.constant dense<0.000000e+00> : vector<8x128xf32>
    %103 = tpu.matmul %100, %102, %cst_86 {dimension_numbers = #tpu.dot_dimension_numbers<[1], [0], [0], [1], [0, 0, 1, 1], [], []>} : vector<8x256xbf16>, vector<256x128xbf16>, vector<8x128xf32> -> vector<8x128xf32>
    %104 = vector.broadcast %13 : vector<1x128xf32> to vector<8x128xf32>
    %105 = arith.addf %103, %104 : vector<8x128xf32>
    %106 = math.tanh %95 : vector<8x128xf32>
    %107 = math.tanh %105 : vector<8x128xf32>
    %c1_87 = arith.constant 1 : index
    %c0_88 = arith.constant 0 : index
    %c0_89 = arith.constant 0 : index
    %108 = vector.load %arg11[%c1_87, %c0_88, %c0_89] : memref<2x16x128xf32, #tpu.memory_space<vmem>>, vector<1x8x128xf32>
    %109 = vector.shape_cast %108 : vector<1x8x128xf32> to vector<8x128xf32>
    %110 = vector.shape_cast %106 : vector<8x128xf32> to vector<1x8x128xf32>
    tpu.vector_store %arg11[%c1_87, %c0_88, %c0_89], %110 {strides = array<i32>} : memref<2x16x128xf32, #tpu.memory_space<vmem>>, vector<1x8x128xf32>,
    %c1_90 = arith.constant 1 : index
    %c8_91 = arith.constant 8 : index
    %c0_92 = arith.constant 0 : index
    %111 = vector.load %arg11[%c1_90, %c8_91, %c0_92] : memref<2x16x128xf32, #tpu.memory_space<vmem>>, vector<1x8x128xf32>
    %112 = vector.shape_cast %111 : vector<1x8x128xf32> to vector<8x128xf32>
    %113 = vector.shape_cast %107 : vector<8x128xf32> to vector<1x8x128xf32>
    tpu.vector_store %arg11[%c1_90, %c8_91, %c0_92], %113 {strides = array<i32>} : memref<2x16x128xf32, #tpu.memory_space<vmem>>, vector<1x8x128xf32>,
    %c32 = arith.constant 32 : index
    %c0_93 = arith.constant 0 : index
    %114 = vector.load %arg10[%c32, %c0_93] : memref<128x128xf32, #tpu.memory_space<vmem>>, vector<8x128xf32>
    %c40 = arith.constant 40 : index
    %c0_94 = arith.constant 0 : index
    %115 = vector.load %arg10[%c40, %c0_94] : memref<128x128xf32, #tpu.memory_space<vmem>>, vector<8x128xf32>
    %c0_95 = arith.constant 0 : index
    %c0_96 = arith.constant 0 : index
    %c0_97 = arith.constant 0 : index
    %116 = vector.load %arg11[%c0_95, %c0_96, %c0_97] : memref<2x16x128xf32, #tpu.memory_space<vmem>>, vector<1x8x128xf32>
    %117 = vector.shape_cast %116 : vector<1x8x128xf32> to vector<8x128xf32>
    %118 = arith.truncf %117 : vector<8x128xf32> to vector<8x128xbf16>
    %c0_98 = arith.constant 0 : index
    %c0_99 = arith.constant 0 : index
    %119 = vector.load %arg5[%c0_98, %c0_99] : memref<128x128xbf16, #tpu.memory_space<vmem>>, vector<128x128xbf16>
    %cst_100 = arith.constant dense<0.000000e+00> : vector<8x128xf32>
    %120 = tpu.matmul %118, %119, %cst_100 {dimension_numbers = #tpu.dot_dimension_numbers<[1], [0], [0], [1], [0, 0, 1, 1], [], []>} : vector<8x128xbf16>, vector<128x128xbf16>, vector<8x128xf32> -> vector<8x128xf32>
    %121 = arith.addf %114, %120 : vector<8x128xf32>
    %c0_101 = arith.constant 0 : index
    %c8_102 = arith.constant 8 : index
    %c0_103 = arith.constant 0 : index
    %122 = vector.load %arg11[%c0_101, %c8_102, %c0_103] : memref<2x16x128xf32, #tpu.memory_space<vmem>>, vector<1x8x128xf32>
    %123 = vector.shape_cast %122 : vector<1x8x128xf32> to vector<8x128xf32>
    %124 = arith.truncf %123 : vector<8x128xf32> to vector<8x128xbf16>
    %c0_104 = arith.constant 0 : index
    %c0_105 = arith.constant 0 : index
    %125 = vector.load %arg5[%c0_104, %c0_105] : memref<128x128xbf16, #tpu.memory_space<vmem>>, vector<128x128xbf16>
    %cst_106 = arith.constant dense<0.000000e+00> : vector<8x128xf32>
    %126 = tpu.matmul %124, %125, %cst_106 {dimension_numbers = #tpu.dot_dimension_numbers<[1], [0], [0], [1], [0, 0, 1, 1], [], []>} : vector<8x128xbf16>, vector<128x128xbf16>, vector<8x128xf32> -> vector<8x128xf32>
    %127 = arith.addf %115, %126 : vector<8x128xf32>
    %128 = math.tanh %121 : vector<8x128xf32>
    %129 = math.tanh %127 : vector<8x128xf32>
    %c0_107 = arith.constant 0 : index
    %c0_108 = arith.constant 0 : index
    %c0_109 = arith.constant 0 : index
    %130 = vector.load %arg11[%c0_107, %c0_108, %c0_109] : memref<2x16x128xf32, #tpu.memory_space<vmem>>, vector<1x8x128xf32>
    %131 = vector.shape_cast %130 : vector<1x8x128xf32> to vector<8x128xf32>
    %132 = vector.shape_cast %128 : vector<8x128xf32> to vector<1x8x128xf32>
    tpu.vector_store %arg11[%c0_107, %c0_108, %c0_109], %132 {strides = array<i32>} : memref<2x16x128xf32, #tpu.memory_space<vmem>>, vector<1x8x128xf32>,
    %c0_110 = arith.constant 0 : index
    %c8_111 = arith.constant 8 : index
    %c0_112 = arith.constant 0 : index
    %133 = vector.load %arg11[%c0_110, %c8_111, %c0_112] : memref<2x16x128xf32, #tpu.memory_space<vmem>>, vector<1x8x128xf32>
    %134 = vector.shape_cast %133 : vector<1x8x128xf32> to vector<8x128xf32>
    %135 = vector.shape_cast %129 : vector<8x128xf32> to vector<1x8x128xf32>
    tpu.vector_store %arg11[%c0_110, %c8_111, %c0_112], %135 {strides = array<i32>} : memref<2x16x128xf32, #tpu.memory_space<vmem>>, vector<1x8x128xf32>,
    %c1_113 = arith.constant 1 : index
    %c0_114 = arith.constant 0 : index
    %c0_115 = arith.constant 0 : index
    %136 = vector.load %arg11[%c1_113, %c0_114, %c0_115] : memref<2x16x128xf32, #tpu.memory_space<vmem>>, vector<1x8x128xf32>
    %137 = vector.shape_cast %136 : vector<1x8x128xf32> to vector<8x128xf32>
    %138 = arith.truncf %137 : vector<8x128xf32> to vector<8x128xbf16>
    %139 = arith.truncf %128 : vector<8x128xf32> to vector<8x128xbf16>
    %140 = tpu.concatenate %139, %138 in 1 : vector<8x128xbf16>, vector<8x128xbf16> -> vector<8x256xbf16>
    %c0_116 = arith.constant 0 : index
    %c0_117 = arith.constant 0 : index
    %c0_118 = arith.constant 0 : index
    %141 = vector.load %arg4[%c0_116, %c0_117, %c0_118] : memref<1x256x128xbf16, #tpu.memory_space<vmem>>, vector<1x256x128xbf16>
    %142 = vector.shape_cast %141 : vector<1x256x128xbf16> to vector<256x128xbf16>
    %cst_119 = arith.constant dense<0.000000e+00> : vector<8x128xf32>
    %143 = tpu.matmul %140, %142, %cst_119 {dimension_numbers = #tpu.dot_dimension_numbers<[1], [0], [0], [1], [0, 0, 1, 1], [], []>} : vector<8x256xbf16>, vector<256x128xbf16>, vector<8x128xf32> -> vector<8x128xf32>
    %144 = vector.broadcast %13 : vector<1x128xf32> to vector<8x128xf32>
    %145 = arith.addf %143, %144 : vector<8x128xf32>
    %c1_120 = arith.constant 1 : index
    %c8_121 = arith.constant 8 : index
    %c0_122 = arith.constant 0 : index
    %146 = vector.load %arg11[%c1_120, %c8_121, %c0_122] : memref<2x16x128xf32, #tpu.memory_space<vmem>>, vector<1x8x128xf32>
    %147 = vector.shape_cast %146 : vector<1x8x128xf32> to vector<8x128xf32>
    %148 = arith.truncf %147 : vector<8x128xf32> to vector<8x128xbf16>
    %149 = arith.truncf %129 : vector<8x128xf32> to vector<8x128xbf16>
    %150 = tpu.concatenate %149, %148 in 1 : vector<8x128xbf16>, vector<8x128xbf16> -> vector<8x256xbf16>
    %c0_123 = arith.constant 0 : index
    %c0_124 = arith.constant 0 : index
    %c0_125 = arith.constant 0 : index
    %151 = vector.load %arg4[%c0_123, %c0_124, %c0_125] : memref<1x256x128xbf16, #tpu.memory_space<vmem>>, vector<1x256x128xbf16>
    %152 = vector.shape_cast %151 : vector<1x256x128xbf16> to vector<256x128xbf16>
    %cst_126 = arith.constant dense<0.000000e+00> : vector<8x128xf32>
    %153 = tpu.matmul %150, %152, %cst_126 {dimension_numbers = #tpu.dot_dimension_numbers<[1], [0], [0], [1], [0, 0, 1, 1], [], []>} : vector<8x256xbf16>, vector<256x128xbf16>, vector<8x128xf32> -> vector<8x128xf32>
    %154 = vector.broadcast %13 : vector<1x128xf32> to vector<8x128xf32>
    %155 = arith.addf %153, %154 : vector<8x128xf32>
    %156 = math.tanh %145 : vector<8x128xf32>
    %157 = math.tanh %155 : vector<8x128xf32>
    %c1_127 = arith.constant 1 : index
    %c0_128 = arith.constant 0 : index
    %c0_129 = arith.constant 0 : index
    %158 = vector.load %arg11[%c1_127, %c0_128, %c0_129] : memref<2x16x128xf32, #tpu.memory_space<vmem>>, vector<1x8x128xf32>
    %159 = vector.shape_cast %158 : vector<1x8x128xf32> to vector<8x128xf32>
    %160 = vector.shape_cast %156 : vector<8x128xf32> to vector<1x8x128xf32>
    tpu.vector_store %arg11[%c1_127, %c0_128, %c0_129], %160 {strides = array<i32>} : memref<2x16x128xf32, #tpu.memory_space<vmem>>, vector<1x8x128xf32>,
    %c1_130 = arith.constant 1 : index
    %c8_131 = arith.constant 8 : index
    %c0_132 = arith.constant 0 : index
    %161 = vector.load %arg11[%c1_130, %c8_131, %c0_132] : memref<2x16x128xf32, #tpu.memory_space<vmem>>, vector<1x8x128xf32>
    %162 = vector.shape_cast %161 : vector<1x8x128xf32> to vector<8x128xf32>
    %163 = vector.shape_cast %157 : vector<8x128xf32> to vector<1x8x128xf32>
    tpu.vector_store %arg11[%c1_130, %c8_131, %c0_132], %163 {strides = array<i32>} : memref<2x16x128xf32, #tpu.memory_space<vmem>>, vector<1x8x128xf32>,
    %c48 = arith.constant 48 : index
    %c0_133 = arith.constant 0 : index
    %164 = vector.load %arg10[%c48, %c0_133] : memref<128x128xf32, #tpu.memory_space<vmem>>, vector<8x128xf32>
    %c56 = arith.constant 56 : index
    %c0_134 = arith.constant 0 : index
    %165 = vector.load %arg10[%c56, %c0_134] : memref<128x128xf32, #tpu.memory_space<vmem>>, vector<8x128xf32>
    %c0_135 = arith.constant 0 : index
    %c0_136 = arith.constant 0 : index
    %c0_137 = arith.constant 0 : index
    %166 = vector.load %arg11[%c0_135, %c0_136, %c0_137] : memref<2x16x128xf32, #tpu.memory_space<vmem>>, vector<1x8x128xf32>
    %167 = vector.shape_cast %166 : vector<1x8x128xf32> to vector<8x128xf32>
    %168 = arith.truncf %167 : vector<8x128xf32> to vector<8x128xbf16>
    %c0_138 = arith.constant 0 : index
    %c0_139 = arith.constant 0 : index
    %169 = vector.load %arg5[%c0_138, %c0_139] : memref<128x128xbf16, #tpu.memory_space<vmem>>, vector<128x128xbf16>
    %cst_140 = arith.constant dense<0.000000e+00> : vector<8x128xf32>
    %170 = tpu.matmul %168, %169, %cst_140 {dimension_numbers = #tpu.dot_dimension_numbers<[1], [0], [0], [1], [0, 0, 1, 1], [], []>} : vector<8x128xbf16>, vector<128x128xbf16>, vector<8x128xf32> -> vector<8x128xf32>
    %171 = arith.addf %164, %170 : vector<8x128xf32>
    %c0_141 = arith.constant 0 : index
    %c8_142 = arith.constant 8 : index
    %c0_143 = arith.constant 0 : index
    %172 = vector.load %arg11[%c0_141, %c8_142, %c0_143] : memref<2x16x128xf32, #tpu.memory_space<vmem>>, vector<1x8x128xf32>
    %173 = vector.shape_cast %172 : vector<1x8x128xf32> to vector<8x128xf32>
    %174 = arith.truncf %173 : vector<8x128xf32> to vector<8x128xbf16>
    %c0_144 = arith.constant 0 : index
    %c0_145 = arith.constant 0 : index
    %175 = vector.load %arg5[%c0_144, %c0_145] : memref<128x128xbf16, #tpu.memory_space<vmem>>, vector<128x128xbf16>
    %cst_146 = arith.constant dense<0.000000e+00> : vector<8x128xf32>
    %176 = tpu.matmul %174, %175, %cst_146 {dimension_numbers = #tpu.dot_dimension_numbers<[1], [0], [0], [1], [0, 0, 1, 1], [], []>} : vector<8x128xbf16>, vector<128x128xbf16>, vector<8x128xf32> -> vector<8x128xf32>
    %177 = arith.addf %165, %176 : vector<8x128xf32>
    %178 = math.tanh %171 : vector<8x128xf32>
    %179 = math.tanh %177 : vector<8x128xf32>
    %c0_147 = arith.constant 0 : index
    %c0_148 = arith.constant 0 : index
    %c0_149 = arith.constant 0 : index
    %180 = vector.load %arg11[%c0_147, %c0_148, %c0_149] : memref<2x16x128xf32, #tpu.memory_space<vmem>>, vector<1x8x128xf32>
    %181 = vector.shape_cast %180 : vector<1x8x128xf32> to vector<8x128xf32>
    %182 = vector.shape_cast %178 : vector<8x128xf32> to vector<1x8x128xf32>
    tpu.vector_store %arg11[%c0_147, %c0_148, %c0_149], %182 {strides = array<i32>} : memref<2x16x128xf32, #tpu.memory_space<vmem>>, vector<1x8x128xf32>,
    %c0_150 = arith.constant 0 : index
    %c8_151 = arith.constant 8 : index
    %c0_152 = arith.constant 0 : index
    %183 = vector.load %arg11[%c0_150, %c8_151, %c0_152] : memref<2x16x128xf32, #tpu.memory_space<vmem>>, vector<1x8x128xf32>
    %184 = vector.shape_cast %183 : vector<1x8x128xf32> to vector<8x128xf32>
    %185 = vector.shape_cast %179 : vector<8x128xf32> to vector<1x8x128xf32>
    tpu.vector_store %arg11[%c0_150, %c8_151, %c0_152], %185 {strides = array<i32>} : memref<2x16x128xf32, #tpu.memory_space<vmem>>, vector<1x8x128xf32>,
    %c1_153 = arith.constant 1 : index
    %c0_154 = arith.constant 0 : index
    %c0_155 = arith.constant 0 : index
    %186 = vector.load %arg11[%c1_153, %c0_154, %c0_155] : memref<2x16x128xf32, #tpu.memory_space<vmem>>, vector<1x8x128xf32>
    %187 = vector.shape_cast %186 : vector<1x8x128xf32> to vector<8x128xf32>
    %188 = arith.truncf %187 : vector<8x128xf32> to vector<8x128xbf16>
    %189 = arith.truncf %178 : vector<8x128xf32> to vector<8x128xbf16>
    %190 = tpu.concatenate %189, %188 in 1 : vector<8x128xbf16>, vector<8x128xbf16> -> vector<8x256xbf16>
    %c0_156 = arith.constant 0 : index
    %c0_157 = arith.constant 0 : index
    %c0_158 = arith.constant 0 : index
    %191 = vector.load %arg4[%c0_156, %c0_157, %c0_158] : memref<1x256x128xbf16, #tpu.memory_space<vmem>>, vector<1x256x128xbf16>
    %192 = vector.shape_cast %191 : vector<1x256x128xbf16> to vector<256x128xbf16>
    %cst_159 = arith.constant dense<0.000000e+00> : vector<8x128xf32>
    %193 = tpu.matmul %190, %192, %cst_159 {dimension_numbers = #tpu.dot_dimension_numbers<[1], [0], [0], [1], [0, 0, 1, 1], [], []>} : vector<8x256xbf16>, vector<256x128xbf16>, vector<8x128xf32> -> vector<8x128xf32>
    %194 = vector.broadcast %13 : vector<1x128xf32> to vector<8x128xf32>
    %195 = arith.addf %193, %194 : vector<8x128xf32>
    %c1_160 = arith.constant 1 : index
    %c8_161 = arith.constant 8 : index
    %c0_162 = arith.constant 0 : index
    %196 = vector.load %arg11[%c1_160, %c8_161, %c0_162] : memref<2x16x128xf32, #tpu.memory_space<vmem>>, vector<1x8x128xf32>
    %197 = vector.shape_cast %196 : vector<1x8x128xf32> to vector<8x128xf32>
    %198 = arith.truncf %197 : vector<8x128xf32> to vector<8x128xbf16>
    %199 = arith.truncf %179 : vector<8x128xf32> to vector<8x128xbf16>
    %200 = tpu.concatenate %199, %198 in 1 : vector<8x128xbf16>, vector<8x128xbf16> -> vector<8x256xbf16>
    %c0_163 = arith.constant 0 : index
    %c0_164 = arith.constant 0 : index
    %c0_165 = arith.constant 0 : index
    %201 = vector.load %arg4[%c0_163, %c0_164, %c0_165] : memref<1x256x128xbf16, #tpu.memory_space<vmem>>, vector<1x256x128xbf16>
    %202 = vector.shape_cast %201 : vector<1x256x128xbf16> to vector<256x128xbf16>
    %cst_166 = arith.constant dense<0.000000e+00> : vector<8x128xf32>
    %203 = tpu.matmul %200, %202, %cst_166 {dimension_numbers = #tpu.dot_dimension_numbers<[1], [0], [0], [1], [0, 0, 1, 1], [], []>} : vector<8x256xbf16>, vector<256x128xbf16>, vector<8x128xf32> -> vector<8x128xf32>
    %204 = vector.broadcast %13 : vector<1x128xf32> to vector<8x128xf32>
    %205 = arith.addf %203, %204 : vector<8x128xf32>
    %206 = math.tanh %195 : vector<8x128xf32>
    %207 = math.tanh %205 : vector<8x128xf32>
    %c1_167 = arith.constant 1 : index
    %c0_168 = arith.constant 0 : index
    %c0_169 = arith.constant 0 : index
    %208 = vector.load %arg11[%c1_167, %c0_168, %c0_169] : memref<2x16x128xf32, #tpu.memory_space<vmem>>, vector<1x8x128xf32>
    %209 = vector.shape_cast %208 : vector<1x8x128xf32> to vector<8x128xf32>
    %210 = vector.shape_cast %206 : vector<8x128xf32> to vector<1x8x128xf32>
    tpu.vector_store %arg11[%c1_167, %c0_168, %c0_169], %210 {strides = array<i32>} : memref<2x16x128xf32, #tpu.memory_space<vmem>>, vector<1x8x128xf32>,
    %c1_170 = arith.constant 1 : index
    %c8_171 = arith.constant 8 : index
    %c0_172 = arith.constant 0 : index
    %211 = vector.load %arg11[%c1_170, %c8_171, %c0_172] : memref<2x16x128xf32, #tpu.memory_space<vmem>>, vector<1x8x128xf32>
    %212 = vector.shape_cast %211 : vector<1x8x128xf32> to vector<8x128xf32>
    %213 = vector.shape_cast %207 : vector<8x128xf32> to vector<1x8x128xf32>
    tpu.vector_store %arg11[%c1_170, %c8_171, %c0_172], %213 {strides = array<i32>} : memref<2x16x128xf32, #tpu.memory_space<vmem>>, vector<1x8x128xf32>,
    %c64 = arith.constant 64 : index
    %c0_173 = arith.constant 0 : index
    %214 = vector.load %arg10[%c64, %c0_173] : memref<128x128xf32, #tpu.memory_space<vmem>>, vector<8x128xf32>
    %c72 = arith.constant 72 : index
    %c0_174 = arith.constant 0 : index
    %215 = vector.load %arg10[%c72, %c0_174] : memref<128x128xf32, #tpu.memory_space<vmem>>, vector<8x128xf32>
    %c0_175 = arith.constant 0 : index
    %c0_176 = arith.constant 0 : index
    %c0_177 = arith.constant 0 : index
    %216 = vector.load %arg11[%c0_175, %c0_176, %c0_177] : memref<2x16x128xf32, #tpu.memory_space<vmem>>, vector<1x8x128xf32>
    %217 = vector.shape_cast %216 : vector<1x8x128xf32> to vector<8x128xf32>
    %218 = arith.truncf %217 : vector<8x128xf32> to vector<8x128xbf16>
    %c0_178 = arith.constant 0 : index
    %c0_179 = arith.constant 0 : index
    %219 = vector.load %arg5[%c0_178, %c0_179] : memref<128x128xbf16, #tpu.memory_space<vmem>>, vector<128x128xbf16>
    %cst_180 = arith.constant dense<0.000000e+00> : vector<8x128xf32>
    %220 = tpu.matmul %218, %219, %cst_180 {dimension_numbers = #tpu.dot_dimension_numbers<[1], [0], [0], [1], [0, 0, 1, 1], [], []>} : vector<8x128xbf16>, vector<128x128xbf16>, vector<8x128xf32> -> vector<8x128xf32>
    %221 = arith.addf %214, %220 : vector<8x128xf32>
    %c0_181 = arith.constant 0 : index
    %c8_182 = arith.constant 8 : index
    %c0_183 = arith.constant 0 : index
    %222 = vector.load %arg11[%c0_181, %c8_182, %c0_183] : memref<2x16x128xf32, #tpu.memory_space<vmem>>, vector<1x8x128xf32>
    %223 = vector.shape_cast %222 : vector<1x8x128xf32> to vector<8x128xf32>
    %224 = arith.truncf %223 : vector<8x128xf32> to vector<8x128xbf16>
    %c0_184 = arith.constant 0 : index
    %c0_185 = arith.constant 0 : index
    %225 = vector.load %arg5[%c0_184, %c0_185] : memref<128x128xbf16, #tpu.memory_space<vmem>>, vector<128x128xbf16>
    %cst_186 = arith.constant dense<0.000000e+00> : vector<8x128xf32>
    %226 = tpu.matmul %224, %225, %cst_186 {dimension_numbers = #tpu.dot_dimension_numbers<[1], [0], [0], [1], [0, 0, 1, 1], [], []>} : vector<8x128xbf16>, vector<128x128xbf16>, vector<8x128xf32> -> vector<8x128xf32>
    %227 = arith.addf %215, %226 : vector<8x128xf32>
    %228 = math.tanh %221 : vector<8x128xf32>
    %229 = math.tanh %227 : vector<8x128xf32>
    %c0_187 = arith.constant 0 : index
    %c0_188 = arith.constant 0 : index
    %c0_189 = arith.constant 0 : index
    %230 = vector.load %arg11[%c0_187, %c0_188, %c0_189] : memref<2x16x128xf32, #tpu.memory_space<vmem>>, vector<1x8x128xf32>
    %231 = vector.shape_cast %230 : vector<1x8x128xf32> to vector<8x128xf32>
    %232 = vector.shape_cast %228 : vector<8x128xf32> to vector<1x8x128xf32>
    tpu.vector_store %arg11[%c0_187, %c0_188, %c0_189], %232 {strides = array<i32>} : memref<2x16x128xf32, #tpu.memory_space<vmem>>, vector<1x8x128xf32>,
    %c0_190 = arith.constant 0 : index
    %c8_191 = arith.constant 8 : index
    %c0_192 = arith.constant 0 : index
    %233 = vector.load %arg11[%c0_190, %c8_191, %c0_192] : memref<2x16x128xf32, #tpu.memory_space<vmem>>, vector<1x8x128xf32>
    %234 = vector.shape_cast %233 : vector<1x8x128xf32> to vector<8x128xf32>
    %235 = vector.shape_cast %229 : vector<8x128xf32> to vector<1x8x128xf32>
    tpu.vector_store %arg11[%c0_190, %c8_191, %c0_192], %235 {strides = array<i32>} : memref<2x16x128xf32, #tpu.memory_space<vmem>>, vector<1x8x128xf32>,
    %c1_193 = arith.constant 1 : index
    %c0_194 = arith.constant 0 : index
    %c0_195 = arith.constant 0 : index
    %236 = vector.load %arg11[%c1_193, %c0_194, %c0_195] : memref<2x16x128xf32, #tpu.memory_space<vmem>>, vector<1x8x128xf32>
    %237 = vector.shape_cast %236 : vector<1x8x128xf32> to vector<8x128xf32>
    %238 = arith.truncf %237 : vector<8x128xf32> to vector<8x128xbf16>
    %239 = arith.truncf %228 : vector<8x128xf32> to vector<8x128xbf16>
    %240 = tpu.concatenate %239, %238 in 1 : vector<8x128xbf16>, vector<8x128xbf16> -> vector<8x256xbf16>
    %c0_196 = arith.constant 0 : index
    %c0_197 = arith.constant 0 : index
    %c0_198 = arith.constant 0 : index
    %241 = vector.load %arg4[%c0_196, %c0_197, %c0_198] : memref<1x256x128xbf16, #tpu.memory_space<vmem>>, vector<1x256x128xbf16>
    %242 = vector.shape_cast %241 : vector<1x256x128xbf16> to vector<256x128xbf16>
    %cst_199 = arith.constant dense<0.000000e+00> : vector<8x128xf32>
    %243 = tpu.matmul %240, %242, %cst_199 {dimension_numbers = #tpu.dot_dimension_numbers<[1], [0], [0], [1], [0, 0, 1, 1], [], []>} : vector<8x256xbf16>, vector<256x128xbf16>, vector<8x128xf32> -> vector<8x128xf32>
    %244 = vector.broadcast %13 : vector<1x128xf32> to vector<8x128xf32>
    %245 = arith.addf %243, %244 : vector<8x128xf32>
    %c1_200 = arith.constant 1 : index
    %c8_201 = arith.constant 8 : index
    %c0_202 = arith.constant 0 : index
    %246 = vector.load %arg11[%c1_200, %c8_201, %c0_202] : memref<2x16x128xf32, #tpu.memory_space<vmem>>, vector<1x8x128xf32>
    %247 = vector.shape_cast %246 : vector<1x8x128xf32> to vector<8x128xf32>
    %248 = arith.truncf %247 : vector<8x128xf32> to vector<8x128xbf16>
    %249 = arith.truncf %229 : vector<8x128xf32> to vector<8x128xbf16>
    %250 = tpu.concatenate %249, %248 in 1 : vector<8x128xbf16>, vector<8x128xbf16> -> vector<8x256xbf16>
    %c0_203 = arith.constant 0 : index
    %c0_204 = arith.constant 0 : index
    %c0_205 = arith.constant 0 : index
    %251 = vector.load %arg4[%c0_203, %c0_204, %c0_205] : memref<1x256x128xbf16, #tpu.memory_space<vmem>>, vector<1x256x128xbf16>
    %252 = vector.shape_cast %251 : vector<1x256x128xbf16> to vector<256x128xbf16>
    %cst_206 = arith.constant dense<0.000000e+00> : vector<8x128xf32>
    %253 = tpu.matmul %250, %252, %cst_206 {dimension_numbers = #tpu.dot_dimension_numbers<[1], [0], [0], [1], [0, 0, 1, 1], [], []>} : vector<8x256xbf16>, vector<256x128xbf16>, vector<8x128xf32> -> vector<8x128xf32>
    %254 = vector.broadcast %13 : vector<1x128xf32> to vector<8x128xf32>
    %255 = arith.addf %253, %254 : vector<8x128xf32>
    %256 = math.tanh %245 : vector<8x128xf32>
    %257 = math.tanh %255 : vector<8x128xf32>
    %c1_207 = arith.constant 1 : index
    %c0_208 = arith.constant 0 : index
    %c0_209 = arith.constant 0 : index
    %258 = vector.load %arg11[%c1_207, %c0_208, %c0_209] : memref<2x16x128xf32, #tpu.memory_space<vmem>>, vector<1x8x128xf32>
    %259 = vector.shape_cast %258 : vector<1x8x128xf32> to vector<8x128xf32>
    %260 = vector.shape_cast %256 : vector<8x128xf32> to vector<1x8x128xf32>
    tpu.vector_store %arg11[%c1_207, %c0_208, %c0_209], %260 {strides = array<i32>} : memref<2x16x128xf32, #tpu.memory_space<vmem>>, vector<1x8x128xf32>,
    %c1_210 = arith.constant 1 : index
    %c8_211 = arith.constant 8 : index
    %c0_212 = arith.constant 0 : index
    %261 = vector.load %arg11[%c1_210, %c8_211, %c0_212] : memref<2x16x128xf32, #tpu.memory_space<vmem>>, vector<1x8x128xf32>
    %262 = vector.shape_cast %261 : vector<1x8x128xf32> to vector<8x128xf32>
    %263 = vector.shape_cast %257 : vector<8x128xf32> to vector<1x8x128xf32>
    tpu.vector_store %arg11[%c1_210, %c8_211, %c0_212], %263 {strides = array<i32>} : memref<2x16x128xf32, #tpu.memory_space<vmem>>, vector<1x8x128xf32>,
    %c80 = arith.constant 80 : index
    %c0_213 = arith.constant 0 : index
    %264 = vector.load %arg10[%c80, %c0_213] : memref<128x128xf32, #tpu.memory_space<vmem>>, vector<8x128xf32>
    %c88 = arith.constant 88 : index
    %c0_214 = arith.constant 0 : index
    %265 = vector.load %arg10[%c88, %c0_214] : memref<128x128xf32, #tpu.memory_space<vmem>>, vector<8x128xf32>
    %c0_215 = arith.constant 0 : index
    %c0_216 = arith.constant 0 : index
    %c0_217 = arith.constant 0 : index
    %266 = vector.load %arg11[%c0_215, %c0_216, %c0_217] : memref<2x16x128xf32, #tpu.memory_space<vmem>>, vector<1x8x128xf32>
    %267 = vector.shape_cast %266 : vector<1x8x128xf32> to vector<8x128xf32>
    %268 = arith.truncf %267 : vector<8x128xf32> to vector<8x128xbf16>
    %c0_218 = arith.constant 0 : index
    %c0_219 = arith.constant 0 : index
    %269 = vector.load %arg5[%c0_218, %c0_219] : memref<128x128xbf16, #tpu.memory_space<vmem>>, vector<128x128xbf16>
    %cst_220 = arith.constant dense<0.000000e+00> : vector<8x128xf32>
    %270 = tpu.matmul %268, %269, %cst_220 {dimension_numbers = #tpu.dot_dimension_numbers<[1], [0], [0], [1], [0, 0, 1, 1], [], []>} : vector<8x128xbf16>, vector<128x128xbf16>, vector<8x128xf32> -> vector<8x128xf32>
    %271 = arith.addf %264, %270 : vector<8x128xf32>
    %c0_221 = arith.constant 0 : index
    %c8_222 = arith.constant 8 : index
    %c0_223 = arith.constant 0 : index
    %272 = vector.load %arg11[%c0_221, %c8_222, %c0_223] : memref<2x16x128xf32, #tpu.memory_space<vmem>>, vector<1x8x128xf32>
    %273 = vector.shape_cast %272 : vector<1x8x128xf32> to vector<8x128xf32>
    %274 = arith.truncf %273 : vector<8x128xf32> to vector<8x128xbf16>
    %c0_224 = arith.constant 0 : index
    %c0_225 = arith.constant 0 : index
    %275 = vector.load %arg5[%c0_224, %c0_225] : memref<128x128xbf16, #tpu.memory_space<vmem>>, vector<128x128xbf16>
    %cst_226 = arith.constant dense<0.000000e+00> : vector<8x128xf32>
    %276 = tpu.matmul %274, %275, %cst_226 {dimension_numbers = #tpu.dot_dimension_numbers<[1], [0], [0], [1], [0, 0, 1, 1], [], []>} : vector<8x128xbf16>, vector<128x128xbf16>, vector<8x128xf32> -> vector<8x128xf32>
    %277 = arith.addf %265, %276 : vector<8x128xf32>
    %278 = math.tanh %271 : vector<8x128xf32>
    %279 = math.tanh %277 : vector<8x128xf32>
    %c0_227 = arith.constant 0 : index
    %c0_228 = arith.constant 0 : index
    %c0_229 = arith.constant 0 : index
    %280 = vector.load %arg11[%c0_227, %c0_228, %c0_229] : memref<2x16x128xf32, #tpu.memory_space<vmem>>, vector<1x8x128xf32>
    %281 = vector.shape_cast %280 : vector<1x8x128xf32> to vector<8x128xf32>
    %282 = vector.shape_cast %278 : vector<8x128xf32> to vector<1x8x128xf32>
    tpu.vector_store %arg11[%c0_227, %c0_228, %c0_229], %282 {strides = array<i32>} : memref<2x16x128xf32, #tpu.memory_space<vmem>>, vector<1x8x128xf32>,
    %c0_230 = arith.constant 0 : index
    %c8_231 = arith.constant 8 : index
    %c0_232 = arith.constant 0 : index
    %283 = vector.load %arg11[%c0_230, %c8_231, %c0_232] : memref<2x16x128xf32, #tpu.memory_space<vmem>>, vector<1x8x128xf32>
    %284 = vector.shape_cast %283 : vector<1x8x128xf32> to vector<8x128xf32>
    %285 = vector.shape_cast %279 : vector<8x128xf32> to vector<1x8x128xf32>
    tpu.vector_store %arg11[%c0_230, %c8_231, %c0_232], %285 {strides = array<i32>} : memref<2x16x128xf32, #tpu.memory_space<vmem>>, vector<1x8x128xf32>,
    %c1_233 = arith.constant 1 : index
    %c0_234 = arith.constant 0 : index
    %c0_235 = arith.constant 0 : index
    %286 = vector.load %arg11[%c1_233, %c0_234, %c0_235] : memref<2x16x128xf32, #tpu.memory_space<vmem>>, vector<1x8x128xf32>
    %287 = vector.shape_cast %286 : vector<1x8x128xf32> to vector<8x128xf32>
    %288 = arith.truncf %287 : vector<8x128xf32> to vector<8x128xbf16>
    %289 = arith.truncf %278 : vector<8x128xf32> to vector<8x128xbf16>
    %290 = tpu.concatenate %289, %288 in 1 : vector<8x128xbf16>, vector<8x128xbf16> -> vector<8x256xbf16>
    %c0_236 = arith.constant 0 : index
    %c0_237 = arith.constant 0 : index
    %c0_238 = arith.constant 0 : index
    %291 = vector.load %arg4[%c0_236, %c0_237, %c0_238] : memref<1x256x128xbf16, #tpu.memory_space<vmem>>, vector<1x256x128xbf16>
    %292 = vector.shape_cast %291 : vector<1x256x128xbf16> to vector<256x128xbf16>
    %cst_239 = arith.constant dense<0.000000e+00> : vector<8x128xf32>
    %293 = tpu.matmul %290, %292, %cst_239 {dimension_numbers = #tpu.dot_dimension_numbers<[1], [0], [0], [1], [0, 0, 1, 1], [], []>} : vector<8x256xbf16>, vector<256x128xbf16>, vector<8x128xf32> -> vector<8x128xf32>
    %294 = vector.broadcast %13 : vector<1x128xf32> to vector<8x128xf32>
    %295 = arith.addf %293, %294 : vector<8x128xf32>
    %c1_240 = arith.constant 1 : index
    %c8_241 = arith.constant 8 : index
    %c0_242 = arith.constant 0 : index
    %296 = vector.load %arg11[%c1_240, %c8_241, %c0_242] : memref<2x16x128xf32, #tpu.memory_space<vmem>>, vector<1x8x128xf32>
    %297 = vector.shape_cast %296 : vector<1x8x128xf32> to vector<8x128xf32>
    %298 = arith.truncf %297 : vector<8x128xf32> to vector<8x128xbf16>
    %299 = arith.truncf %279 : vector<8x128xf32> to vector<8x128xbf16>
    %300 = tpu.concatenate %299, %298 in 1 : vector<8x128xbf16>, vector<8x128xbf16> -> vector<8x256xbf16>
    %c0_243 = arith.constant 0 : index
    %c0_244 = arith.constant 0 : index
    %c0_245 = arith.constant 0 : index
    %301 = vector.load %arg4[%c0_243, %c0_244, %c0_245] : memref<1x256x128xbf16, #tpu.memory_space<vmem>>, vector<1x256x128xbf16>
    %302 = vector.shape_cast %301 : vector<1x256x128xbf16> to vector<256x128xbf16>
    %cst_246 = arith.constant dense<0.000000e+00> : vector<8x128xf32>
    %303 = tpu.matmul %300, %302, %cst_246 {dimension_numbers = #tpu.dot_dimension_numbers<[1], [0], [0], [1], [0, 0, 1, 1], [], []>} : vector<8x256xbf16>, vector<256x128xbf16>, vector<8x128xf32> -> vector<8x128xf32>
    %304 = vector.broadcast %13 : vector<1x128xf32> to vector<8x128xf32>
    %305 = arith.addf %303, %304 : vector<8x128xf32>
    %306 = math.tanh %295 : vector<8x128xf32>
    %307 = math.tanh %305 : vector<8x128xf32>
    %c1_247 = arith.constant 1 : index
    %c0_248 = arith.constant 0 : index
    %c0_249 = arith.constant 0 : index
    %308 = vector.load %arg11[%c1_247, %c0_248, %c0_249] : memref<2x16x128xf32, #tpu.memory_space<vmem>>, vector<1x8x128xf32>
    %309 = vector.shape_cast %308 : vector<1x8x128xf32> to vector<8x128xf32>
    %310 = vector.shape_cast %306 : vector<8x128xf32> to vector<1x8x128xf32>
    tpu.vector_store %arg11[%c1_247, %c0_248, %c0_249], %310 {strides = array<i32>} : memref<2x16x128xf32, #tpu.memory_space<vmem>>, vector<1x8x128xf32>,
    %c1_250 = arith.constant 1 : index
    %c8_251 = arith.constant 8 : index
    %c0_252 = arith.constant 0 : index
    %311 = vector.load %arg11[%c1_250, %c8_251, %c0_252] : memref<2x16x128xf32, #tpu.memory_space<vmem>>, vector<1x8x128xf32>
    %312 = vector.shape_cast %311 : vector<1x8x128xf32> to vector<8x128xf32>
    %313 = vector.shape_cast %307 : vector<8x128xf32> to vector<1x8x128xf32>
    tpu.vector_store %arg11[%c1_250, %c8_251, %c0_252], %313 {strides = array<i32>} : memref<2x16x128xf32, #tpu.memory_space<vmem>>, vector<1x8x128xf32>,
    %c96 = arith.constant 96 : index
    %c0_253 = arith.constant 0 : index
    %314 = vector.load %arg10[%c96, %c0_253] : memref<128x128xf32, #tpu.memory_space<vmem>>, vector<8x128xf32>
    %c104 = arith.constant 104 : index
    %c0_254 = arith.constant 0 : index
    %315 = vector.load %arg10[%c104, %c0_254] : memref<128x128xf32, #tpu.memory_space<vmem>>, vector<8x128xf32>
    %c0_255 = arith.constant 0 : index
    %c0_256 = arith.constant 0 : index
    %c0_257 = arith.constant 0 : index
    %316 = vector.load %arg11[%c0_255, %c0_256, %c0_257] : memref<2x16x128xf32, #tpu.memory_space<vmem>>, vector<1x8x128xf32>
    %317 = vector.shape_cast %316 : vector<1x8x128xf32> to vector<8x128xf32>
    %318 = arith.truncf %317 : vector<8x128xf32> to vector<8x128xbf16>
    %c0_258 = arith.constant 0 : index
    %c0_259 = arith.constant 0 : index
    %319 = vector.load %arg5[%c0_258, %c0_259] : memref<128x128xbf16, #tpu.memory_space<vmem>>, vector<128x128xbf16>
    %cst_260 = arith.constant dense<0.000000e+00> : vector<8x128xf32>
    %320 = tpu.matmul %318, %319, %cst_260 {dimension_numbers = #tpu.dot_dimension_numbers<[1], [0], [0], [1], [0, 0, 1, 1], [], []>} : vector<8x128xbf16>, vector<128x128xbf16>, vector<8x128xf32> -> vector<8x128xf32>
    %321 = arith.addf %314, %320 : vector<8x128xf32>
    %c0_261 = arith.constant 0 : index
    %c8_262 = arith.constant 8 : index
    %c0_263 = arith.constant 0 : index
    %322 = vector.load %arg11[%c0_261, %c8_262, %c0_263] : memref<2x16x128xf32, #tpu.memory_space<vmem>>, vector<1x8x128xf32>
    %323 = vector.shape_cast %322 : vector<1x8x128xf32> to vector<8x128xf32>
    %324 = arith.truncf %323 : vector<8x128xf32> to vector<8x128xbf16>
    %c0_264 = arith.constant 0 : index
    %c0_265 = arith.constant 0 : index
    %325 = vector.load %arg5[%c0_264, %c0_265] : memref<128x128xbf16, #tpu.memory_space<vmem>>, vector<128x128xbf16>
    %cst_266 = arith.constant dense<0.000000e+00> : vector<8x128xf32>
    %326 = tpu.matmul %324, %325, %cst_266 {dimension_numbers = #tpu.dot_dimension_numbers<[1], [0], [0], [1], [0, 0, 1, 1], [], []>} : vector<8x128xbf16>, vector<128x128xbf16>, vector<8x128xf32> -> vector<8x128xf32>
    %327 = arith.addf %315, %326 : vector<8x128xf32>
    %328 = math.tanh %321 : vector<8x128xf32>
    %329 = math.tanh %327 : vector<8x128xf32>
    %c0_267 = arith.constant 0 : index
    %c0_268 = arith.constant 0 : index
    %c0_269 = arith.constant 0 : index
    %330 = vector.load %arg11[%c0_267, %c0_268, %c0_269] : memref<2x16x128xf32, #tpu.memory_space<vmem>>, vector<1x8x128xf32>
    %331 = vector.shape_cast %330 : vector<1x8x128xf32> to vector<8x128xf32>
    %332 = vector.shape_cast %328 : vector<8x128xf32> to vector<1x8x128xf32>
    tpu.vector_store %arg11[%c0_267, %c0_268, %c0_269], %332 {strides = array<i32>} : memref<2x16x128xf32, #tpu.memory_space<vmem>>, vector<1x8x128xf32>,
    %c0_270 = arith.constant 0 : index
    %c8_271 = arith.constant 8 : index
    %c0_272 = arith.constant 0 : index
    %333 = vector.load %arg11[%c0_270, %c8_271, %c0_272] : memref<2x16x128xf32, #tpu.memory_space<vmem>>, vector<1x8x128xf32>
    %334 = vector.shape_cast %333 : vector<1x8x128xf32> to vector<8x128xf32>
    %335 = vector.shape_cast %329 : vector<8x128xf32> to vector<1x8x128xf32>
    tpu.vector_store %arg11[%c0_270, %c8_271, %c0_272], %335 {strides = array<i32>} : memref<2x16x128xf32, #tpu.memory_space<vmem>>, vector<1x8x128xf32>,
    %c1_273 = arith.constant 1 : index
    %c0_274 = arith.constant 0 : index
    %c0_275 = arith.constant 0 : index
    %336 = vector.load %arg11[%c1_273, %c0_274, %c0_275] : memref<2x16x128xf32, #tpu.memory_space<vmem>>, vector<1x8x128xf32>
    %337 = vector.shape_cast %336 : vector<1x8x128xf32> to vector<8x128xf32>
    %338 = arith.truncf %337 : vector<8x128xf32> to vector<8x128xbf16>
    %339 = arith.truncf %328 : vector<8x128xf32> to vector<8x128xbf16>
    %340 = tpu.concatenate %339, %338 in 1 : vector<8x128xbf16>, vector<8x128xbf16> -> vector<8x256xbf16>
    %c0_276 = arith.constant 0 : index
    %c0_277 = arith.constant 0 : index
    %c0_278 = arith.constant 0 : index
    %341 = vector.load %arg4[%c0_276, %c0_277, %c0_278] : memref<1x256x128xbf16, #tpu.memory_space<vmem>>, vector<1x256x128xbf16>
    %342 = vector.shape_cast %341 : vector<1x256x128xbf16> to vector<256x128xbf16>
    %cst_279 = arith.constant dense<0.000000e+00> : vector<8x128xf32>
    %343 = tpu.matmul %340, %342, %cst_279 {dimension_numbers = #tpu.dot_dimension_numbers<[1], [0], [0], [1], [0, 0, 1, 1], [], []>} : vector<8x256xbf16>, vector<256x128xbf16>, vector<8x128xf32> -> vector<8x128xf32>
    %344 = vector.broadcast %13 : vector<1x128xf32> to vector<8x128xf32>
    %345 = arith.addf %343, %344 : vector<8x128xf32>
    %c1_280 = arith.constant 1 : index
    %c8_281 = arith.constant 8 : index
    %c0_282 = arith.constant 0 : index
    %346 = vector.load %arg11[%c1_280, %c8_281, %c0_282] : memref<2x16x128xf32, #tpu.memory_space<vmem>>, vector<1x8x128xf32>
    %347 = vector.shape_cast %346 : vector<1x8x128xf32> to vector<8x128xf32>
    %348 = arith.truncf %347 : vector<8x128xf32> to vector<8x128xbf16>
    %349 = arith.truncf %329 : vector<8x128xf32> to vector<8x128xbf16>
    %350 = tpu.concatenate %349, %348 in 1 : vector<8x128xbf16>, vector<8x128xbf16> -> vector<8x256xbf16>
    %c0_283 = arith.constant 0 : index
    %c0_284 = arith.constant 0 : index
    %c0_285 = arith.constant 0 : index
    %351 = vector.load %arg4[%c0_283, %c0_284, %c0_285] : memref<1x256x128xbf16, #tpu.memory_space<vmem>>, vector<1x256x128xbf16>
    %352 = vector.shape_cast %351 : vector<1x256x128xbf16> to vector<256x128xbf16>
    %cst_286 = arith.constant dense<0.000000e+00> : vector<8x128xf32>
    %353 = tpu.matmul %350, %352, %cst_286 {dimension_numbers = #tpu.dot_dimension_numbers<[1], [0], [0], [1], [0, 0, 1, 1], [], []>} : vector<8x256xbf16>, vector<256x128xbf16>, vector<8x128xf32> -> vector<8x128xf32>
    %354 = vector.broadcast %13 : vector<1x128xf32> to vector<8x128xf32>
    %355 = arith.addf %353, %354 : vector<8x128xf32>
    %356 = math.tanh %345 : vector<8x128xf32>
    %357 = math.tanh %355 : vector<8x128xf32>
    %c1_287 = arith.constant 1 : index
    %c0_288 = arith.constant 0 : index
    %c0_289 = arith.constant 0 : index
    %358 = vector.load %arg11[%c1_287, %c0_288, %c0_289] : memref<2x16x128xf32, #tpu.memory_space<vmem>>, vector<1x8x128xf32>
    %359 = vector.shape_cast %358 : vector<1x8x128xf32> to vector<8x128xf32>
    %360 = vector.shape_cast %356 : vector<8x128xf32> to vector<1x8x128xf32>
    tpu.vector_store %arg11[%c1_287, %c0_288, %c0_289], %360 {strides = array<i32>} : memref<2x16x128xf32, #tpu.memory_space<vmem>>, vector<1x8x128xf32>,
    %c1_290 = arith.constant 1 : index
    %c8_291 = arith.constant 8 : index
    %c0_292 = arith.constant 0 : index
    %361 = vector.load %arg11[%c1_290, %c8_291, %c0_292] : memref<2x16x128xf32, #tpu.memory_space<vmem>>, vector<1x8x128xf32>
    %362 = vector.shape_cast %361 : vector<1x8x128xf32> to vector<8x128xf32>
    %363 = vector.shape_cast %357 : vector<8x128xf32> to vector<1x8x128xf32>
    tpu.vector_store %arg11[%c1_290, %c8_291, %c0_292], %363 {strides = array<i32>} : memref<2x16x128xf32, #tpu.memory_space<vmem>>, vector<1x8x128xf32>,
    %c112 = arith.constant 112 : index
    %c0_293 = arith.constant 0 : index
    %364 = vector.load %arg10[%c112, %c0_293] : memref<128x128xf32, #tpu.memory_space<vmem>>, vector<8x128xf32>
    %c120 = arith.constant 120 : index
    %c0_294 = arith.constant 0 : index
    %365 = vector.load %arg10[%c120, %c0_294] : memref<128x128xf32, #tpu.memory_space<vmem>>, vector<8x128xf32>
    %c0_295 = arith.constant 0 : index
    %c0_296 = arith.constant 0 : index
    %c0_297 = arith.constant 0 : index
    %366 = vector.load %arg11[%c0_295, %c0_296, %c0_297] : memref<2x16x128xf32, #tpu.memory_space<vmem>>, vector<1x8x128xf32>
    %367 = vector.shape_cast %366 : vector<1x8x128xf32> to vector<8x128xf32>
    %368 = arith.truncf %367 : vector<8x128xf32> to vector<8x128xbf16>
    %c0_298 = arith.constant 0 : index
    %c0_299 = arith.constant 0 : index
    %369 = vector.load %arg5[%c0_298, %c0_299] : memref<128x128xbf16, #tpu.memory_space<vmem>>, vector<128x128xbf16>
    %cst_300 = arith.constant dense<0.000000e+00> : vector<8x128xf32>
    %370 = tpu.matmul %368, %369, %cst_300 {dimension_numbers = #tpu.dot_dimension_numbers<[1], [0], [0], [1], [0, 0, 1, 1], [], []>} : vector<8x128xbf16>, vector<128x128xbf16>, vector<8x128xf32> -> vector<8x128xf32>
    %371 = arith.addf %364, %370 : vector<8x128xf32>
    %c0_301 = arith.constant 0 : index
    %c8_302 = arith.constant 8 : index
    %c0_303 = arith.constant 0 : index
    %372 = vector.load %arg11[%c0_301, %c8_302, %c0_303] : memref<2x16x128xf32, #tpu.memory_space<vmem>>, vector<1x8x128xf32>
    %373 = vector.shape_cast %372 : vector<1x8x128xf32> to vector<8x128xf32>
    %374 = arith.truncf %373 : vector<8x128xf32> to vector<8x128xbf16>
    %c0_304 = arith.constant 0 : index
    %c0_305 = arith.constant 0 : index
    %375 = vector.load %arg5[%c0_304, %c0_305] : memref<128x128xbf16, #tpu.memory_space<vmem>>, vector<128x128xbf16>
    %cst_306 = arith.constant dense<0.000000e+00> : vector<8x128xf32>
    %376 = tpu.matmul %374, %375, %cst_306 {dimension_numbers = #tpu.dot_dimension_numbers<[1], [0], [0], [1], [0, 0, 1, 1], [], []>} : vector<8x128xbf16>, vector<128x128xbf16>, vector<8x128xf32> -> vector<8x128xf32>
    %377 = arith.addf %365, %376 : vector<8x128xf32>
    %378 = math.tanh %371 : vector<8x128xf32>
    %379 = math.tanh %377 : vector<8x128xf32>
    %c0_307 = arith.constant 0 : index
    %c0_308 = arith.constant 0 : index
    %c0_309 = arith.constant 0 : index
    %380 = vector.load %arg11[%c0_307, %c0_308, %c0_309] : memref<2x16x128xf32, #tpu.memory_space<vmem>>, vector<1x8x128xf32>
    %381 = vector.shape_cast %380 : vector<1x8x128xf32> to vector<8x128xf32>
    %382 = vector.shape_cast %378 : vector<8x128xf32> to vector<1x8x128xf32>
    tpu.vector_store %arg11[%c0_307, %c0_308, %c0_309], %382 {strides = array<i32>} : memref<2x16x128xf32, #tpu.memory_space<vmem>>, vector<1x8x128xf32>,
    %c0_310 = arith.constant 0 : index
    %c8_311 = arith.constant 8 : index
    %c0_312 = arith.constant 0 : index
    %383 = vector.load %arg11[%c0_310, %c8_311, %c0_312] : memref<2x16x128xf32, #tpu.memory_space<vmem>>, vector<1x8x128xf32>
    %384 = vector.shape_cast %383 : vector<1x8x128xf32> to vector<8x128xf32>
    %385 = vector.shape_cast %379 : vector<8x128xf32> to vector<1x8x128xf32>
    tpu.vector_store %arg11[%c0_310, %c8_311, %c0_312], %385 {strides = array<i32>} : memref<2x16x128xf32, #tpu.memory_space<vmem>>, vector<1x8x128xf32>,
    %c1_313 = arith.constant 1 : index
    %c0_314 = arith.constant 0 : index
    %c0_315 = arith.constant 0 : index
    %386 = vector.load %arg11[%c1_313, %c0_314, %c0_315] : memref<2x16x128xf32, #tpu.memory_space<vmem>>, vector<1x8x128xf32>
    %387 = vector.shape_cast %386 : vector<1x8x128xf32> to vector<8x128xf32>
    %388 = arith.truncf %387 : vector<8x128xf32> to vector<8x128xbf16>
    %389 = arith.truncf %378 : vector<8x128xf32> to vector<8x128xbf16>
    %390 = tpu.concatenate %389, %388 in 1 : vector<8x128xbf16>, vector<8x128xbf16> -> vector<8x256xbf16>
    %c0_316 = arith.constant 0 : index
    %c0_317 = arith.constant 0 : index
    %c0_318 = arith.constant 0 : index
    %391 = vector.load %arg4[%c0_316, %c0_317, %c0_318] : memref<1x256x128xbf16, #tpu.memory_space<vmem>>, vector<1x256x128xbf16>
    %392 = vector.shape_cast %391 : vector<1x256x128xbf16> to vector<256x128xbf16>
    %cst_319 = arith.constant dense<0.000000e+00> : vector<8x128xf32>
    %393 = tpu.matmul %390, %392, %cst_319 {dimension_numbers = #tpu.dot_dimension_numbers<[1], [0], [0], [1], [0, 0, 1, 1], [], []>} : vector<8x256xbf16>, vector<256x128xbf16>, vector<8x128xf32> -> vector<8x128xf32>
    %394 = vector.broadcast %13 : vector<1x128xf32> to vector<8x128xf32>
    %395 = arith.addf %393, %394 : vector<8x128xf32>
    %c1_320 = arith.constant 1 : index
    %c8_321 = arith.constant 8 : index
    %c0_322 = arith.constant 0 : index
    %396 = vector.load %arg11[%c1_320, %c8_321, %c0_322] : memref<2x16x128xf32, #tpu.memory_space<vmem>>, vector<1x8x128xf32>
    %397 = vector.shape_cast %396 : vector<1x8x128xf32> to vector<8x128xf32>
    %398 = arith.truncf %397 : vector<8x128xf32> to vector<8x128xbf16>
    %399 = arith.truncf %379 : vector<8x128xf32> to vector<8x128xbf16>
    %400 = tpu.concatenate %399, %398 in 1 : vector<8x128xbf16>, vector<8x128xbf16> -> vector<8x256xbf16>
    %c0_323 = arith.constant 0 : index
    %c0_324 = arith.constant 0 : index
    %c0_325 = arith.constant 0 : index
    %401 = vector.load %arg4[%c0_323, %c0_324, %c0_325] : memref<1x256x128xbf16, #tpu.memory_space<vmem>>, vector<1x256x128xbf16>
    %402 = vector.shape_cast %401 : vector<1x256x128xbf16> to vector<256x128xbf16>
    %cst_326 = arith.constant dense<0.000000e+00> : vector<8x128xf32>
    %403 = tpu.matmul %400, %402, %cst_326 {dimension_numbers = #tpu.dot_dimension_numbers<[1], [0], [0], [1], [0, 0, 1, 1], [], []>} : vector<8x256xbf16>, vector<256x128xbf16>, vector<8x128xf32> -> vector<8x128xf32>
    %404 = vector.broadcast %13 : vector<1x128xf32> to vector<8x128xf32>
    %405 = arith.addf %403, %404 : vector<8x128xf32>
    %406 = math.tanh %395 : vector<8x128xf32>
    %407 = math.tanh %405 : vector<8x128xf32>
    %c1_327 = arith.constant 1 : index
    %c0_328 = arith.constant 0 : index
    %c0_329 = arith.constant 0 : index
    %408 = vector.load %arg11[%c1_327, %c0_328, %c0_329] : memref<2x16x128xf32, #tpu.memory_space<vmem>>, vector<1x8x128xf32>
    %409 = vector.shape_cast %408 : vector<1x8x128xf32> to vector<8x128xf32>
    %410 = vector.shape_cast %406 : vector<8x128xf32> to vector<1x8x128xf32>
    tpu.vector_store %arg11[%c1_327, %c0_328, %c0_329], %410 {strides = array<i32>} : memref<2x16x128xf32, #tpu.memory_space<vmem>>, vector<1x8x128xf32>,
    %c1_330 = arith.constant 1 : index
    %c8_331 = arith.constant 8 : index
    %c0_332 = arith.constant 0 : index
    %411 = vector.load %arg11[%c1_330, %c8_331, %c0_332] : memref<2x16x128xf32, #tpu.memory_space<vmem>>, vector<1x8x128xf32>
    %412 = vector.shape_cast %411 : vector<1x8x128xf32> to vector<8x128xf32>
    %413 = vector.shape_cast %407 : vector<8x128xf32> to vector<1x8x128xf32>
    tpu.vector_store %arg11[%c1_330, %c8_331, %c0_332], %413 {strides = array<i32>} : memref<2x16x128xf32, #tpu.memory_space<vmem>>, vector<1x8x128xf32>,
    %c0_i32_333 = arith.constant 0 : i32
    %414 = arith.cmpi eq, %arg1, %c0_i32_333 : i32
    %415 = arith.extui %414 : i1 to i32
    %c0_i32_334 = arith.constant 0 : i32
    %416 = arith.cmpi ne, %415, %c0_i32_334 : i32
    scf.if %416 {
      %c1_335 = arith.constant 1 : index
      %c0_336 = arith.constant 0 : index
      %c0_337 = arith.constant 0 : index
      %417 = vector.load %arg11[%c1_335, %c0_336, %c0_337] : memref<2x16x128xf32, #tpu.memory_space<vmem>>, vector<1x16x128xf32>
      %418 = vector.shape_cast %417 : vector<1x16x128xf32> to vector<16x128xf32>
      %cst_338 = arith.constant 0.000000e+00 : f32
      %419 = vector.broadcast %cst_338 : f32 to vector<16x128xf32>
      %420 = arith.maximumf %418, %419 : vector<16x128xf32>
      %421 = arith.truncf %420 : vector<16x128xf32> to vector<16x128xbf16>
      %c0_339 = arith.constant 0 : index
      %c0_340 = arith.constant 0 : index
      %422 = vector.load %arg7[%c0_339, %c0_340] : memref<128x128xbf16, #tpu.memory_space<vmem>>, vector<128x128xbf16>
      %cst_341 = arith.constant dense<0.000000e+00> : vector<16x128xf32>
      %423 = tpu.matmul %421, %422, %cst_341 {dimension_numbers = #tpu.dot_dimension_numbers<[1], [0], [0], [1], [0, 0, 1, 1], [], []>} : vector<16x128xbf16>, vector<128x128xbf16>, vector<16x128xf32> -> vector<16x128xf32>
      %c0_342 = arith.constant 0 : index
      %c0_343 = arith.constant 0 : index
      %424 = vector.load %arg8[%c0_342, %c0_343] : memref<1x128xf32, #tpu.memory_space<vmem>>, vector<1x128xf32>
      %425 = vector.broadcast %424 : vector<1x128xf32> to vector<16x128xf32>
      %426 = arith.addf %423, %425 : vector<16x128xf32>
      %c0_344 = arith.constant 0 : index
      %c0_345 = arith.constant 0 : index
      %427 = vector.load %arg9[%c0_344, %c0_345] : memref<16x128xf32, #tpu.memory_space<vmem>>, vector<16x128xf32>
      tpu.vector_store %arg9[%c0_344, %c0_345], %426 {strides = array<i32>} : memref<16x128xf32, #tpu.memory_space<vmem>>, vector<16x128xf32>,
    } else {
    }
    return
  }
  func.func @transform_0(%arg0: i32, %arg1: i32) -> (i32, i32, i32) {
    %c0_i32 = arith.constant 0 : i32
    %c0_i32_0 = arith.constant 0 : i32
    return %arg1, %arg0, %c0_i32 : i32, i32, i32
  }
  func.func @transform_1(%arg0: i32, %arg1: i32) -> (i32, i32) {
    %c0_i32 = arith.constant 0 : i32
    %c0_i32_0 = arith.constant 0 : i32
    %c0_i32_1 = arith.constant 0 : i32
    return %c0_i32, %c0_i32_0 : i32, i32
  }
  func.func @transform_2(%arg0: i32, %arg1: i32) -> (i32, i32, i32) {
    %c0_i32 = arith.constant 0 : i32
    %c0_i32_0 = arith.constant 0 : i32
    %c0_i32_1 = arith.constant 0 : i32
    %c0_i32_2 = arith.constant 0 : i32
    return %c0_i32, %c0_i32_0, %c0_i32_1 : i32, i32, i32
  }
  func.func @transform_3(%arg0: i32, %arg1: i32) -> (i32, i32) {
    %c0_i32 = arith.constant 0 : i32
    %c0_i32_0 = arith.constant 0 : i32
    %c0_i32_1 = arith.constant 0 : i32
    return %c0_i32, %c0_i32_0 : i32, i32
  }
  func.func @transform_4(%arg0: i32, %arg1: i32) -> (i32, i32, i32) {
    %c0_i32 = arith.constant 0 : i32
    %c0_i32_0 = arith.constant 0 : i32
    %c0_i32_1 = arith.constant 0 : i32
    %c0_i32_2 = arith.constant 0 : i32
    return %c0_i32, %c0_i32_0, %c0_i32_1 : i32, i32, i32
  }
  func.func @transform_5(%arg0: i32, %arg1: i32) -> (i32, i32) {
    %c0_i32 = arith.constant 0 : i32
    %c0_i32_0 = arith.constant 0 : i32
    %c0_i32_1 = arith.constant 0 : i32
    return %c0_i32, %c0_i32_0 : i32, i32
  }
  func.func @transform_6(%arg0: i32, %arg1: i32) -> (i32, i32) {
    %c0_i32 = arith.constant 0 : i32
    %c0_i32_0 = arith.constant 0 : i32
    %c0_i32_1 = arith.constant 0 : i32
    return %c0_i32, %c0_i32_0 : i32, i32
  }
  func.func @transform_7(%arg0: i32, %arg1: i32) -> (i32, i32) {
    %c0_i32 = arith.constant 0 : i32
    %c0_i32_0 = arith.constant 0 : i32
    return %arg0, %c0_i32 : i32, i32
  }
}

</mosaic_0001>

<llo_original>
// kernel: tpu_custom_call.1
$region0: #{tpu_custom_call.1}
  #allocation0 [shape = 'u32[]', space=smem, size = 0x4, offset = 0x4, fixed_abs, tag = 'smem constant byte address 0x4 - core index']
  #allocation1 [shape = 'u32[72,128]{1,0:T(1,128)}', space=vmem, size = 0x9000, scoped, tag = 'internal scratch']
  #allocation2 [shape = 'f32[128,128]{1,0:T(8,128)}', space=vmem, size = 0x10000, scoped, tag = 'scratch operand']
  #allocation3 [shape = 'f32[2,16,128]{2,1,0:T(8,128)}', space=vmem, size = 0x4000, scoped, tag = 'scratch operand']
  %s0 = inlined_call_operand.hbm [shape: bf16[8,16,16], index: 0, kind: input, shape index: {}]
  %s1 = inlined_call_operand.hbm [shape: bf16[16,128], index: 1, kind: input, shape index: {}]
  %s2 = inlined_call_operand.hbm [shape: bf16[1,256,128], index: 2, kind: input, shape index: {}]
  %s3 = inlined_call_operand.hbm [shape: bf16[128,128], index: 3, kind: input, shape index: {}]
  %s4 = inlined_call_operand.vmem [shape: f32[2,1,128], index: 4, kind: input, shape index: {}]
  %s5 = inlined_call_operand.hbm [shape: bf16[128,128], index: 5, kind: input, shape index: {}]
  %s6 = inlined_call_operand.vmem [shape: f32[1,128], index: 6, kind: input, shape index: {}]
  %s7 = inlined_call_operand.hbm [shape: f32[16,128], index: 7, kind: output, shape index: {}]
  %s8 = sld [smem:[#allocation0]]
  $region66: #{tpu_custom_call.1} parent=0
    _
  %s10 = ssub.s32 1, %s8
  %s11 = scalar_select 0, %s10, %s8
  $region1: #{tpu_custom_call.1} parent=0
    #allocation4 [shape = 'u8[32768]{0}', space=vmem, size = 0x8000, scoped, tag = 'input window, operand 0, single buffered']
    #allocation5 [shape = 's32[1]{0}', space=sflag, size = 0x4, scoped, tag = 'scoped memory for tpu_custom_call.1']
    #allocation6 [shape = 's32[1]{0}', space=sflag, size = 0x4, scoped, tag = 'scoped memory for tpu_custom_call.1']
    #allocation7 [shape = 'u8[4096]{0}', space=vmem, size = 0x1000, scoped, tag = 'input window, operand 1, single buffered']
    #allocation8 [shape = 's32[1]{0}', space=sflag, size = 0x4, scoped, tag = 'scoped memory for tpu_custom_call.1']
    #allocation9 [shape = 'u8[65536]{0}', space=vmem, size = 0x10000, scoped, tag = 'input window, operand 2, single buffered']
    #allocation10 [shape = 'u8[32768]{0}', space=vmem, size = 0x8000, scoped, tag = 'input window, operand 3, single buffered']
    #allocation11 [shape = 's32[1]{0}', space=sflag, size = 0x4, scoped, tag = 'scoped memory for tpu_custom_call.1']
    #allocation12 [shape = 'u8[32768]{0}', space=vmem, size = 0x8000, scoped, tag = 'input window, operand 5, single buffered']
    #allocation13 [shape = 'u8[8192]{0}', space=vmem, size = 0x2000, scoped, tag = 'output window, operand 0, single buffered']
    %12 = vsyncpa [#allocation5], 0
    %13 = vsyncpa [#allocation8], 0
    %14 = vsyncpa [#allocation11], 0
    %15 = vsyncpa [#allocation6], 0
    // Predicated region
    $region2: #{tpu_custom_call.1} parent=1 // pred_check
      _
    $region3: #{tpu_custom_call.1} parent=1 // pred_check_branch
      %17 = sbr.rel (0) target = $region5
    $region4: #{tpu_custom_call.1} parent=1 // pred_region
      %19 = vsyncadd [#allocation5], 0
      %s20 = sshll.u32 %s0, 4
      %s21 = int_to_ptr.hbm [resolvable:$true] %s20
      %s22 = sshll.u32 [#allocation4], 4
      %s23 = int_to_ptr.vmem [resolvable:$true] %s22
      %28 = dma.hbm_to_vmem [thread:$0]  %s21, 1024, %s23, [#allocation5], 64, 64, 4
    $region5: #{tpu_custom_call.1} parent=1 // pred_fallthru
      _
    // Predicated region
    $region6: #{tpu_custom_call.1} parent=1 // pred_check
      _
    $region7: #{tpu_custom_call.1} parent=1 // pred_check_branch
      %30 = sbr.rel (0) target = $region9
    $region8: #{tpu_custom_call.1} parent=1 // pred_region
      %32 = vsyncadd [#allocation8], 0
      %s33 = sshll.u32 %s1, 4
      %s34 = int_to_ptr.hbm [resolvable:$true] %s33
      %s35 = sshll.u32 [#allocation7], 4
      %s36 = int_to_ptr.vmem [resolvable:$true] %s35
      %41 = dma.hbm_to_vmem [thread:$0]  %s34, 128, %s36, [#allocation8], 64, 64, 4
    $region9: #{tpu_custom_call.1} parent=1 // pred_fallthru
      _
    // Predicated region
    $region10: #{tpu_custom_call.1} parent=1 // pred_check
      _
    $region11: #{tpu_custom_call.1} parent=1 // pred_check_branch
      %43 = sbr.rel (0) target = $region13
    $region12: #{tpu_custom_call.1} parent=1 // pred_region
      %45 = vsyncadd [#allocation8], 0
      %s46 = sshll.u32 %s2, 4
      %s47 = int_to_ptr.hbm [resolvable:$true] %s46
      %s48 = sshll.u32 [#allocation9], 4
      %s49 = int_to_ptr.vmem [resolvable:$true] %s48
      %54 = dma.hbm_to_vmem [thread:$0]  %s47, 2048, %s49, [#allocation8], 64, 64, 4
    $region13: #{tpu_custom_call.1} parent=1 // pred_fallthru
      _
    // Predicated region
    $region14: #{tpu_custom_call.1} parent=1 // pred_check
      _
    $region15: #{tpu_custom_call.1} parent=1 // pred_check_branch
      %56 = sbr.rel (0) target = $region17
    $region16: #{tpu_custom_call.1} parent=1 // pred_region
      %58 = vsyncadd [#allocation11], 0
      %s59 = sshll.u32 %s3, 4
      %s60 = int_to_ptr.hbm [resolvable:$true] %s59
      %s61 = sshll.u32 [#allocation10], 4
      %s62 = int_to_ptr.vmem [resolvable:$true] %s61
      %67 = dma.hbm_to_vmem [thread:$0]  %s60, 1024, %s62, [#allocation11], 64, 64, 4
    $region17: #{tpu_custom_call.1} parent=1 // pred_fallthru
      _
    // Predicated region
    $region18: #{tpu_custom_call.1} parent=1 // pred_check
      _
    $region19: #{tpu_custom_call.1} parent=1 // pred_check_branch
      %69 = sbr.rel (0) target = $region21
    $region20: #{tpu_custom_call.1} parent=1 // pred_region
      _
    $region21: #{tpu_custom_call.1} parent=1 // pred_fallthru
      _
    // Predicated region
    $region22: #{tpu_custom_call.1} parent=1 // pred_check
      _
    $region23: #{tpu_custom_call.1} parent=1 // pred_check_branch
      %71 = sbr.rel (0) target = $region25
    $region24: #{tpu_custom_call.1} parent=1 // pred_region
      %73 = vsyncadd [#allocation11], 0
      %s74 = sshll.u32 %s5, 4
      %s75 = int_to_ptr.hbm [resolvable:$true] %s74
      %s76 = sshll.u32 [#allocation12], 4
      %s77 = int_to_ptr.vmem [resolvable:$true] %s76
      %82 = dma.hbm_to_vmem [thread:$0]  %s75, 1024, %s77, [#allocation11], 64, 64, 4
    $region25: #{tpu_custom_call.1} parent=1 // pred_fallthru
      _
    // Predicated region
    $region26: #{tpu_custom_call.1} parent=1 // pred_check
      _
    $region27: #{tpu_custom_call.1} parent=1 // pred_check_branch
      %84 = sbr.rel (0) target = $region29
    $region28: #{tpu_custom_call.1} parent=1 // pred_region
      _
    $region29: #{tpu_custom_call.1} parent=1 // pred_fallthru
      _
    // Predicated region
    $region30: #{tpu_custom_call.1} parent=1 // pred_check
      _
    $region31: #{tpu_custom_call.1} parent=1 // pred_check_branch
      %86 = sbr.rel (0) target = $region33
    $region32: #{tpu_custom_call.1} parent=1 // pred_region
      %88 = dma.done [#allocation5], 1024
    $region33: #{tpu_custom_call.1} parent=1 // pred_fallthru
      _
    // Predicated region
    $region34: #{tpu_custom_call.1} parent=1 // pred_check
      _
    $region35: #{tpu_custom_call.1} parent=1 // pred_check_branch
      %90 = sbr.rel (0) target = $region37
    $region36: #{tpu_custom_call.1} parent=1 // pred_region
      %92 = dma.done [#allocation8], 128
    $region37: #{tpu_custom_call.1} parent=1 // pred_fallthru
      _
    // Predicated region
    $region38: #{tpu_custom_call.1} parent=1 // pred_check
      _
    $region39: #{tpu_custom_call.1} parent=1 // pred_check_branch
      %94 = sbr.rel (0) target = $region41
    $region40: #{tpu_custom_call.1} parent=1 // pred_region
      %96 = dma.done [#allocation8], 2048
    $region41: #{tpu_custom_call.1} parent=1 // pred_fallthru
      _
    // Predicated region
    $region42: #{tpu_custom_call.1} parent=1 // pred_check
      _
    $region43: #{tpu_custom_call.1} parent=1 // pred_check_branch
      %98 = sbr.rel (0) target = $region45
    $region44: #{tpu_custom_call.1} parent=1 // pred_region
      %100 = dma.done [#allocation11], 1024
    $region45: #{tpu_custom_call.1} parent=1 // pred_fallthru
      _
    // Predicated region
    $region46: #{tpu_custom_call.1} parent=1 // pred_check
      _
    $region47: #{tpu_custom_call.1} parent=1 // pred_check_branch
      %102 = sbr.rel (0) target = $region49
    $region48: #{tpu_custom_call.1} parent=1 // pred_region
      %104 = dma.done [#allocation11], 1024
    $region49: #{tpu_custom_call.1} parent=1 // pred_fallthru
      _
    %p106 = scmp.eq.s32.totalorder 0, 0
    // Predicated region
    $region50: #{tpu_custom_call.1} parent=1 // pred_check
      %p107 = pneg %p106
    $region51: #{tpu_custom_call.1} parent=1 // pred_check_branch
      %109 = sbr.rel (%p107) target = $region53
    $region52: #{tpu_custom_call.1} parent=1 // pred_region
      %110 = vst [vmem:[#allocation3] sm:$0xff] 0.0
      %111 = vst [vmem:[#allocation3 + $0x8] sm:$0xff] 0.0
      %112 = vst [vmem:[#allocation3 + $0x10] sm:$0xff] 0.0
      %113 = vst [vmem:[#allocation3 + $0x18] sm:$0xff] 0.0
    $region53: #{tpu_custom_call.1} parent=1 // pred_fallthru
      _
    %v114 = vld [vmem:[#allocation4] sm:$0xf]
    %v115 = vld [vmem:[#allocation4 + $0x4] sm:$0xf]
    %v116 = vld [vmem:[#allocation4 + $0x8] sm:$0xf]
    %v117 = vld [vmem:[#allocation4 + $0xc] sm:$0xf]
    %v118 = vld [vmem:[#allocation4 + $0x10] sm:$0xf]
    %v119 = vld [vmem:[#allocation4 + $0x14] sm:$0xf]
    %v120 = vld [vmem:[#allocation4 + $0x18] sm:$0xf]
    %v121 = vld [vmem:[#allocation4 + $0x1c] sm:$0xf]
    %v122 = vld [vmem:[#allocation4 + $0x20] sm:$0xf]
    %v123 = vld [vmem:[#allocation4 + $0x24] sm:$0xf]
    %v124 = vld [vmem:[#allocation4 + $0x28] sm:$0xf]
    %v125 = vld [vmem:[#allocation4 + $0x2c] sm:$0xf]
    %v126 = vld [vmem:[#allocation4 + $0x30] sm:$0xf]
    %v127 = vld [vmem:[#allocation4 + $0x34] sm:$0xf]
    %v128 = vld [vmem:[#allocation4 + $0x38] sm:$0xf]
    %v129 = vld [vmem:[#allocation4 + $0x3c] sm:$0xf]
    %v130 = vld [vmem:[#allocation7] sm:$0xf]
    %v131 = vld [vmem:[#allocation7 + $0x4] sm:$0xf]
    %v132 = vld [vmem:[%s4] sm:$0x1]
    %v134 = vperm.slane %v132, 0
    %v152 = vunpack.c.l.b16 %v114
    %v153 = vunpack.c.l.b16 %v115
    %v154 = vunpack.c.l.b16 %v116
    %v155 = vunpack.c.l.b16 %v117
    %v156 = vunpack.c.l.b16 %v118
    %v157 = vunpack.c.l.b16 %v119
    %v158 = vunpack.c.l.b16 %v120
    %v159 = vunpack.c.l.b16 %v121
    %v160 = vunpack.c.l.b16 %v122
    %v161 = vunpack.c.l.b16 %v123
    %v162 = vunpack.c.l.b16 %v124
    %v163 = vunpack.c.l.b16 %v125
    %v164 = vunpack.c.l.b16 %v126
    %v165 = vunpack.c.l.b16 %v127
    %v166 = vunpack.c.l.b16 %v128
    %v167 = vunpack.c.l.b16 %v129
    %v168 = vpack.c.b16 %v153, %v152
    %v169 = vpack.c.b16 %v155, %v154
    %v170 = vpack.c.b16 %v157, %v156
    %v171 = vpack.c.b16 %v159, %v158
    %v172 = vpack.c.b16 %v161, %v160
    %v173 = vpack.c.b16 %v163, %v162
    %v174 = vpack.c.b16 %v165, %v164
    %v175 = vpack.c.b16 %v167, %v166
    %v178 = vunpack.c.l.b16 %v130
    %v179 = vunpack.c.l.b16 %v131
    %v180 = vpack.c.b16 %v179, %v178
    %vm182 = vcmask 130048
    %v184 = vsel %vm182, %v168, 0
    %v187 = vsel %vm182, %v169, 0
    %v190 = vsel %vm182, %v170, 0
    %v193 = vsel %vm182, %v171, 0
    %v196 = vsel %vm182, %v172, 0
    %v199 = vsel %vm182, %v173, 0
    %v202 = vsel %vm182, %v174, 0
    %v205 = vsel %vm182, %v175, 0
    %207 = vmatpush.bf16.msra.mxu0 0
    %208 = vmatpush.bf16.msra.mxu0 0
    %209 = vmatpush.bf16.msra.mxu0 0
    %210 = vmatpush.bf16.msra.mxu0 0
    %211 = vmatpush.bf16.msra.mxu0 0
    %212 = vmatpush.bf16.msra.mxu0 0
    %213 = vmatpush.bf16.msra.mxu0 0
    %214 = vmatpush.bf16.msra.mxu0 %v180
    %215 = vmatmul.bf16.gmra.mxu0 %v184
    %v216 = vpop.f32.mrf.mxu0
    %v217 = vadd.f32 %v134, %v216
    %v218 = vpop.f32.mrf.mxu0
    %v219 = vadd.f32 %v134, %v218
    %220 = vmatmul.bf16.gmra.mxu0 %v187
    %v221 = vpop.f32.mrf.mxu0
    %v222 = vadd.f32 %v134, %v221
    %v223 = vpop.f32.mrf.mxu0
    %v224 = vadd.f32 %v134, %v223
    %225 = vmatmul.bf16.gmra.mxu0 %v190
    %v226 = vpop.f32.mrf.mxu0
    %v227 = vadd.f32 %v134, %v226
    %v228 = vpop.f32.mrf.mxu0
    %v229 = vadd.f32 %v134, %v228
    %230 = vmatmul.bf16.gmra.mxu0 %v193
    %v231 = vpop.f32.mrf.mxu0
    %v232 = vadd.f32 %v134, %v231
    %v233 = vpop.f32.mrf.mxu0
    %v234 = vadd.f32 %v134, %v233
    %235 = vmatmul.bf16.gmra.mxu0 %v196
    %v236 = vpop.f32.mrf.mxu0
    %v237 = vadd.f32 %v134, %v236
    %v238 = vpop.f32.mrf.mxu0
    %v239 = vadd.f32 %v134, %v238
    %240 = vmatmul.bf16.gmra.mxu0 %v199
    %v241 = vpop.f32.mrf.mxu0
    %v242 = vadd.f32 %v134, %v241
    %v243 = vpop.f32.mrf.mxu0
    %v244 = vadd.f32 %v134, %v243
    %245 = vmatmul.bf16.gmra.mxu0 %v202
    %v246 = vpop.f32.mrf.mxu0
    %v247 = vadd.f32 %v134, %v246
    %v248 = vpop.f32.mrf.mxu0
    %v249 = vadd.f32 %v134, %v248
    %250 = vmatmul.bf16.gmra.mxu0 %v205
    %v251 = vpop.f32.mrf.mxu0
    %v252 = vadd.f32 %v134, %v251
    %v253 = vpop.f32.mrf.mxu0
    %v254 = vadd.f32 %v134, %v253
    %255 = vdwg.mxu0
    %256 = vst [vmem:[#allocation2] sm:$0xff] %v217
    %257 = vst [vmem:[#allocation2 + $0x8] sm:$0xff] %v219
    %258 = vst [vmem:[#allocation2 + $0x10] sm:$0xff] %v222
    %259 = vst [vmem:[#allocation2 + $0x18] sm:$0xff] %v224
    %260 = vst [vmem:[#allocation2 + $0x20] sm:$0xff] %v227
    %261 = vst [vmem:[#allocation2 + $0x28] sm:$0xff] %v229
    %262 = vst [vmem:[#allocation2 + $0x30] sm:$0xff] %v232
    %263 = vst [vmem:[#allocation2 + $0x38] sm:$0xff] %v234
    %264 = vst [vmem:[#allocation2 + $0x40] sm:$0xff] %v237
    %265 = vst [vmem:[#allocation2 + $0x48] sm:$0xff] %v239
    %266 = vst [vmem:[#allocation2 + $0x50] sm:$0xff] %v242
    %267 = vst [vmem:[#allocation2 + $0x58] sm:$0xff] %v244
    %268 = vst [vmem:[#allocation2 + $0x60] sm:$0xff] %v247
    %269 = vst [vmem:[#allocation2 + $0x68] sm:$0xff] %v249
    %270 = vst [vmem:[#allocation2 + $0x70] sm:$0xff] %v252
    %271 = vst [vmem:[#allocation2 + $0x78] sm:$0xff] %v254
    %s272 = scalar_lea.vmem %s4, 1
    %v273 = vld [vmem:[%s272] sm:$0x1]
    %v274 = vld [vmem:[#allocation2] sm:$0xff]
    %v275 = vld [vmem:[#allocation2 + $0x8] sm:$0xff]
    %v276 = vld [vmem:[#allocation3] sm:$0xff]
    %v277 = vpack.c.bf16 %v276, %v276
    %v278 = vld [vmem:[#allocation10] sm:$0xf]
    %v279 = vld [vmem:[#allocation10 + $0x4] sm:$0xf]
    %v280 = vld [vmem:[#allocation10 + $0x8] sm:$0xf]
    %v281 = vld [vmem:[#allocation10 + $0xc] sm:$0xf]
    %v282 = vld [vmem:[#allocation10 + $0x10] sm:$0xf]
    %v283 = vld [vmem:[#allocation10 + $0x14] sm:$0xf]
    %v284 = vld [vmem:[#allocation10 + $0x18] sm:$0xf]
    %v285 = vld [vmem:[#allocation10 + $0x1c] sm:$0xf]
    %v286 = vld [vmem:[#allocation10 + $0x20] sm:$0xf]
    %v287 = vld [vmem:[#allocation10 + $0x24] sm:$0xf]
    %v288 = vld [vmem:[#allocation10 + $0x28] sm:$0xf]
    %v289 = vld [vmem:[#allocation10 + $0x2c] sm:$0xf]
    %v290 = vld [vmem:[#allocation10 + $0x30] sm:$0xf]
    %v291 = vld [vmem:[#allocation10 + $0x34] sm:$0xf]
    %v292 = vld [vmem:[#allocation10 + $0x38] sm:$0xf]
    %v293 = vld [vmem:[#allocation10 + $0x3c] sm:$0xf]
    %v310 = vunpack.c.l.b16 %v278
    %v311 = vunpack.c.l.b16 %v279
    %v312 = vunpack.c.l.b16 %v280
    %v313 = vunpack.c.l.b16 %v281
    %v314 = vunpack.c.l.b16 %v282
    %v315 = vunpack.c.l.b16 %v283
    %v316 = vunpack.c.l.b16 %v284
    %v317 = vunpack.c.l.b16 %v285
    %v318 = vunpack.c.l.b16 %v286
    %v319 = vunpack.c.l.b16 %v287
    %v320 = vunpack.c.l.b16 %v288
    %v321 = vunpack.c.l.b16 %v289
    %v322 = vunpack.c.l.b16 %v290
    %v323 = vunpack.c.l.b16 %v291
    %v324 = vunpack.c.l.b16 %v292
    %v325 = vunpack.c.l.b16 %v293
    %v326 = vpack.c.b16 %v311, %v310
    %v327 = vpack.c.b16 %v313, %v312
    %v328 = vpack.c.b16 %v315, %v314
    %v329 = vpack.c.b16 %v317, %v316
    %v330 = vpack.c.b16 %v319, %v318
    %v331 = vpack.c.b16 %v321, %v320
    %v332 = vpack.c.b16 %v323, %v322
    %v333 = vpack.c.b16 %v325, %v324
    %342 = vmatpush.bf16.msra.mxu0 %v333
    %343 = vmatpush.bf16.msra.mxu0 %v332
    %344 = vmatpush.bf16.msra.mxu0 %v331
    %345 = vmatpush.bf16.msra.mxu0 %v330
    %346 = vmatpush.bf16.msra.mxu0 %v329
    %347 = vmatpush.bf16.msra.mxu0 %v328
    %348 = vmatpush.bf16.msra.mxu0 %v327
    %349 = vmatpush.bf16.msra.mxu0 %v326
    %350 = vmatmul.bf16.gmra.mxu0 %v277
    %v351 = vpop.f32.mrf.mxu0
    %v352 = vadd.f32 0.0, %v351
    %v353 = vpop.f32.mrf.mxu0
    %354 = vdwg.mxu0
    %v355 = vadd.f32 %v274, %v352
    %v356 = vld [vmem:[#allocation3 + $0x8] sm:$0xff]
    %v357 = vpack.c.bf16 %v356, %v356
    %358 = vmatpush.bf16.msra.mxu0 %v333
    %359 = vmatpush.bf16.msra.mxu0 %v332
    %360 = vmatpush.bf16.msra.mxu0 %v331
    %361 = vmatpush.bf16.msra.mxu0 %v330
    %362 = vmatpush.bf16.msra.mxu0 %v329
    %363 = vmatpush.bf16.msra.mxu0 %v328
    %364 = vmatpush.bf16.msra.mxu0 %v327
    %365 = vmatpush.bf16.msra.mxu0 %v326
    %366 = vmatmul.bf16.gmra.mxu0 %v357
    %v367 = vpop.f32.mrf.mxu0
    %v368 = vadd.f32 0.0, %v367
    %v369 = vpop.f32.mrf.mxu0
    %370 = vdwg.mxu0
    %v371 = vadd.f32 %v275, %v368
    %v372 = vtanh.pop %v355
    %v373 = vtanh.pop %v371
    %374 = vst [vmem:[#allocation3] sm:$0xff] %v372
    %375 = vst [vmem:[#allocation3 + $0x8] sm:$0xff] %v373
    %s376 = scalar_lea.vmem [#allocation3], 16
    %v377 = vld [vmem:[%s376] sm:$0xff]
    %v378 = vpack.c.bf16 %v377, %v377
    %v379 = vpack.c.bf16 %v372, %v372
    %v380 = vld [vmem:[#allocation9] sm:$0xf]
    %v381 = vld [vmem:[#allocation9 + $0x4] sm:$0xf]
    %v382 = vld [vmem:[#allocation9 + $0x8] sm:$0xf]
    %v383 = vld [vmem:[#allocation9 + $0xc] sm:$0xf]
    %v384 = vld [vmem:[#allocation9 + $0x10] sm:$0xf]
    %v385 = vld [vmem:[#allocation9 + $0x14] sm:$0xf]
    %v386 = vld [vmem:[#allocation9 + $0x18] sm:$0xf]
    %v387 = vld [vmem:[#allocation9 + $0x1c] sm:$0xf]
    %v388 = vld [vmem:[#allocation9 + $0x20] sm:$0xf]
    %v389 = vld [vmem:[#allocation9 + $0x24] sm:$0xf]
    %v390 = vld [vmem:[#allocation9 + $0x28] sm:$0xf]
    %v391 = vld [vmem:[#allocation9 + $0x2c] sm:$0xf]
    %v392 = vld [vmem:[#allocation9 + $0x30] sm:$0xf]
    %v393 = vld [vmem:[#allocation9 + $0x34] sm:$0xf]
    %v394 = vld [vmem:[#allocation9 + $0x38] sm:$0xf]
    %v395 = vld [vmem:[#allocation9 + $0x3c] sm:$0xf]
    %v396 = vld [vmem:[#allocation9 + $0x40] sm:$0xf]
    %v397 = vld [vmem:[#allocation9 + $0x44] sm:$0xf]
    %v398 = vld [vmem:[#allocation9 + $0x48] sm:$0xf]
    %v399 = vld [vmem:[#allocation9 + $0x4c] sm:$0xf]
    %v400 = vld [vmem:[#allocation9 + $0x50] sm:$0xf]
    %v401 = vld [vmem:[#allocation9 + $0x54] sm:$0xf]
    %v402 = vld [vmem:[#allocation9 + $0x58] sm:$0xf]
    %v403 = vld [vmem:[#allocation9 + $0x5c] sm:$0xf]
    %v404 = vld [vmem:[#allocation9 + $0x60] sm:$0xf]
    %v405 = vld [vmem:[#allocation9 + $0x64] sm:$0xf]
    %v406 = vld [vmem:[#allocation9 + $0x68] sm:$0xf]
    %v407 = vld [vmem:[#allocation9 + $0x6c] sm:$0xf]
    %v408 = vld [vmem:[#allocation9 + $0x70] sm:$0xf]
    %v409 = vld [vmem:[#allocation9 + $0x74] sm:$0xf]
    %v410 = vld [vmem:[#allocation9 + $0x78] sm:$0xf]
    %v411 = vld [vmem:[#allocation9 + $0x7c] sm:$0xf]
    %v413 = vperm.slane %v273, 0
    %v447 = vunpack.c.l.b16 %v380
    %v448 = vunpack.c.l.b16 %v381
    %v449 = vunpack.c.l.b16 %v382
    %v450 = vunpack.c.l.b16 %v383
    %v451 = vunpack.c.l.b16 %v384
    %v452 = vunpack.c.l.b16 %v385
    %v453 = vunpack.c.l.b16 %v386
    %v454 = vunpack.c.l.b16 %v387
    %v455 = vunpack.c.l.b16 %v388
    %v456 = vunpack.c.l.b16 %v389
    %v457 = vunpack.c.l.b16 %v390
    %v458 = vunpack.c.l.b16 %v391
    %v459 = vunpack.c.l.b16 %v392
    %v460 = vunpack.c.l.b16 %v393
    %v461 = vunpack.c.l.b16 %v394
    %v462 = vunpack.c.l.b16 %v395
    %v463 = vunpack.c.l.b16 %v396
    %v464 = vunpack.c.l.b16 %v397
    %v465 = vunpack.c.l.b16 %v398
    %v466 = vunpack.c.l.b16 %v399
    %v467 = vunpack.c.l.b16 %v400
    %v468 = vunpack.c.l.b16 %v401
    %v469 = vunpack.c.l.b16 %v402
    %v470 = vunpack.c.l.b16 %v403
    %v471 = vunpack.c.l.b16 %v404
    %v472 = vunpack.c.l.b16 %v405
    %v473 = vunpack.c.l.b16 %v406
    %v474 = vunpack.c.l.b16 %v407
    %v475 = vunpack.c.l.b16 %v408
    %v476 = vunpack.c.l.b16 %v409
    %v477 = vunpack.c.l.b16 %v410
    %v478 = vunpack.c.l.b16 %v411
    %v479 = vpack.c.b16 %v448, %v447
    %v480 = vpack.c.b16 %v450, %v449
    %v481 = vpack.c.b16 %v452, %v451
    %v482 = vpack.c.b16 %v454, %v453
    %v483 = vpack.c.b16 %v456, %v455
    %v484 = vpack.c.b16 %v458, %v457
    %v485 = vpack.c.b16 %v460, %v459
    %v486 = vpack.c.b16 %v462, %v461
    %v487 = vpack.c.b16 %v464, %v463
    %v488 = vpack.c.b16 %v466, %v465
    %v489 = vpack.c.b16 %v468, %v467
    %v490 = vpack.c.b16 %v470, %v469
    %v491 = vpack.c.b16 %v472, %v471
    %v492 = vpack.c.b16 %v474, %v473
    %v493 = vpack.c.b16 %v476, %v475
    %v494 = vpack.c.b16 %v478, %v477
    %511 = vmatpush.bf16.msra.mxu0 %v486
    %512 = vmatpush.bf16.msra.mxu0 %v485
    %513 = vmatpush.bf16.msra.mxu0 %v484
    %514 = vmatpush.bf16.msra.mxu0 %v483
    %515 = vmatpush.bf16.msra.mxu0 %v482
    %516 = vmatpush.bf16.msra.mxu0 %v481
    %517 = vmatpush.bf16.msra.mxu0 %v480
    %518 = vmatpush.bf16.msra.mxu0 %v479
    %519 = vmatmul.bf16.gmra.mxu0 %v379
    %v520 = vpop.f32.mrf.mxu0
    %v521 = vadd.f32 %v413, %v520
    %v522 = vpop.f32.mrf.mxu0
    %523 = vdwg.mxu0
    %524 = vmatpush.bf16.msra.mxu0 %v494
    %525 = vmatpush.bf16.msra.mxu0 %v493
    %526 = vmatpush.bf16.msra.mxu0 %v492
    %527 = vmatpush.bf16.msra.mxu0 %v491
    %528 = vmatpush.bf16.msra.mxu0 %v490
    %529 = vmatpush.bf16.msra.mxu0 %v489
    %530 = vmatpush.bf16.msra.mxu0 %v488
    %531 = vmatpush.bf16.msra.mxu0 %v487
    %532 = vmatmul.bf16.gmra.mxu0 %v378
    %v533 = vpop.f32.mrf.mxu0
    %v534 = vadd.f32 %v521, %v533
    %v535 = vpop.f32.mrf.mxu0
    %536 = vdwg.mxu0
    %v537 = vld [vmem:[%s376 + $0x8] sm:$0xff]
    %v538 = vpack.c.bf16 %v537, %v537
    %v539 = vpack.c.bf16 %v373, %v373
    %540 = vmatpush.bf16.msra.mxu0 %v486
    %541 = vmatpush.bf16.msra.mxu0 %v485
    %542 = vmatpush.bf16.msra.mxu0 %v484
    %543 = vmatpush.bf16.msra.mxu0 %v483
    %544 = vmatpush.bf16.msra.mxu0 %v482
    %545 = vmatpush.bf16.msra.mxu0 %v481
    %546 = vmatpush.bf16.msra.mxu0 %v480
    %547 = vmatpush.bf16.msra.mxu0 %v479
    %548 = vmatmul.bf16.gmra.mxu0 %v539
    %v549 = vpop.f32.mrf.mxu0
    %v550 = vadd.f32 %v413, %v549
    %v551 = vpop.f32.mrf.mxu0
    %552 = vdwg.mxu0
    %553 = vmatpush.bf16.msra.mxu0 %v494
    %554 = vmatpush.bf16.msra.mxu0 %v493
    %555 = vmatpush.bf16.msra.mxu0 %v492
    %556 = vmatpush.bf16.msra.mxu0 %v491
    %557 = vmatpush.bf16.msra.mxu0 %v490
    %558 = vmatpush.bf16.msra.mxu0 %v489
    %559 = vmatpush.bf16.msra.mxu0 %v488
    %560 = vmatpush.bf16.msra.mxu0 %v487
    %561 = vmatmul.bf16.gmra.mxu0 %v538
    %v562 = vpop.f32.mrf.mxu0
    %v563 = vadd.f32 %v550, %v562
    %v564 = vpop.f32.mrf.mxu0
    %565 = vdwg.mxu0
    %v566 = vtanh.pop %v534
    %v567 = vtanh.pop %v563
    %568 = vst [vmem:[%s376] sm:$0xff] %v566
    %569 = vst [vmem:[%s376 + $0x8] sm:$0xff] %v567
    %v570 = vld [vmem:[#allocation2 + $0x10] sm:$0xff]
    %v571 = vld [vmem:[#allocation2 + $0x18] sm:$0xff]
    %v572 = vld [vmem:[#allocation3] sm:$0xff]
    %v573 = vpack.c.bf16 %v572, %v572
    %v574 = vld [vmem:[#allocation10] sm:$0xf]
    %v575 = vld [vmem:[#allocation10 + $0x4] sm:$0xf]
    %v576 = vld [vmem:[#allocation10 + $0x8] sm:$0xf]
    %v577 = vld [vmem:[#allocation10 + $0xc] sm:$0xf]
    %v578 = vld [vmem:[#allocation10 + $0x10] sm:$0xf]
    %v579 = vld [vmem:[#allocation10 + $0x14] sm:$0xf]
    %v580 = vld [vmem:[#allocation10 + $0x18] sm:$0xf]
    %v581 = vld [vmem:[#allocation10 + $0x1c] sm:$0xf]
    %v582 = vld [vmem:[#allocation10 + $0x20] sm:$0xf]
    %v583 = vld [vmem:[#allocation10 + $0x24] sm:$0xf]
    %v584 = vld [vmem:[#allocation10 + $0x28] sm:$0xf]
    %v585 = vld [vmem:[#allocation10 + $0x2c] sm:$0xf]
    %v586 = vld [vmem:[#allocation10 + $0x30] sm:$0xf]
    %v587 = vld [vmem:[#allocation10 + $0x34] sm:$0xf]
    %v588 = vld [vmem:[#allocation10 + $0x38] sm:$0xf]
    %v589 = vld [vmem:[#allocation10 + $0x3c] sm:$0xf]
    %v606 = vunpack.c.l.b16 %v574
    %v607 = vunpack.c.l.b16 %v575
    %v608 = vunpack.c.l.b16 %v576
    %v609 = vunpack.c.l.b16 %v577
    %v610 = vunpack.c.l.b16 %v578
    %v611 = vunpack.c.l.b16 %v579
    %v612 = vunpack.c.l.b16 %v580
    %v613 = vunpack.c.l.b16 %v581
    %v614 = vunpack.c.l.b16 %v582
    %v615 = vunpack.c.l.b16 %v583
    %v616 = vunpack.c.l.b16 %v584
    %v617 = vunpack.c.l.b16 %v585
    %v618 = vunpack.c.l.b16 %v586
    %v619 = vunpack.c.l.b16 %v587
    %v620 = vunpack.c.l.b16 %v588
    %v621 = vunpack.c.l.b16 %v589
    %v622 = vpack.c.b16 %v607, %v606
    %v623 = vpack.c.b16 %v609, %v608
    %v624 = vpack.c.b16 %v611, %v610
    %v625 = vpack.c.b16 %v613, %v612
    %v626 = vpack.c.b16 %v615, %v614
    %v627 = vpack.c.b16 %v617, %v616
    %v628 = vpack.c.b16 %v619, %v618
    %v629 = vpack.c.b16 %v621, %v620
    %638 = vmatpush.bf16.msra.mxu0 %v629
    %639 = vmatpush.bf16.msra.mxu0 %v628
    %640 = vmatpush.bf16.msra.mxu0 %v627
    %641 = vmatpush.bf16.msra.mxu0 %v626
    %642 = vmatpush.bf16.msra.mxu0 %v625
    %643 = vmatpush.bf16.msra.mxu0 %v624
    %644 = vmatpush.bf16.msra.mxu0 %v623
    %645 = vmatpush.bf16.msra.mxu0 %v622
    %646 = vmatmul.bf16.gmra.mxu0 %v573
    %v647 = vpop.f32.mrf.mxu0
    %v648 = vadd.f32 0.0, %v647
    %v649 = vpop.f32.mrf.mxu0
    %650 = vdwg.mxu0
    %v651 = vadd.f32 %v570, %v648
    %v652 = vld [vmem:[#allocation3 + $0x8] sm:$0xff]
    %v653 = vpack.c.bf16 %v652, %v652
    %654 = vmatpush.bf16.msra.mxu0 %v629
    %655 = vmatpush.bf16.msra.mxu0 %v628
    %656 = vmatpush.bf16.msra.mxu0 %v627
    %657 = vmatpush.bf16.msra.mxu0 %v626
    %658 = vmatpush.bf16.msra.mxu0 %v625
    %659 = vmatpush.bf16.msra.mxu0 %v624
    %660 = vmatpush.bf16.msra.mxu0 %v623
    %661 = vmatpush.bf16.msra.mxu0 %v622
    %662 = vmatmul.bf16.gmra.mxu0 %v653
    %v663 = vpop.f32.mrf.mxu0
    %v664 = vadd.f32 0.0, %v663
    %v665 = vpop.f32.mrf.mxu0
    %666 = vdwg.mxu0
    %v667 = vadd.f32 %v571, %v664
    %v668 = vtanh.pop %v651
    %v669 = vtanh.pop %v667
    %670 = vst [vmem:[#allocation3] sm:$0xff] %v668
    %671 = vst [vmem:[#allocation3 + $0x8] sm:$0xff] %v669
    %v672 = vld [vmem:[%s376] sm:$0xff]
    %v673 = vpack.c.bf16 %v672, %v672
    %v674 = vpack.c.bf16 %v668, %v668
    %v675 = vld [vmem:[#allocation9] sm:$0xf]
    %v676 = vld [vmem:[#allocation9 + $0x4] sm:$0xf]
    %v677 = vld [vmem:[#allocation9 + $0x8] sm:$0xf]
    %v678 = vld [vmem:[#allocation9 + $0xc] sm:$0xf]
    %v679 = vld [vmem:[#allocation9 + $0x10] sm:$0xf]
    %v680 = vld [vmem:[#allocation9 + $0x14] sm:$0xf]
    %v681 = vld [vmem:[#allocation9 + $0x18] sm:$0xf]
    %v682 = vld [vmem:[#allocation9 + $0x1c] sm:$0xf]
    %v683 = vld [vmem:[#allocation9 + $0x20] sm:$0xf]
    %v684 = vld [vmem:[#allocation9 + $0x24] sm:$0xf]
    %v685 = vld [vmem:[#allocation9 + $0x28] sm:$0xf]
    %v686 = vld [vmem:[#allocation9 + $0x2c] sm:$0xf]
    %v687 = vld [vmem:[#allocation9 + $0x30] sm:$0xf]
    %v688 = vld [vmem:[#allocation9 + $0x34] sm:$0xf]
    %v689 = vld [vmem:[#allocation9 + $0x38] sm:$0xf]
    %v690 = vld [vmem:[#allocation9 + $0x3c] sm:$0xf]
    %v691 = vld [vmem:[#allocation9 + $0x40] sm:$0xf]
    %v692 = vld [vmem:[#allocation9 + $0x44] sm:$0xf]
    %v693 = vld [vmem:[#allocation9 + $0x48] sm:$0xf]
    %v694 = vld [vmem:[#allocation9 + $0x4c] sm:$0xf]
    %v695 = vld [vmem:[#allocation9 + $0x50] sm:$0xf]
    %v696 = vld [vmem:[#allocation9 + $0x54] sm:$0xf]
    %v697 = vld [vmem:[#allocation9 + $0x58] sm:$0xf]
    %v698 = vld [vmem:[#allocation9 + $0x5c] sm:$0xf]
    %v699 = vld [vmem:[#allocation9 + $0x60] sm:$0xf]
    %v700 = vld [vmem:[#allocation9 + $0x64] sm:$0xf]
    %v701 = vld [vmem:[#allocation9 + $0x68] sm:$0xf]
    %v702 = vld [vmem:[#allocation9 + $0x6c] sm:$0xf]
    %v703 = vld [vmem:[#allocation9 + $0x70] sm:$0xf]
    %v704 = vld [vmem:[#allocation9 + $0x74] sm:$0xf]
    %v705 = vld [vmem:[#allocation9 + $0x78] sm:$0xf]
    %v706 = vld [vmem:[#allocation9 + $0x7c] sm:$0xf]
    %v739 = vunpack.c.l.b16 %v675
    %v740 = vunpack.c.l.b16 %v676
    %v741 = vunpack.c.l.b16 %v677
    %v742 = vunpack.c.l.b16 %v678
    %v743 = vunpack.c.l.b16 %v679
    %v744 = vunpack.c.l.b16 %v680
    %v745 = vunpack.c.l.b16 %v681
    %v746 = vunpack.c.l.b16 %v682
    %v747 = vunpack.c.l.b16 %v683
    %v748 = vunpack.c.l.b16 %v684
    %v749 = vunpack.c.l.b16 %v685
    %v750 = vunpack.c.l.b16 %v686
    %v751 = vunpack.c.l.b16 %v687
    %v752 = vunpack.c.l.b16 %v688
    %v753 = vunpack.c.l.b16 %v689
    %v754 = vunpack.c.l.b16 %v690
    %v755 = vunpack.c.l.b16 %v691
    %v756 = vunpack.c.l.b16 %v692
    %v757 = vunpack.c.l.b16 %v693
    %v758 = vunpack.c.l.b16 %v694
    %v759 = vunpack.c.l.b16 %v695
    %v760 = vunpack.c.l.b16 %v696
    %v761 = vunpack.c.l.b16 %v697
    %v762 = vunpack.c.l.b16 %v698
    %v763 = vunpack.c.l.b16 %v699
    %v764 = vunpack.c.l.b16 %v700
    %v765 = vunpack.c.l.b16 %v701
    %v766 = vunpack.c.l.b16 %v702
    %v767 = vunpack.c.l.b16 %v703
    %v768 = vunpack.c.l.b16 %v704
    %v769 = vunpack.c.l.b16 %v705
    %v770 = vunpack.c.l.b16 %v706
    %v771 = vpack.c.b16 %v740, %v739
    %v772 = vpack.c.b16 %v742, %v741
    %v773 = vpack.c.b16 %v744, %v743
    %v774 = vpack.c.b16 %v746, %v745
    %v775 = vpack.c.b16 %v748, %v747
    %v776 = vpack.c.b16 %v750, %v749
    %v777 = vpack.c.b16 %v752, %v751
    %v778 = vpack.c.b16 %v754, %v753
    %v779 = vpack.c.b16 %v756, %v755
    %v780 = vpack.c.b16 %v758, %v757
    %v781 = vpack.c.b16 %v760, %v759
    %v782 = vpack.c.b16 %v762, %v761
    %v783 = vpack.c.b16 %v764, %v763
    %v784 = vpack.c.b16 %v766, %v765
    %v785 = vpack.c.b16 %v768, %v767
    %v786 = vpack.c.b16 %v770, %v769
    %803 = vmatpush.bf16.msra.mxu0 %v778
    %804 = vmatpush.bf16.msra.mxu0 %v777
    %805 = vmatpush.bf16.msra.mxu0 %v776
    %806 = vmatpush.bf16.msra.mxu0 %v775
    %807 = vmatpush.bf16.msra.mxu0 %v774
    %808 = vmatpush.bf16.msra.mxu0 %v773
    %809 = vmatpush.bf16.msra.mxu0 %v772
    %810 = vmatpush.bf16.msra.mxu0 %v771
    %811 = vmatmul.bf16.gmra.mxu0 %v674
    %v812 = vpop.f32.mrf.mxu0
    %v813 = vadd.f32 %v413, %v812
    %v814 = vpop.f32.mrf.mxu0
    %815 = vdwg.mxu0
    %816 = vmatpush.bf16.msra.mxu0 %v786
    %817 = vmatpush.bf16.msra.mxu0 %v785
    %818 = vmatpush.bf16.msra.mxu0 %v784
    %819 = vmatpush.bf16.msra.mxu0 %v783
    %820 = vmatpush.bf16.msra.mxu0 %v782
    %821 = vmatpush.bf16.msra.mxu0 %v781
    %822 = vmatpush.bf16.msra.mxu0 %v780
    %823 = vmatpush.bf16.msra.mxu0 %v779
    %824 = vmatmul.bf16.gmra.mxu0 %v673
    %v825 = vpop.f32.mrf.mxu0
    %v826 = vadd.f32 %v813, %v825
    %v827 = vpop.f32.mrf.mxu0
    %828 = vdwg.mxu0
    %v829 = vld [vmem:[%s376 + $0x8] sm:$0xff]
    %v830 = vpack.c.bf16 %v829, %v829
    %v831 = vpack.c.bf16 %v669, %v669
    %832 = vmatpush.bf16.msra.mxu0 %v778
    %833 = vmatpush.bf16.msra.mxu0 %v777
    %834 = vmatpush.bf16.msra.mxu0 %v776
    %835 = vmatpush.bf16.msra.mxu0 %v775
    %836 = vmatpush.bf16.msra.mxu0 %v774
    %837 = vmatpush.bf16.msra.mxu0 %v773
    %838 = vmatpush.bf16.msra.mxu0 %v772
    %839 = vmatpush.bf16.msra.mxu0 %v771
    %840 = vmatmul.bf16.gmra.mxu0 %v831
    %v841 = vpop.f32.mrf.mxu0
    %v842 = vadd.f32 %v413, %v841
    %v843 = vpop.f32.mrf.mxu0
    %844 = vdwg.mxu0
    %845 = vmatpush.bf16.msra.mxu0 %v786
    %846 = vmatpush.bf16.msra.mxu0 %v785
    %847 = vmatpush.bf16.msra.mxu0 %v784
    %848 = vmatpush.bf16.msra.mxu0 %v783
    %849 = vmatpush.bf16.msra.mxu0 %v782
    %850 = vmatpush.bf16.msra.mxu0 %v781
    %851 = vmatpush.bf16.msra.mxu0 %v780
    %852 = vmatpush.bf16.msra.mxu0 %v779
    %853 = vmatmul.bf16.gmra.mxu0 %v830
    %v854 = vpop.f32.mrf.mxu0
    %v855 = vadd.f32 %v842, %v854
    %v856 = vpop.f32.mrf.mxu0
    %857 = vdwg.mxu0
    %v858 = vtanh.pop %v826
    %v859 = vtanh.pop %v855
    %860 = vst [vmem:[%s376] sm:$0xff] %v858
    %861 = vst [vmem:[%s376 + $0x8] sm:$0xff] %v859
    %v862 = vld [vmem:[#allocation2 + $0x20] sm:$0xff]
    %v863 = vld [vmem:[#allocation2 + $0x28] sm:$0xff]
    %v864 = vld [vmem:[#allocation3] sm:$0xff]
    %v865 = vpack.c.bf16 %v864, %v864
    %v866 = vld [vmem:[#allocation10] sm:$0xf]
    %v867 = vld [vmem:[#allocation10 + $0x4] sm:$0xf]
    %v868 = vld [vmem:[#allocation10 + $0x8] sm:$0xf]
    %v869 = vld [vmem:[#allocation10 + $0xc] sm:$0xf]
    %v870 = vld [vmem:[#allocation10 + $0x10] sm:$0xf]
    %v871 = vld [vmem:[#allocation10 + $0x14] sm:$0xf]
    %v872 = vld [vmem:[#allocation10 + $0x18] sm:$0xf]
    %v873 = vld [vmem:[#allocation10 + $0x1c] sm:$0xf]
    %v874 = vld [vmem:[#allocation10 + $0x20] sm:$0xf]
    %v875 = vld [vmem:[#allocation10 + $0x24] sm:$0xf]
    %v876 = vld [vmem:[#allocation10 + $0x28] sm:$0xf]
    %v877 = vld [vmem:[#allocation10 + $0x2c] sm:$0xf]
    %v878 = vld [vmem:[#allocation10 + $0x30] sm:$0xf]
    %v879 = vld [vmem:[#allocation10 + $0x34] sm:$0xf]
    %v880 = vld [vmem:[#allocation10 + $0x38] sm:$0xf]
    %v881 = vld [vmem:[#allocation10 + $0x3c] sm:$0xf]
    %v898 = vunpack.c.l.b16 %v866
    %v899 = vunpack.c.l.b16 %v867
    %v900 = vunpack.c.l.b16 %v868
    %v901 = vunpack.c.l.b16 %v869
    %v902 = vunpack.c.l.b16 %v870
    %v903 = vunpack.c.l.b16 %v871
    %v904 = vunpack.c.l.b16 %v872
    %v905 = vunpack.c.l.b16 %v873
    %v906 = vunpack.c.l.b16 %v874
    %v907 = vunpack.c.l.b16 %v875
    %v908 = vunpack.c.l.b16 %v876
    %v909 = vunpack.c.l.b16 %v877
    %v910 = vunpack.c.l.b16 %v878
    %v911 = vunpack.c.l.b16 %v879
    %v912 = vunpack.c.l.b16 %v880
    %v913 = vunpack.c.l.b16 %v881
    %v914 = vpack.c.b16 %v899, %v898
    %v915 = vpack.c.b16 %v901, %v900
    %v916 = vpack.c.b16 %v903, %v902
    %v917 = vpack.c.b16 %v905, %v904
    %v918 = vpack.c.b16 %v907, %v906
    %v919 = vpack.c.b16 %v909, %v908
    %v920 = vpack.c.b16 %v911, %v910
    %v921 = vpack.c.b16 %v913, %v912
    %930 = vmatpush.bf16.msra.mxu0 %v921
    %931 = vmatpush.bf16.msra.mxu0 %v920
    %932 = vmatpush.bf16.msra.mxu0 %v919
    %933 = vmatpush.bf16.msra.mxu0 %v918
    %934 = vmatpush.bf16.msra.mxu0 %v917
    %935 = vmatpush.bf16.msra.mxu0 %v916
    %936 = vmatpush.bf16.msra.mxu0 %v915
    %937 = vmatpush.bf16.msra.mxu0 %v914
    %938 = vmatmul.bf16.gmra.mxu0 %v865
    %v939 = vpop.f32.mrf.mxu0
    %v940 = vadd.f32 0.0, %v939
    %v941 = vpop.f32.mrf.mxu0
    %942 = vdwg.mxu0
    %v943 = vadd.f32 %v862, %v940
    %v944 = vld [vmem:[#allocation3 + $0x8] sm:$0xff]
    %v945 = vpack.c.bf16 %v944, %v944
    %946 = vmatpush.bf16.msra.mxu0 %v921
    %947 = vmatpush.bf16.msra.mxu0 %v920
    %948 = vmatpush.bf16.msra.mxu0 %v919
    %949 = vmatpush.bf16.msra.mxu0 %v918
    %950 = vmatpush.bf16.msra.mxu0 %v917
    %951 = vmatpush.bf16.msra.mxu0 %v916
    %952 = vmatpush.bf16.msra.mxu0 %v915
    %953 = vmatpush.bf16.msra.mxu0 %v914
    %954 = vmatmul.bf16.gmra.mxu0 %v945
    %v955 = vpop.f32.mrf.mxu0
    %v956 = vadd.f32 0.0, %v955
    %v957 = vpop.f32.mrf.mxu0
    %958 = vdwg.mxu0
    %v959 = vadd.f32 %v863, %v956
    %v960 = vtanh.pop %v943
    %v961 = vtanh.pop %v959
    %962 = vst [vmem:[#allocation3] sm:$0xff] %v960
    %963 = vst [vmem:[#allocation3 + $0x8] sm:$0xff] %v961
    %v964 = vld [vmem:[%s376] sm:$0xff]
    %v965 = vpack.c.bf16 %v964, %v964
    %v966 = vpack.c.bf16 %v960, %v960
    %v967 = vld [vmem:[#allocation9] sm:$0xf]
    %v968 = vld [vmem:[#allocation9 + $0x4] sm:$0xf]
    %v969 = vld [vmem:[#allocation9 + $0x8] sm:$0xf]
    %v970 = vld [vmem:[#allocation9 + $0xc] sm:$0xf]
    %v971 = vld [vmem:[#allocation9 + $0x10] sm:$0xf]
    %v972 = vld [vmem:[#allocation9 + $0x14] sm:$0xf]
    %v973 = vld [vmem:[#allocation9 + $0x18] sm:$0xf]
    %v974 = vld [vmem:[#allocation9 + $0x1c] sm:$0xf]
    %v975 = vld [vmem:[#allocation9 + $0x20] sm:$0xf]
    %v976 = vld [vmem:[#allocation9 + $0x24] sm:$0xf]
    %v977 = vld [vmem:[#allocation9 + $0x28] sm:$0xf]
    %v978 = vld [vmem:[#allocation9 + $0x2c] sm:$0xf]
    %v979 = vld [vmem:[#allocation9 + $0x30] sm:$0xf]
    %v980 = vld [vmem:[#allocation9 + $0x34] sm:$0xf]
    %v981 = vld [vmem:[#allocation9 + $0x38] sm:$0xf]
    %v982 = vld [vmem:[#allocation9 + $0x3c] sm:$0xf]
    %v983 = vld [vmem:[#allocation9 + $0x40] sm:$0xf]
    %v984 = vld [vmem:[#allocation9 + $0x44] sm:$0xf]
    %v985 = vld [vmem:[#allocation9 + $0x48] sm:$0xf]
    %v986 = vld [vmem:[#allocation9 + $0x4c] sm:$0xf]
    %v987 = vld [vmem:[#allocation9 + $0x50] sm:$0xf]
    %v988 = vld [vmem:[#allocation9 + $0x54] sm:$0xf]
    %v989 = vld [vmem:[#allocation9 + $0x58] sm:$0xf]
    %v990 = vld [vmem:[#allocation9 + $0x5c] sm:$0xf]
    %v991 = vld [vmem:[#allocation9 + $0x60] sm:$0xf]
    %v992 = vld [vmem:[#allocation9 + $0x64] sm:$0xf]
    %v993 = vld [vmem:[#allocation9 + $0x68] sm:$0xf]
    %v994 = vld [vmem:[#allocation9 + $0x6c] sm:$0xf]
    %v995 = vld [vmem:[#allocation9 + $0x70] sm:$0xf]
    %v996 = vld [vmem:[#allocation9 + $0x74] sm:$0xf]
    %v997 = vld [vmem:[#allocation9 + $0x78] sm:$0xf]
    %v998 = vld [vmem:[#allocation9 + $0x7c] sm:$0xf]
    %v1031 = vunpack.c.l.b16 %v967
    %v1032 = vunpack.c.l.b16 %v968
    %v1033 = vunpack.c.l.b16 %v969
    %v1034 = vunpack.c.l.b16 %v970
    %v1035 = vunpack.c.l.b16 %v971
    %v1036 = vunpack.c.l.b16 %v972
    %v1037 = vunpack.c.l.b16 %v973
    %v1038 = vunpack.c.l.b16 %v974
    %v1039 = vunpack.c.l.b16 %v975
    %v1040 = vunpack.c.l.b16 %v976
    %v1041 = vunpack.c.l.b16 %v977
    %v1042 = vunpack.c.l.b16 %v978
    %v1043 = vunpack.c.l.b16 %v979
    %v1044 = vunpack.c.l.b16 %v980
    %v1045 = vunpack.c.l.b16 %v981
    %v1046 = vunpack.c.l.b16 %v982
    %v1047 = vunpack.c.l.b16 %v983
    %v1048 = vunpack.c.l.b16 %v984
    %v1049 = vunpack.c.l.b16 %v985
    %v1050 = vunpack.c.l.b16 %v986
    %v1051 = vunpack.c.l.b16 %v987
    %v1052 = vunpack.c.l.b16 %v988
    %v1053 = vunpack.c.l.b16 %v989
    %v1054 = vunpack.c.l.b16 %v990
    %v1055 = vunpack.c.l.b16 %v991
    %v1056 = vunpack.c.l.b16 %v992
    %v1057 = vunpack.c.l.b16 %v993
    %v1058 = vunpack.c.l.b16 %v994
    %v1059 = vunpack.c.l.b16 %v995
    %v1060 = vunpack.c.l.b16 %v996
    %v1061 = vunpack.c.l.b16 %v997
    %v1062 = vunpack.c.l.b16 %v998
    %v1063 = vpack.c.b16 %v1032, %v1031
    %v1064 = vpack.c.b16 %v1034, %v1033
    %v1065 = vpack.c.b16 %v1036, %v1035
    %v1066 = vpack.c.b16 %v1038, %v1037
    %v1067 = vpack.c.b16 %v1040, %v1039
    %v1068 = vpack.c.b16 %v1042, %v1041
    %v1069 = vpack.c.b16 %v1044, %v1043
    %v1070 = vpack.c.b16 %v1046, %v1045
    %v1071 = vpack.c.b16 %v1048, %v1047
    %v1072 = vpack.c.b16 %v1050, %v1049
    %v1073 = vpack.c.b16 %v1052, %v1051
    %v1074 = vpack.c.b16 %v1054, %v1053
    %v1075 = vpack.c.b16 %v1056, %v1055
    %v1076 = vpack.c.b16 %v1058, %v1057
    %v1077 = vpack.c.b16 %v1060, %v1059
    %v1078 = vpack.c.b16 %v1062, %v1061
    %1095 = vmatpush.bf16.msra.mxu0 %v1070
    %1096 = vmatpush.bf16.msra.mxu0 %v1069
    %1097 = vmatpush.bf16.msra.mxu0 %v1068
    %1098 = vmatpush.bf16.msra.mxu0 %v1067
    %1099 = vmatpush.bf16.msra.mxu0 %v1066
    %1100 = vmatpush.bf16.msra.mxu0 %v1065
    %1101 = vmatpush.bf16.msra.mxu0 %v1064
    %1102 = vmatpush.bf16.msra.mxu0 %v1063
    %1103 = vmatmul.bf16.gmra.mxu0 %v966
    %v1104 = vpop.f32.mrf.mxu0
    %v1105 = vadd.f32 %v413, %v1104
    %v1106 = vpop.f32.mrf.mxu0
    %1107 = vdwg.mxu0
    %1108 = vmatpush.bf16.msra.mxu0 %v1078
    %1109 = vmatpush.bf16.msra.mxu0 %v1077
    %1110 = vmatpush.bf16.msra.mxu0 %v1076
    %1111 = vmatpush.bf16.msra.mxu0 %v1075
    %1112 = vmatpush.bf16.msra.mxu0 %v1074
    %1113 = vmatpush.bf16.msra.mxu0 %v1073
    %1114 = vmatpush.bf16.msra.mxu0 %v1072
    %1115 = vmatpush.bf16.msra.mxu0 %v1071
    %1116 = vmatmul.bf16.gmra.mxu0 %v965
    %v1117 = vpop.f32.mrf.mxu0
    %v1118 = vadd.f32 %v1105, %v1117
    %v1119 = vpop.f32.mrf.mxu0
    %1120 = vdwg.mxu0
    %v1121 = vld [vmem:[%s376 + $0x8] sm:$0xff]
    %v1122 = vpack.c.bf16 %v1121, %v1121
    %v1123 = vpack.c.bf16 %v961, %v961
    %1124 = vmatpush.bf16.msra.mxu0 %v1070
    %1125 = vmatpush.bf16.msra.mxu0 %v1069
    %1126 = vmatpush.bf16.msra.mxu0 %v1068
    %1127 = vmatpush.bf16.msra.mxu0 %v1067
    %1128 = vmatpush.bf16.msra.mxu0 %v1066
    %1129 = vmatpush.bf16.msra.mxu0 %v1065
    %1130 = vmatpush.bf16.msra.mxu0 %v1064
    %1131 = vmatpush.bf16.msra.mxu0 %v1063
    %1132 = vmatmul.bf16.gmra.mxu0 %v1123
    %v1133 = vpop.f32.mrf.mxu0
    %v1134 = vadd.f32 %v413, %v1133
    %v1135 = vpop.f32.mrf.mxu0
    %1136 = vdwg.mxu0
    %1137 = vmatpush.bf16.msra.mxu0 %v1078
    %1138 = vmatpush.bf16.msra.mxu0 %v1077
    %1139 = vmatpush.bf16.msra.mxu0 %v1076
    %1140 = vmatpush.bf16.msra.mxu0 %v1075
    %1141 = vmatpush.bf16.msra.mxu0 %v1074
    %1142 = vmatpush.bf16.msra.mxu0 %v1073
    %1143 = vmatpush.bf16.msra.mxu0 %v1072
    %1144 = vmatpush.bf16.msra.mxu0 %v1071
    %1145 = vmatmul.bf16.gmra.mxu0 %v1122
    %v1146 = vpop.f32.mrf.mxu0
    %v1147 = vadd.f32 %v1134, %v1146
    %v1148 = vpop.f32.mrf.mxu0
    %1149 = vdwg.mxu0
    %v1150 = vtanh.pop %v1118
    %v1151 = vtanh.pop %v1147
    %1152 = vst [vmem:[%s376] sm:$0xff] %v1150
    %1153 = vst [vmem:[%s376 + $0x8] sm:$0xff] %v1151
    %v1154 = vld [vmem:[#allocation2 + $0x30] sm:$0xff]
    %v1155 = vld [vmem:[#allocation2 + $0x38] sm:$0xff]
    %v1156 = vld [vmem:[#allocation3] sm:$0xff]
    %v1157 = vpack.c.bf16 %v1156, %v1156
    %v1158 = vld [vmem:[#allocation10] sm:$0xf]
    %v1159 = vld [vmem:[#allocation10 + $0x4] sm:$0xf]
    %v1160 = vld [vmem:[#allocation10 + $0x8] sm:$0xf]
    %v1161 = vld [vmem:[#allocation10 + $0xc] sm:$0xf]
    %v1162 = vld [vmem:[#allocation10 + $0x10] sm:$0xf]
    %v1163 = vld [vmem:[#allocation10 + $0x14] sm:$0xf]
    %v1164 = vld [vmem:[#allocation10 + $0x18] sm:$0xf]
    %v1165 = vld [vmem:[#allocation10 + $0x1c] sm:$0xf]
    %v1166 = vld [vmem:[#allocation10 + $0x20] sm:$0xf]
    %v1167 = vld [vmem:[#allocation10 + $0x24] sm:$0xf]
    %v1168 = vld [vmem:[#allocation10 + $0x28] sm:$0xf]
    %v1169 = vld [vmem:[#allocation10 + $0x2c] sm:$0xf]
    %v1170 = vld [vmem:[#allocation10 + $0x30] sm:$0xf]
    %v1171 = vld [vmem:[#allocation10 + $0x34] sm:$0xf]
    %v1172 = vld [vmem:[#allocation10 + $0x38] sm:$0xf]
    %v1173 = vld [vmem:[#allocation10 + $0x3c] sm:$0xf]
    %v1190 = vunpack.c.l.b16 %v1158
    %v1191 = vunpack.c.l.b16 %v1159
    %v1192 = vunpack.c.l.b16 %v1160
    %v1193 = vunpack.c.l.b16 %v1161
    %v1194 = vunpack.c.l.b16 %v1162
    %v1195 = vunpack.c.l.b16 %v1163
    %v1196 = vunpack.c.l.b16 %v1164
    %v1197 = vunpack.c.l.b16 %v1165
    %v1198 = vunpack.c.l.b16 %v1166
    %v1199 = vunpack.c.l.b16 %v1167
    %v1200 = vunpack.c.l.b16 %v1168
    %v1201 = vunpack.c.l.b16 %v1169
    %v1202 = vunpack.c.l.b16 %v1170
    %v1203 = vunpack.c.l.b16 %v1171
    %v1204 = vunpack.c.l.b16 %v1172
    %v1205 = vunpack.c.l.b16 %v1173
    %v1206 = vpack.c.b16 %v1191, %v1190
    %v1207 = vpack.c.b16 %v1193, %v1192
    %v1208 = vpack.c.b16 %v1195, %v1194
    %v1209 = vpack.c.b16 %v1197, %v1196
    %v1210 = vpack.c.b16 %v1199, %v1198
    %v1211 = vpack.c.b16 %v1201, %v1200
    %v1212 = vpack.c.b16 %v1203, %v1202
    %v1213 = vpack.c.b16 %v1205, %v1204
    %1222 = vmatpush.bf16.msra.mxu0 %v1213
    %1223 = vmatpush.bf16.msra.mxu0 %v1212
    %1224 = vmatpush.bf16.msra.mxu0 %v1211
    %1225 = vmatpush.bf16.msra.mxu0 %v1210
    %1226 = vmatpush.bf16.msra.mxu0 %v1209
    %1227 = vmatpush.bf16.msra.mxu0 %v1208
    %1228 = vmatpush.bf16.msra.mxu0 %v1207
    %1229 = vmatpush.bf16.msra.mxu0 %v1206
    %1230 = vmatmul.bf16.gmra.mxu0 %v1157
    %v1231 = vpop.f32.mrf.mxu0
    %v1232 = vadd.f32 0.0, %v1231
    %v1233 = vpop.f32.mrf.mxu0
    %1234 = vdwg.mxu0
    %v1235 = vadd.f32 %v1154, %v1232
    %v1236 = vld [vmem:[#allocation3 + $0x8] sm:$0xff]
    %v1237 = vpack.c.bf16 %v1236, %v1236
    %1238 = vmatpush.bf16.msra.mxu0 %v1213
    %1239 = vmatpush.bf16.msra.mxu0 %v1212
    %1240 = vmatpush.bf16.msra.mxu0 %v1211
    %1241 = vmatpush.bf16.msra.mxu0 %v1210
    %1242 = vmatpush.bf16.msra.mxu0 %v1209
    %1243 = vmatpush.bf16.msra.mxu0 %v1208
    %1244 = vmatpush.bf16.msra.mxu0 %v1207
    %1245 = vmatpush.bf16.msra.mxu0 %v1206
    %1246 = vmatmul.bf16.gmra.mxu0 %v1237
    %v1247 = vpop.f32.mrf.mxu0
    %v1248 = vadd.f32 0.0, %v1247
    %v1249 = vpop.f32.mrf.mxu0
    %1250 = vdwg.mxu0
    %v1251 = vadd.f32 %v1155, %v1248
    %v1252 = vtanh.pop %v1235
    %v1253 = vtanh.pop %v1251
    %1254 = vst [vmem:[#allocation3] sm:$0xff] %v1252
    %1255 = vst [vmem:[#allocation3 + $0x8] sm:$0xff] %v1253
    %v1256 = vld [vmem:[%s376] sm:$0xff]
    %v1257 = vpack.c.bf16 %v1256, %v1256
    %v1258 = vpack.c.bf16 %v1252, %v1252
    %v1259 = vld [vmem:[#allocation9] sm:$0xf]
    %v1260 = vld [vmem:[#allocation9 + $0x4] sm:$0xf]
    %v1261 = vld [vmem:[#allocation9 + $0x8] sm:$0xf]
    %v1262 = vld [vmem:[#allocation9 + $0xc] sm:$0xf]
    %v1263 = vld [vmem:[#allocation9 + $0x10] sm:$0xf]
    %v1264 = vld [vmem:[#allocation9 + $0x14] sm:$0xf]
    %v1265 = vld [vmem:[#allocation9 + $0x18] sm:$0xf]
    %v1266 = vld [vmem:[#allocation9 + $0x1c] sm:$0xf]
    %v1267 = vld [vmem:[#allocation9 + $0x20] sm:$0xf]
    %v1268 = vld [vmem:[#allocation9 + $0x24] sm:$0xf]
    %v1269 = vld [vmem:[#allocation9 + $0x28] sm:$0xf]
    %v1270 = vld [vmem:[#allocation9 + $0x2c] sm:$0xf]
    %v1271 = vld [vmem:[#allocation9 + $0x30] sm:$0xf]
    %v1272 = vld [vmem:[#allocation9 + $0x34] sm:$0xf]
    %v1273 = vld [vmem:[#allocation9 + $0x38] sm:$0xf]
    %v1274 = vld [vmem:[#allocation9 + $0x3c] sm:$0xf]
    %v1275 = vld [vmem:[#allocation9 + $0x40] sm:$0xf]
    %v1276 = vld [vmem:[#allocation9 + $0x44] sm:$0xf]
    %v1277 = vld [vmem:[#allocation9 + $0x48] sm:$0xf]
    %v1278 = vld [vmem:[#allocation9 + $0x4c] sm:$0xf]
    %v1279 = vld [vmem:[#allocation9 + $0x50] sm:$0xf]
    %v1280 = vld [vmem:[#allocation9 + $0x54] sm:$0xf]
    %v1281 = vld [vmem:[#allocation9 + $0x58] sm:$0xf]
    %v1282 = vld [vmem:[#allocation9 + $0x5c] sm:$0xf]
    %v1283 = vld [vmem:[#allocation9 + $0x60] sm:$0xf]
    %v1284 = vld [vmem:[#allocation9 + $0x64] sm:$0xf]
    %v1285 = vld [vmem:[#allocation9 + $0x68] sm:$0xf]
    %v1286 = vld [vmem:[#allocation9 + $0x6c] sm:$0xf]
    %v1287 = vld [vmem:[#allocation9 + $0x70] sm:$0xf]
    %v1288 = vld [vmem:[#allocation9 + $0x74] sm:$0xf]
    %v1289 = vld [vmem:[#allocation9 + $0x78] sm:$0xf]
    %v1290 = vld [vmem:[#allocation9 + $0x7c] sm:$0xf]
    %v1323 = vunpack.c.l.b16 %v1259
    %v1324 = vunpack.c.l.b16 %v1260
    %v1325 = vunpack.c.l.b16 %v1261
    %v1326 = vunpack.c.l.b16 %v1262
    %v1327 = vunpack.c.l.b16 %v1263
    %v1328 = vunpack.c.l.b16 %v1264
    %v1329 = vunpack.c.l.b16 %v1265
    %v1330 = vunpack.c.l.b16 %v1266
    %v1331 = vunpack.c.l.b16 %v1267
    %v1332 = vunpack.c.l.b16 %v1268
    %v1333 = vunpack.c.l.b16 %v1269
    %v1334 = vunpack.c.l.b16 %v1270
    %v1335 = vunpack.c.l.b16 %v1271
    %v1336 = vunpack.c.l.b16 %v1272
    %v1337 = vunpack.c.l.b16 %v1273
    %v1338 = vunpack.c.l.b16 %v1274
    %v1339 = vunpack.c.l.b16 %v1275
    %v1340 = vunpack.c.l.b16 %v1276
    %v1341 = vunpack.c.l.b16 %v1277
    %v1342 = vunpack.c.l.b16 %v1278
    %v1343 = vunpack.c.l.b16 %v1279
    %v1344 = vunpack.c.l.b16 %v1280
    %v1345 = vunpack.c.l.b16 %v1281
    %v1346 = vunpack.c.l.b16 %v1282
    %v1347 = vunpack.c.l.b16 %v1283
    %v1348 = vunpack.c.l.b16 %v1284
    %v1349 = vunpack.c.l.b16 %v1285
    %v1350 = vunpack.c.l.b16 %v1286
    %v1351 = vunpack.c.l.b16 %v1287
    %v1352 = vunpack.c.l.b16 %v1288
    %v1353 = vunpack.c.l.b16 %v1289
    %v1354 = vunpack.c.l.b16 %v1290
    %v1355 = vpack.c.b16 %v1324, %v1323
    %v1356 = vpack.c.b16 %v1326, %v1325
    %v1357 = vpack.c.b16 %v1328, %v1327
    %v1358 = vpack.c.b16 %v1330, %v1329
    %v1359 = vpack.c.b16 %v1332, %v1331
    %v1360 = vpack.c.b16 %v1334, %v1333
    %v1361 = vpack.c.b16 %v1336, %v1335
    %v1362 = vpack.c.b16 %v1338, %v1337
    %v1363 = vpack.c.b16 %v1340, %v1339
    %v1364 = vpack.c.b16 %v1342, %v1341
    %v1365 = vpack.c.b16 %v1344, %v1343
    %v1366 = vpack.c.b16 %v1346, %v1345
    %v1367 = vpack.c.b16 %v1348, %v1347
    %v1368 = vpack.c.b16 %v1350, %v1349
    %v1369 = vpack.c.b16 %v1352, %v1351
    %v1370 = vpack.c.b16 %v1354, %v1353
    %1387 = vmatpush.bf16.msra.mxu0 %v1362
    %1388 = vmatpush.bf16.msra.mxu0 %v1361
    %1389 = vmatpush.bf16.msra.mxu0 %v1360
    %1390 = vmatpush.bf16.msra.mxu0 %v1359
    %1391 = vmatpush.bf16.msra.mxu0 %v1358
    %1392 = vmatpush.bf16.msra.mxu0 %v1357
    %1393 = vmatpush.bf16.msra.mxu0 %v1356
    %1394 = vmatpush.bf16.msra.mxu0 %v1355
    %1395 = vmatmul.bf16.gmra.mxu0 %v1258
    %v1396 = vpop.f32.mrf.mxu0
    %v1397 = vadd.f32 %v413, %v1396
    %v1398 = vpop.f32.mrf.mxu0
    %1399 = vdwg.mxu0
    %1400 = vmatpush.bf16.msra.mxu0 %v1370
    %1401 = vmatpush.bf16.msra.mxu0 %v1369
    %1402 = vmatpush.bf16.msra.mxu0 %v1368
    %1403 = vmatpush.bf16.msra.mxu0 %v1367
    %1404 = vmatpush.bf16.msra.mxu0 %v1366
    %1405 = vmatpush.bf16.msra.mxu0 %v1365
    %1406 = vmatpush.bf16.msra.mxu0 %v1364
    %1407 = vmatpush.bf16.msra.mxu0 %v1363
    %1408 = vmatmul.bf16.gmra.mxu0 %v1257
    %v1409 = vpop.f32.mrf.mxu0
    %v1410 = vadd.f32 %v1397, %v1409
    %v1411 = vpop.f32.mrf.mxu0
    %1412 = vdwg.mxu0
    %v1413 = vld [vmem:[%s376 + $0x8] sm:$0xff]
    %v1414 = vpack.c.bf16 %v1413, %v1413
    %v1415 = vpack.c.bf16 %v1253, %v1253
    %1416 = vmatpush.bf16.msra.mxu0 %v1362
    %1417 = vmatpush.bf16.msra.mxu0 %v1361
    %1418 = vmatpush.bf16.msra.mxu0 %v1360
    %1419 = vmatpush.bf16.msra.mxu0 %v1359
    %1420 = vmatpush.bf16.msra.mxu0 %v1358
    %1421 = vmatpush.bf16.msra.mxu0 %v1357
    %1422 = vmatpush.bf16.msra.mxu0 %v1356
    %1423 = vmatpush.bf16.msra.mxu0 %v1355
    %1424 = vmatmul.bf16.gmra.mxu0 %v1415
    %v1425 = vpop.f32.mrf.mxu0
    %v1426 = vadd.f32 %v413, %v1425
    %v1427 = vpop.f32.mrf.mxu0
    %1428 = vdwg.mxu0
    %1429 = vmatpush.bf16.msra.mxu0 %v1370
    %1430 = vmatpush.bf16.msra.mxu0 %v1369
    %1431 = vmatpush.bf16.msra.mxu0 %v1368
    %1432 = vmatpush.bf16.msra.mxu0 %v1367
    %1433 = vmatpush.bf16.msra.mxu0 %v1366
    %1434 = vmatpush.bf16.msra.mxu0 %v1365
    %1435 = vmatpush.bf16.msra.mxu0 %v1364
    %1436 = vmatpush.bf16.msra.mxu0 %v1363
    %1437 = vmatmul.bf16.gmra.mxu0 %v1414
    %v1438 = vpop.f32.mrf.mxu0
    %v1439 = vadd.f32 %v1426, %v1438
    %v1440 = vpop.f32.mrf.mxu0
    %1441 = vdwg.mxu0
    %v1442 = vtanh.pop %v1410
    %v1443 = vtanh.pop %v1439
    %1444 = vst [vmem:[%s376] sm:$0xff] %v1442
    %1445 = vst [vmem:[%s376 + $0x8] sm:$0xff] %v1443
    %v1446 = vld [vmem:[#allocation2 + $0x40] sm:$0xff]
    %v1447 = vld [vmem:[#allocation2 + $0x48] sm:$0xff]
    %v1448 = vld [vmem:[#allocation3] sm:$0xff]
    %v1449 = vpack.c.bf16 %v1448, %v1448
    %v1450 = vld [vmem:[#allocation10] sm:$0xf]
    %v1451 = vld [vmem:[#allocation10 + $0x4] sm:$0xf]
    %v1452 = vld [vmem:[#allocation10 + $0x8] sm:$0xf]
    %v1453 = vld [vmem:[#allocation10 + $0xc] sm:$0xf]
    %v1454 = vld [vmem:[#allocation10 + $0x10] sm:$0xf]
    %v1455 = vld [vmem:[#allocation10 + $0x14] sm:$0xf]
    %v1456 = vld [vmem:[#allocation10 + $0x18] sm:$0xf]
    %v1457 = vld [vmem:[#allocation10 + $0x1c] sm:$0xf]
    %v1458 = vld [vmem:[#allocation10 + $0x20] sm:$0xf]
    %v1459 = vld [vmem:[#allocation10 + $0x24] sm:$0xf]
    %v1460 = vld [vmem:[#allocation10 + $0x28] sm:$0xf]
    %v1461 = vld [vmem:[#allocation10 + $0x2c] sm:$0xf]
    %v1462 = vld [vmem:[#allocation10 + $0x30] sm:$0xf]
    %v1463 = vld [vmem:[#allocation10 + $0x34] sm:$0xf]
    %v1464 = vld [vmem:[#allocation10 + $0x38] sm:$0xf]
    %v1465 = vld [vmem:[#allocation10 + $0x3c] sm:$0xf]
    %v1482 = vunpack.c.l.b16 %v1450
    %v1483 = vunpack.c.l.b16 %v1451
    %v1484 = vunpack.c.l.b16 %v1452
    %v1485 = vunpack.c.l.b16 %v1453
    %v1486 = vunpack.c.l.b16 %v1454
    %v1487 = vunpack.c.l.b16 %v1455
    %v1488 = vunpack.c.l.b16 %v1456
    %v1489 = vunpack.c.l.b16 %v1457
    %v1490 = vunpack.c.l.b16 %v1458
    %v1491 = vunpack.c.l.b16 %v1459
    %v1492 = vunpack.c.l.b16 %v1460
    %v1493 = vunpack.c.l.b16 %v1461
    %v1494 = vunpack.c.l.b16 %v1462
    %v1495 = vunpack.c.l.b16 %v1463
    %v1496 = vunpack.c.l.b16 %v1464
    %v1497 = vunpack.c.l.b16 %v1465
    %v1498 = vpack.c.b16 %v1483, %v1482
    %v1499 = vpack.c.b16 %v1485, %v1484
    %v1500 = vpack.c.b16 %v1487, %v1486
    %v1501 = vpack.c.b16 %v1489, %v1488
    %v1502 = vpack.c.b16 %v1491, %v1490
    %v1503 = vpack.c.b16 %v1493, %v1492
    %v1504 = vpack.c.b16 %v1495, %v1494
    %v1505 = vpack.c.b16 %v1497, %v1496
    %1514 = vmatpush.bf16.msra.mxu0 %v1505
    %1515 = vmatpush.bf16.msra.mxu0 %v1504
    %1516 = vmatpush.bf16.msra.mxu0 %v1503
    %1517 = vmatpush.bf16.msra.mxu0 %v1502
    %1518 = vmatpush.bf16.msra.mxu0 %v1501
    %1519 = vmatpush.bf16.msra.mxu0 %v1500
    %1520 = vmatpush.bf16.msra.mxu0 %v1499
    %1521 = vmatpush.bf16.msra.mxu0 %v1498
    %1522 = vmatmul.bf16.gmra.mxu0 %v1449
    %v1523 = vpop.f32.mrf.mxu0
    %v1524 = vadd.f32 0.0, %v1523
    %v1525 = vpop.f32.mrf.mxu0
    %1526 = vdwg.mxu0
    %v1527 = vadd.f32 %v1446, %v1524
    %v1528 = vld [vmem:[#allocation3 + $0x8] sm:$0xff]
    %v1529 = vpack.c.bf16 %v1528, %v1528
    %1530 = vmatpush.bf16.msra.mxu0 %v1505
    %1531 = vmatpush.bf16.msra.mxu0 %v1504
    %1532 = vmatpush.bf16.msra.mxu0 %v1503
    %1533 = vmatpush.bf16.msra.mxu0 %v1502
    %1534 = vmatpush.bf16.msra.mxu0 %v1501
    %1535 = vmatpush.bf16.msra.mxu0 %v1500
    %1536 = vmatpush.bf16.msra.mxu0 %v1499
    %1537 = vmatpush.bf16.msra.mxu0 %v1498
    %1538 = vmatmul.bf16.gmra.mxu0 %v1529
    %v1539 = vpop.f32.mrf.mxu0
    %v1540 = vadd.f32 0.0, %v1539
    %v1541 = vpop.f32.mrf.mxu0
    %1542 = vdwg.mxu0
    %v1543 = vadd.f32 %v1447, %v1540
    %v1544 = vtanh.pop %v1527
    %v1545 = vtanh.pop %v1543
    %1546 = vst [vmem:[#allocation3] sm:$0xff] %v1544
    %1547 = vst [vmem:[#allocation3 + $0x8] sm:$0xff] %v1545
    %v1548 = vld [vmem:[%s376] sm:$0xff]
    %v1549 = vpack.c.bf16 %v1548, %v1548
    %v1550 = vpack.c.bf16 %v1544, %v1544
    %v1551 = vld [vmem:[#allocation9] sm:$0xf]
    %v1552 = vld [vmem:[#allocation9 + $0x4] sm:$0xf]
    %v1553 = vld [vmem:[#allocation9 + $0x8] sm:$0xf]
    %v1554 = vld [vmem:[#allocation9 + $0xc] sm:$0xf]
    %v1555 = vld [vmem:[#allocation9 + $0x10] sm:$0xf]
    %v1556 = vld [vmem:[#allocation9 + $0x14] sm:$0xf]
    %v1557 = vld [vmem:[#allocation9 + $0x18] sm:$0xf]
    %v1558 = vld [vmem:[#allocation9 + $0x1c] sm:$0xf]
    %v1559 = vld [vmem:[#allocation9 + $0x20] sm:$0xf]
    %v1560 = vld [vmem:[#allocation9 + $0x24] sm:$0xf]
    %v1561 = vld [vmem:[#allocation9 + $0x28] sm:$0xf]
    %v1562 = vld [vmem:[#allocation9 + $0x2c] sm:$0xf]
    %v1563 = vld [vmem:[#allocation9 + $0x30] sm:$0xf]
    %v1564 = vld [vmem:[#allocation9 + $0x34] sm:$0xf]
    %v1565 = vld [vmem:[#allocation9 + $0x38] sm:$0xf]
    %v1566 = vld [vmem:[#allocation9 + $0x3c] sm:$0xf]
    %v1567 = vld [vmem:[#allocation9 + $0x40] sm:$0xf]
    %v1568 = vld [vmem:[#allocation9 + $0x44] sm:$0xf]
    %v1569 = vld [vmem:[#allocation9 + $0x48] sm:$0xf]
    %v1570 = vld [vmem:[#allocation9 + $0x4c] sm:$0xf]
    %v1571 = vld [vmem:[#allocation9 + $0x50] sm:$0xf]
    %v1572 = vld [vmem:[#allocation9 + $0x54] sm:$0xf]
    %v1573 = vld [vmem:[#allocation9 + $0x58] sm:$0xf]
    %v1574 = vld [vmem:[#allocation9 + $0x5c] sm:$0xf]
    %v1575 = vld [vmem:[#allocation9 + $0x60] sm:$0xf]
    %v1576 = vld [vmem:[#allocation9 + $0x64] sm:$0xf]
    %v1577 = vld [vmem:[#allocation9 + $0x68] sm:$0xf]
    %v1578 = vld [vmem:[#allocation9 + $0x6c] sm:$0xf]
    %v1579 = vld [vmem:[#allocation9 + $0x70] sm:$0xf]
    %v1580 = vld [vmem:[#allocation9 + $0x74] sm:$0xf]
    %v1581 = vld [vmem:[#allocation9 + $0x78] sm:$0xf]
    %v1582 = vld [vmem:[#allocation9 + $0x7c] sm:$0xf]
    %v1615 = vunpack.c.l.b16 %v1551
    %v1616 = vunpack.c.l.b16 %v1552
    %v1617 = vunpack.c.l.b16 %v1553
    %v1618 = vunpack.c.l.b16 %v1554
    %v1619 = vunpack.c.l.b16 %v1555
    %v1620 = vunpack.c.l.b16 %v1556
    %v1621 = vunpack.c.l.b16 %v1557
    %v1622 = vunpack.c.l.b16 %v1558
    %v1623 = vunpack.c.l.b16 %v1559
    %v1624 = vunpack.c.l.b16 %v1560
    %v1625 = vunpack.c.l.b16 %v1561
    %v1626 = vunpack.c.l.b16 %v1562
    %v1627 = vunpack.c.l.b16 %v1563
    %v1628 = vunpack.c.l.b16 %v1564
    %v1629 = vunpack.c.l.b16 %v1565
    %v1630 = vunpack.c.l.b16 %v1566
    %v1631 = vunpack.c.l.b16 %v1567
    %v1632 = vunpack.c.l.b16 %v1568
    %v1633 = vunpack.c.l.b16 %v1569
    %v1634 = vunpack.c.l.b16 %v1570
    %v1635 = vunpack.c.l.b16 %v1571
    %v1636 = vunpack.c.l.b16 %v1572
    %v1637 = vunpack.c.l.b16 %v1573
    %v1638 = vunpack.c.l.b16 %v1574
    %v1639 = vunpack.c.l.b16 %v1575
    %v1640 = vunpack.c.l.b16 %v1576
    %v1641 = vunpack.c.l.b16 %v1577
    %v1642 = vunpack.c.l.b16 %v1578
    %v1643 = vunpack.c.l.b16 %v1579
    %v1644 = vunpack.c.l.b16 %v1580
    %v1645 = vunpack.c.l.b16 %v1581
    %v1646 = vunpack.c.l.b16 %v1582
    %v1647 = vpack.c.b16 %v1616, %v1615
    %v1648 = vpack.c.b16 %v1618, %v1617
    %v1649 = vpack.c.b16 %v1620, %v1619
    %v1650 = vpack.c.b16 %v1622, %v1621
    %v1651 = vpack.c.b16 %v1624, %v1623
    %v1652 = vpack.c.b16 %v1626, %v1625
    %v1653 = vpack.c.b16 %v1628, %v1627
    %v1654 = vpack.c.b16 %v1630, %v1629
    %v1655 = vpack.c.b16 %v1632, %v1631
    %v1656 = vpack.c.b16 %v1634, %v1633
    %v1657 = vpack.c.b16 %v1636, %v1635
    %v1658 = vpack.c.b16 %v1638, %v1637
    %v1659 = vpack.c.b16 %v1640, %v1639
    %v1660 = vpack.c.b16 %v1642, %v1641
    %v1661 = vpack.c.b16 %v1644, %v1643
    %v1662 = vpack.c.b16 %v1646, %v1645
    %1679 = vmatpush.bf16.msra.mxu0 %v1654
    %1680 = vmatpush.bf16.msra.mxu0 %v1653
    %1681 = vmatpush.bf16.msra.mxu0 %v1652
    %1682 = vmatpush.bf16.msra.mxu0 %v1651
    %1683 = vmatpush.bf16.msra.mxu0 %v1650
    %1684 = vmatpush.bf16.msra.mxu0 %v1649
    %1685 = vmatpush.bf16.msra.mxu0 %v1648
    %1686 = vmatpush.bf16.msra.mxu0 %v1647
    %1687 = vmatmul.bf16.gmra.mxu0 %v1550
    %v1688 = vpop.f32.mrf.mxu0
    %v1689 = vadd.f32 %v413, %v1688
    %v1690 = vpop.f32.mrf.mxu0
    %1691 = vdwg.mxu0
    %1692 = vmatpush.bf16.msra.mxu0 %v1662
    %1693 = vmatpush.bf16.msra.mxu0 %v1661
    %1694 = vmatpush.bf16.msra.mxu0 %v1660
    %1695 = vmatpush.bf16.msra.mxu0 %v1659
    %1696 = vmatpush.bf16.msra.mxu0 %v1658
    %1697 = vmatpush.bf16.msra.mxu0 %v1657
    %1698 = vmatpush.bf16.msra.mxu0 %v1656
    %1699 = vmatpush.bf16.msra.mxu0 %v1655
    %1700 = vmatmul.bf16.gmra.mxu0 %v1549
    %v1701 = vpop.f32.mrf.mxu0
    %v1702 = vadd.f32 %v1689, %v1701
    %v1703 = vpop.f32.mrf.mxu0
    %1704 = vdwg.mxu0
    %v1705 = vld [vmem:[%s376 + $0x8] sm:$0xff]
    %v1706 = vpack.c.bf16 %v1705, %v1705
    %v1707 = vpack.c.bf16 %v1545, %v1545
    %1708 = vmatpush.bf16.msra.mxu0 %v1654
    %1709 = vmatpush.bf16.msra.mxu0 %v1653
    %1710 = vmatpush.bf16.msra.mxu0 %v1652
    %1711 = vmatpush.bf16.msra.mxu0 %v1651
    %1712 = vmatpush.bf16.msra.mxu0 %v1650
    %1713 = vmatpush.bf16.msra.mxu0 %v1649
    %1714 = vmatpush.bf16.msra.mxu0 %v1648
    %1715 = vmatpush.bf16.msra.mxu0 %v1647
    %1716 = vmatmul.bf16.gmra.mxu0 %v1707
    %v1717 = vpop.f32.mrf.mxu0
    %v1718 = vadd.f32 %v413, %v1717
    %v1719 = vpop.f32.mrf.mxu0
    %1720 = vdwg.mxu0
    %1721 = vmatpush.bf16.msra.mxu0 %v1662
    %1722 = vmatpush.bf16.msra.mxu0 %v1661
    %1723 = vmatpush.bf16.msra.mxu0 %v1660
    %1724 = vmatpush.bf16.msra.mxu0 %v1659
    %1725 = vmatpush.bf16.msra.mxu0 %v1658
    %1726 = vmatpush.bf16.msra.mxu0 %v1657
    %1727 = vmatpush.bf16.msra.mxu0 %v1656
    %1728 = vmatpush.bf16.msra.mxu0 %v1655
    %1729 = vmatmul.bf16.gmra.mxu0 %v1706
    %v1730 = vpop.f32.mrf.mxu0
    %v1731 = vadd.f32 %v1718, %v1730
    %v1732 = vpop.f32.mrf.mxu0
    %1733 = vdwg.mxu0
    %v1734 = vtanh.pop %v1702
    %v1735 = vtanh.pop %v1731
    %1736 = vst [vmem:[%s376] sm:$0xff] %v1734
    %1737 = vst [vmem:[%s376 + $0x8] sm:$0xff] %v1735
    %v1738 = vld [vmem:[#allocation2 + $0x50] sm:$0xff]
    %v1739 = vld [vmem:[#allocation2 + $0x58] sm:$0xff]
    %v1740 = vld [vmem:[#allocation3] sm:$0xff]
    %v1741 = vpack.c.bf16 %v1740, %v1740
    %v1742 = vld [vmem:[#allocation10] sm:$0xf]
    %v1743 = vld [vmem:[#allocation10 + $0x4] sm:$0xf]
    %v1744 = vld [vmem:[#allocation10 + $0x8] sm:$0xf]
    %v1745 = vld [vmem:[#allocation10 + $0xc] sm:$0xf]
    %v1746 = vld [vmem:[#allocation10 + $0x10] sm:$0xf]
    %v1747 = vld [vmem:[#allocation10 + $0x14] sm:$0xf]
    %v1748 = vld [vmem:[#allocation10 + $0x18] sm:$0xf]
    %v1749 = vld [vmem:[#allocation10 + $0x1c] sm:$0xf]
    %v1750 = vld [vmem:[#allocation10 + $0x20] sm:$0xf]
    %v1751 = vld [vmem:[#allocation10 + $0x24] sm:$0xf]
    %v1752 = vld [vmem:[#allocation10 + $0x28] sm:$0xf]
    %v1753 = vld [vmem:[#allocation10 + $0x2c] sm:$0xf]
    %v1754 = vld [vmem:[#allocation10 + $0x30] sm:$0xf]
    %v1755 = vld [vmem:[#allocation10 + $0x34] sm:$0xf]
    %v1756 = vld [vmem:[#allocation10 + $0x38] sm:$0xf]
    %v1757 = vld [vmem:[#allocation10 + $0x3c] sm:$0xf]
    %v1774 = vunpack.c.l.b16 %v1742
    %v1775 = vunpack.c.l.b16 %v1743
    %v1776 = vunpack.c.l.b16 %v1744
    %v1777 = vunpack.c.l.b16 %v1745
    %v1778 = vunpack.c.l.b16 %v1746
    %v1779 = vunpack.c.l.b16 %v1747
    %v1780 = vunpack.c.l.b16 %v1748
    %v1781 = vunpack.c.l.b16 %v1749
    %v1782 = vunpack.c.l.b16 %v1750
    %v1783 = vunpack.c.l.b16 %v1751
    %v1784 = vunpack.c.l.b16 %v1752
    %v1785 = vunpack.c.l.b16 %v1753
    %v1786 = vunpack.c.l.b16 %v1754
    %v1787 = vunpack.c.l.b16 %v1755
    %v1788 = vunpack.c.l.b16 %v1756
    %v1789 = vunpack.c.l.b16 %v1757
    %v1790 = vpack.c.b16 %v1775, %v1774
    %v1791 = vpack.c.b16 %v1777, %v1776
    %v1792 = vpack.c.b16 %v1779, %v1778
    %v1793 = vpack.c.b16 %v1781, %v1780
    %v1794 = vpack.c.b16 %v1783, %v1782
    %v1795 = vpack.c.b16 %v1785, %v1784
    %v1796 = vpack.c.b16 %v1787, %v1786
    %v1797 = vpack.c.b16 %v1789, %v1788
    %1806 = vmatpush.bf16.msra.mxu0 %v1797
    %1807 = vmatpush.bf16.msra.mxu0 %v1796
    %1808 = vmatpush.bf16.msra.mxu0 %v1795
    %1809 = vmatpush.bf16.msra.mxu0 %v1794
    %1810 = vmatpush.bf16.msra.mxu0 %v1793
    %1811 = vmatpush.bf16.msra.mxu0 %v1792
    %1812 = vmatpush.bf16.msra.mxu0 %v1791
    %1813 = vmatpush.bf16.msra.mxu0 %v1790
    %1814 = vmatmul.bf16.gmra.mxu0 %v1741
    %v1815 = vpop.f32.mrf.mxu0
    %v1816 = vadd.f32 0.0, %v1815
    %v1817 = vpop.f32.mrf.mxu0
    %1818 = vdwg.mxu0
    %v1819 = vadd.f32 %v1738, %v1816
    %v1820 = vld [vmem:[#allocation3 + $0x8] sm:$0xff]
    %v1821 = vpack.c.bf16 %v1820, %v1820
    %1822 = vmatpush.bf16.msra.mxu0 %v1797
    %1823 = vmatpush.bf16.msra.mxu0 %v1796
    %1824 = vmatpush.bf16.msra.mxu0 %v1795
    %1825 = vmatpush.bf16.msra.mxu0 %v1794
    %1826 = vmatpush.bf16.msra.mxu0 %v1793
    %1827 = vmatpush.bf16.msra.mxu0 %v1792
    %1828 = vmatpush.bf16.msra.mxu0 %v1791
    %1829 = vmatpush.bf16.msra.mxu0 %v1790
    %1830 = vmatmul.bf16.gmra.mxu0 %v1821
    %v1831 = vpop.f32.mrf.mxu0
    %v1832 = vadd.f32 0.0, %v1831
    %v1833 = vpop.f32.mrf.mxu0
    %1834 = vdwg.mxu0
    %v1835 = vadd.f32 %v1739, %v1832
    %v1836 = vtanh.pop %v1819
    %v1837 = vtanh.pop %v1835
    %1838 = vst [vmem:[#allocation3] sm:$0xff] %v1836
    %1839 = vst [vmem:[#allocation3 + $0x8] sm:$0xff] %v1837
    %v1840 = vld [vmem:[%s376] sm:$0xff]
    %v1841 = vpack.c.bf16 %v1840, %v1840
    %v1842 = vpack.c.bf16 %v1836, %v1836
    %v1843 = vld [vmem:[#allocation9] sm:$0xf]
    %v1844 = vld [vmem:[#allocation9 + $0x4] sm:$0xf]
    %v1845 = vld [vmem:[#allocation9 + $0x8] sm:$0xf]
    %v1846 = vld [vmem:[#allocation9 + $0xc] sm:$0xf]
    %v1847 = vld [vmem:[#allocation9 + $0x10] sm:$0xf]
    %v1848 = vld [vmem:[#allocation9 + $0x14] sm:$0xf]
    %v1849 = vld [vmem:[#allocation9 + $0x18] sm:$0xf]
    %v1850 = vld [vmem:[#allocation9 + $0x1c] sm:$0xf]
    %v1851 = vld [vmem:[#allocation9 + $0x20] sm:$0xf]
    %v1852 = vld [vmem:[#allocation9 + $0x24] sm:$0xf]
    %v1853 = vld [vmem:[#allocation9 + $0x28] sm:$0xf]
    %v1854 = vld [vmem:[#allocation9 + $0x2c] sm:$0xf]
    %v1855 = vld [vmem:[#allocation9 + $0x30] sm:$0xf]
    %v1856 = vld [vmem:[#allocation9 + $0x34] sm:$0xf]
    %v1857 = vld [vmem:[#allocation9 + $0x38] sm:$0xf]
    %v1858 = vld [vmem:[#allocation9 + $0x3c] sm:$0xf]
    %v1859 = vld [vmem:[#allocation9 + $0x40] sm:$0xf]
    %v1860 = vld [vmem:[#allocation9 + $0x44] sm:$0xf]
    %v1861 = vld [vmem:[#allocation9 + $0x48] sm:$0xf]
    %v1862 = vld [vmem:[#allocation9 + $0x4c] sm:$0xf]
    %v1863 = vld [vmem:[#allocation9 + $0x50] sm:$0xf]
    %v1864 = vld [vmem:[#allocation9 + $0x54] sm:$0xf]
    %v1865 = vld [vmem:[#allocation9 + $0x58] sm:$0xf]
    %v1866 = vld [vmem:[#allocation9 + $0x5c] sm:$0xf]
    %v1867 = vld [vmem:[#allocation9 + $0x60] sm:$0xf]
    %v1868 = vld [vmem:[#allocation9 + $0x64] sm:$0xf]
    %v1869 = vld [vmem:[#allocation9 + $0x68] sm:$0xf]
    %v1870 = vld [vmem:[#allocation9 + $0x6c] sm:$0xf]
    %v1871 = vld [vmem:[#allocation9 + $0x70] sm:$0xf]
    %v1872 = vld [vmem:[#allocation9 + $0x74] sm:$0xf]
    %v1873 = vld [vmem:[#allocation9 + $0x78] sm:$0xf]
    %v1874 = vld [vmem:[#allocation9 + $0x7c] sm:$0xf]
    %v1907 = vunpack.c.l.b16 %v1843
    %v1908 = vunpack.c.l.b16 %v1844
    %v1909 = vunpack.c.l.b16 %v1845
    %v1910 = vunpack.c.l.b16 %v1846
    %v1911 = vunpack.c.l.b16 %v1847
    %v1912 = vunpack.c.l.b16 %v1848
    %v1913 = vunpack.c.l.b16 %v1849
    %v1914 = vunpack.c.l.b16 %v1850
    %v1915 = vunpack.c.l.b16 %v1851
    %v1916 = vunpack.c.l.b16 %v1852
    %v1917 = vunpack.c.l.b16 %v1853
    %v1918 = vunpack.c.l.b16 %v1854
    %v1919 = vunpack.c.l.b16 %v1855
    %v1920 = vunpack.c.l.b16 %v1856
    %v1921 = vunpack.c.l.b16 %v1857
    %v1922 = vunpack.c.l.b16 %v1858
    %v1923 = vunpack.c.l.b16 %v1859
    %v1924 = vunpack.c.l.b16 %v1860
    %v1925 = vunpack.c.l.b16 %v1861
    %v1926 = vunpack.c.l.b16 %v1862
    %v1927 = vunpack.c.l.b16 %v1863
    %v1928 = vunpack.c.l.b16 %v1864
    %v1929 = vunpack.c.l.b16 %v1865
    %v1930 = vunpack.c.l.b16 %v1866
    %v1931 = vunpack.c.l.b16 %v1867
    %v1932 = vunpack.c.l.b16 %v1868
    %v1933 = vunpack.c.l.b16 %v1869
    %v1934 = vunpack.c.l.b16 %v1870
    %v1935 = vunpack.c.l.b16 %v1871
    %v1936 = vunpack.c.l.b16 %v1872
    %v1937 = vunpack.c.l.b16 %v1873
    %v1938 = vunpack.c.l.b16 %v1874
    %v1939 = vpack.c.b16 %v1908, %v1907
    %v1940 = vpack.c.b16 %v1910, %v1909
    %v1941 = vpack.c.b16 %v1912, %v1911
    %v1942 = vpack.c.b16 %v1914, %v1913
    %v1943 = vpack.c.b16 %v1916, %v1915
    %v1944 = vpack.c.b16 %v1918, %v1917
    %v1945 = vpack.c.b16 %v1920, %v1919
    %v1946 = vpack.c.b16 %v1922, %v1921
    %v1947 = vpack.c.b16 %v1924, %v1923
    %v1948 = vpack.c.b16 %v1926, %v1925
    %v1949 = vpack.c.b16 %v1928, %v1927
    %v1950 = vpack.c.b16 %v1930, %v1929
    %v1951 = vpack.c.b16 %v1932, %v1931
    %v1952 = vpack.c.b16 %v1934, %v1933
    %v1953 = vpack.c.b16 %v1936, %v1935
    %v1954 = vpack.c.b16 %v1938, %v1937
    %1971 = vmatpush.bf16.msra.mxu0 %v1946
    %1972 = vmatpush.bf16.msra.mxu0 %v1945
    %1973 = vmatpush.bf16.msra.mxu0 %v1944
    %1974 = vmatpush.bf16.msra.mxu0 %v1943
    %1975 = vmatpush.bf16.msra.mxu0 %v1942
    %1976 = vmatpush.bf16.msra.mxu0 %v1941
    %1977 = vmatpush.bf16.msra.mxu0 %v1940
    %1978 = vmatpush.bf16.msra.mxu0 %v1939
    %1979 = vmatmul.bf16.gmra.mxu0 %v1842
    %v1980 = vpop.f32.mrf.mxu0
    %v1981 = vadd.f32 %v413, %v1980
    %v1982 = vpop.f32.mrf.mxu0
    %1983 = vdwg.mxu0
    %1984 = vmatpush.bf16.msra.mxu0 %v1954
    %1985 = vmatpush.bf16.msra.mxu0 %v1953
    %1986 = vmatpush.bf16.msra.mxu0 %v1952
    %1987 = vmatpush.bf16.msra.mxu0 %v1951
    %1988 = vmatpush.bf16.msra.mxu0 %v1950
    %1989 = vmatpush.bf16.msra.mxu0 %v1949
    %1990 = vmatpush.bf16.msra.mxu0 %v1948
    %1991 = vmatpush.bf16.msra.mxu0 %v1947
    %1992 = vmatmul.bf16.gmra.mxu0 %v1841
    %v1993 = vpop.f32.mrf.mxu0
    %v1994 = vadd.f32 %v1981, %v1993
    %v1995 = vpop.f32.mrf.mxu0
    %1996 = vdwg.mxu0
    %v1997 = vld [vmem:[%s376 + $0x8] sm:$0xff]
    %v1998 = vpack.c.bf16 %v1997, %v1997
    %v1999 = vpack.c.bf16 %v1837, %v1837
    %2000 = vmatpush.bf16.msra.mxu0 %v1946
    %2001 = vmatpush.bf16.msra.mxu0 %v1945
    %2002 = vmatpush.bf16.msra.mxu0 %v1944
    %2003 = vmatpush.bf16.msra.mxu0 %v1943
    %2004 = vmatpush.bf16.msra.mxu0 %v1942
    %2005 = vmatpush.bf16.msra.mxu0 %v1941
    %2006 = vmatpush.bf16.msra.mxu0 %v1940
    %2007 = vmatpush.bf16.msra.mxu0 %v1939
    %2008 = vmatmul.bf16.gmra.mxu0 %v1999
    %v2009 = vpop.f32.mrf.mxu0
    %v2010 = vadd.f32 %v413, %v2009
    %v2011 = vpop.f32.mrf.mxu0
    %2012 = vdwg.mxu0
    %2013 = vmatpush.bf16.msra.mxu0 %v1954
    %2014 = vmatpush.bf16.msra.mxu0 %v1953
    %2015 = vmatpush.bf16.msra.mxu0 %v1952
    %2016 = vmatpush.bf16.msra.mxu0 %v1951
    %2017 = vmatpush.bf16.msra.mxu0 %v1950
    %2018 = vmatpush.bf16.msra.mxu0 %v1949
    %2019 = vmatpush.bf16.msra.mxu0 %v1948
    %2020 = vmatpush.bf16.msra.mxu0 %v1947
    %2021 = vmatmul.bf16.gmra.mxu0 %v1998
    %v2022 = vpop.f32.mrf.mxu0
    %v2023 = vadd.f32 %v2010, %v2022
    %v2024 = vpop.f32.mrf.mxu0
    %2025 = vdwg.mxu0
    %v2026 = vtanh.pop %v1994
    %v2027 = vtanh.pop %v2023
    %2028 = vst [vmem:[%s376] sm:$0xff] %v2026
    %2029 = vst [vmem:[%s376 + $0x8] sm:$0xff] %v2027
    %v2030 = vld [vmem:[#allocation2 + $0x60] sm:$0xff]
    %v2031 = vld [vmem:[#allocation2 + $0x68] sm:$0xff]
    %v2032 = vld [vmem:[#allocation3] sm:$0xff]
    %v2033 = vpack.c.bf16 %v2032, %v2032
    %v2034 = vld [vmem:[#allocation10] sm:$0xf]
    %v2035 = vld [vmem:[#allocation10 + $0x4] sm:$0xf]
    %v2036 = vld [vmem:[#allocation10 + $0x8] sm:$0xf]
    %v2037 = vld [vmem:[#allocation10 + $0xc] sm:$0xf]
    %v2038 = vld [vmem:[#allocation10 + $0x10] sm:$0xf]
    %v2039 = vld [vmem:[#allocation10 + $0x14] sm:$0xf]
    %v2040 = vld [vmem:[#allocation10 + $0x18] sm:$0xf]
    %v2041 = vld [vmem:[#allocation10 + $0x1c] sm:$0xf]
    %v2042 = vld [vmem:[#allocation10 + $0x20] sm:$0xf]
    %v2043 = vld [vmem:[#allocation10 + $0x24] sm:$0xf]
    %v2044 = vld [vmem:[#allocation10 + $0x28] sm:$0xf]
    %v2045 = vld [vmem:[#allocation10 + $0x2c] sm:$0xf]
    %v2046 = vld [vmem:[#allocation10 + $0x30] sm:$0xf]
    %v2047 = vld [vmem:[#allocation10 + $0x34] sm:$0xf]
    %v2048 = vld [vmem:[#allocation10 + $0x38] sm:$0xf]
    %v2049 = vld [vmem:[#allocation10 + $0x3c] sm:$0xf]
    %v2066 = vunpack.c.l.b16 %v2034
    %v2067 = vunpack.c.l.b16 %v2035
    %v2068 = vunpack.c.l.b16 %v2036
    %v2069 = vunpack.c.l.b16 %v2037
    %v2070 = vunpack.c.l.b16 %v2038
    %v2071 = vunpack.c.l.b16 %v2039
    %v2072 = vunpack.c.l.b16 %v2040
    %v2073 = vunpack.c.l.b16 %v2041
    %v2074 = vunpack.c.l.b16 %v2042
    %v2075 = vunpack.c.l.b16 %v2043
    %v2076 = vunpack.c.l.b16 %v2044
    %v2077 = vunpack.c.l.b16 %v2045
    %v2078 = vunpack.c.l.b16 %v2046
    %v2079 = vunpack.c.l.b16 %v2047
    %v2080 = vunpack.c.l.b16 %v2048
    %v2081 = vunpack.c.l.b16 %v2049
    %v2082 = vpack.c.b16 %v2067, %v2066
    %v2083 = vpack.c.b16 %v2069, %v2068
    %v2084 = vpack.c.b16 %v2071, %v2070
    %v2085 = vpack.c.b16 %v2073, %v2072
    %v2086 = vpack.c.b16 %v2075, %v2074
    %v2087 = vpack.c.b16 %v2077, %v2076
    %v2088 = vpack.c.b16 %v2079, %v2078
    %v2089 = vpack.c.b16 %v2081, %v2080
    %2098 = vmatpush.bf16.msra.mxu0 %v2089
    %2099 = vmatpush.bf16.msra.mxu0 %v2088
    %2100 = vmatpush.bf16.msra.mxu0 %v2087
    %2101 = vmatpush.bf16.msra.mxu0 %v2086
    %2102 = vmatpush.bf16.msra.mxu0 %v2085
    %2103 = vmatpush.bf16.msra.mxu0 %v2084
    %2104 = vmatpush.bf16.msra.mxu0 %v2083
    %2105 = vmatpush.bf16.msra.mxu0 %v2082
    %2106 = vmatmul.bf16.gmra.mxu0 %v2033
    %v2107 = vpop.f32.mrf.mxu0
    %v2108 = vadd.f32 0.0, %v2107
    %v2109 = vpop.f32.mrf.mxu0
    %2110 = vdwg.mxu0
    %v2111 = vadd.f32 %v2030, %v2108
    %v2112 = vld [vmem:[#allocation3 + $0x8] sm:$0xff]
    %v2113 = vpack.c.bf16 %v2112, %v2112
    %2114 = vmatpush.bf16.msra.mxu0 %v2089
    %2115 = vmatpush.bf16.msra.mxu0 %v2088
    %2116 = vmatpush.bf16.msra.mxu0 %v2087
    %2117 = vmatpush.bf16.msra.mxu0 %v2086
    %2118 = vmatpush.bf16.msra.mxu0 %v2085
    %2119 = vmatpush.bf16.msra.mxu0 %v2084
    %2120 = vmatpush.bf16.msra.mxu0 %v2083
    %2121 = vmatpush.bf16.msra.mxu0 %v2082
    %2122 = vmatmul.bf16.gmra.mxu0 %v2113
    %v2123 = vpop.f32.mrf.mxu0
    %v2124 = vadd.f32 0.0, %v2123
    %v2125 = vpop.f32.mrf.mxu0
    %2126 = vdwg.mxu0
    %v2127 = vadd.f32 %v2031, %v2124
    %v2128 = vtanh.pop %v2111
    %v2129 = vtanh.pop %v2127
    %2130 = vst [vmem:[#allocation3] sm:$0xff] %v2128
    %2131 = vst [vmem:[#allocation3 + $0x8] sm:$0xff] %v2129
    %v2132 = vld [vmem:[%s376] sm:$0xff]
    %v2133 = vpack.c.bf16 %v2132, %v2132
    %v2134 = vpack.c.bf16 %v2128, %v2128
    %v2135 = vld [vmem:[#allocation9] sm:$0xf]
    %v2136 = vld [vmem:[#allocation9 + $0x4] sm:$0xf]
    %v2137 = vld [vmem:[#allocation9 + $0x8] sm:$0xf]
    %v2138 = vld [vmem:[#allocation9 + $0xc] sm:$0xf]
    %v2139 = vld [vmem:[#allocation9 + $0x10] sm:$0xf]
    %v2140 = vld [vmem:[#allocation9 + $0x14] sm:$0xf]
    %v2141 = vld [vmem:[#allocation9 + $0x18] sm:$0xf]
    %v2142 = vld [vmem:[#allocation9 + $0x1c] sm:$0xf]
    %v2143 = vld [vmem:[#allocation9 + $0x20] sm:$0xf]
    %v2144 = vld [vmem:[#allocation9 + $0x24] sm:$0xf]
    %v2145 = vld [vmem:[#allocation9 + $0x28] sm:$0xf]
    %v2146 = vld [vmem:[#allocation9 + $0x2c] sm:$0xf]
    %v2147 = vld [vmem:[#allocation9 + $0x30] sm:$0xf]
    %v2148 = vld [vmem:[#allocation9 + $0x34] sm:$0xf]
    %v2149 = vld [vmem:[#allocation9 + $0x38] sm:$0xf]
    %v2150 = vld [vmem:[#allocation9 + $0x3c] sm:$0xf]
    %v2151 = vld [vmem:[#allocation9 + $0x40] sm:$0xf]
    %v2152 = vld [vmem:[#allocation9 + $0x44] sm:$0xf]
    %v2153 = vld [vmem:[#allocation9 + $0x48] sm:$0xf]
    %v2154 = vld [vmem:[#allocation9 + $0x4c] sm:$0xf]
    %v2155 = vld [vmem:[#allocation9 + $0x50] sm:$0xf]
    %v2156 = vld [vmem:[#allocation9 + $0x54] sm:$0xf]
    %v2157 = vld [vmem:[#allocation9 + $0x58] sm:$0xf]
    %v2158 = vld [vmem:[#allocation9 + $0x5c] sm:$0xf]
    %v2159 = vld [vmem:[#allocation9 + $0x60] sm:$0xf]
    %v2160 = vld [vmem:[#allocation9 + $0x64] sm:$0xf]
    %v2161 = vld [vmem:[#allocation9 + $0x68] sm:$0xf]
    %v2162 = vld [vmem:[#allocation9 + $0x6c] sm:$0xf]
    %v2163 = vld [vmem:[#allocation9 + $0x70] sm:$0xf]
    %v2164 = vld [vmem:[#allocation9 + $0x74] sm:$0xf]
    %v2165 = vld [vmem:[#allocation9 + $0x78] sm:$0xf]
    %v2166 = vld [vmem:[#allocation9 + $0x7c] sm:$0xf]
    %v2199 = vunpack.c.l.b16 %v2135
    %v2200 = vunpack.c.l.b16 %v2136
    %v2201 = vunpack.c.l.b16 %v2137
    %v2202 = vunpack.c.l.b16 %v2138
    %v2203 = vunpack.c.l.b16 %v2139
    %v2204 = vunpack.c.l.b16 %v2140
    %v2205 = vunpack.c.l.b16 %v2141
    %v2206 = vunpack.c.l.b16 %v2142
    %v2207 = vunpack.c.l.b16 %v2143
    %v2208 = vunpack.c.l.b16 %v2144
    %v2209 = vunpack.c.l.b16 %v2145
    %v2210 = vunpack.c.l.b16 %v2146
    %v2211 = vunpack.c.l.b16 %v2147
    %v2212 = vunpack.c.l.b16 %v2148
    %v2213 = vunpack.c.l.b16 %v2149
    %v2214 = vunpack.c.l.b16 %v2150
    %v2215 = vunpack.c.l.b16 %v2151
    %v2216 = vunpack.c.l.b16 %v2152
    %v2217 = vunpack.c.l.b16 %v2153
    %v2218 = vunpack.c.l.b16 %v2154
    %v2219 = vunpack.c.l.b16 %v2155
    %v2220 = vunpack.c.l.b16 %v2156
    %v2221 = vunpack.c.l.b16 %v2157
    %v2222 = vunpack.c.l.b16 %v2158
    %v2223 = vunpack.c.l.b16 %v2159
    %v2224 = vunpack.c.l.b16 %v2160
    %v2225 = vunpack.c.l.b16 %v2161
    %v2226 = vunpack.c.l.b16 %v2162
    %v2227 = vunpack.c.l.b16 %v2163
    %v2228 = vunpack.c.l.b16 %v2164
    %v2229 = vunpack.c.l.b16 %v2165
    %v2230 = vunpack.c.l.b16 %v2166
    %v2231 = vpack.c.b16 %v2200, %v2199
    %v2232 = vpack.c.b16 %v2202, %v2201
    %v2233 = vpack.c.b16 %v2204, %v2203
    %v2234 = vpack.c.b16 %v2206, %v2205
    %v2235 = vpack.c.b16 %v2208, %v2207
    %v2236 = vpack.c.b16 %v2210, %v2209
    %v2237 = vpack.c.b16 %v2212, %v2211
    %v2238 = vpack.c.b16 %v2214, %v2213
    %v2239 = vpack.c.b16 %v2216, %v2215
    %v2240 = vpack.c.b16 %v2218, %v2217
    %v2241 = vpack.c.b16 %v2220, %v2219
    %v2242 = vpack.c.b16 %v2222, %v2221
    %v2243 = vpack.c.b16 %v2224, %v2223
    %v2244 = vpack.c.b16 %v2226, %v2225
    %v2245 = vpack.c.b16 %v2228, %v2227
    %v2246 = vpack.c.b16 %v2230, %v2229
    %2263 = vmatpush.bf16.msra.mxu0 %v2238
    %2264 = vmatpush.bf16.msra.mxu0 %v2237
    %2265 = vmatpush.bf16.msra.mxu0 %v2236
    %2266 = vmatpush.bf16.msra.mxu0 %v2235
    %2267 = vmatpush.bf16.msra.mxu0 %v2234
    %2268 = vmatpush.bf16.msra.mxu0 %v2233
    %2269 = vmatpush.bf16.msra.mxu0 %v2232
    %2270 = vmatpush.bf16.msra.mxu0 %v2231
    %2271 = vmatmul.bf16.gmra.mxu0 %v2134
    %v2272 = vpop.f32.mrf.mxu0
    %v2273 = vadd.f32 %v413, %v2272
    %v2274 = vpop.f32.mrf.mxu0
    %2275 = vdwg.mxu0
    %2276 = vmatpush.bf16.msra.mxu0 %v2246
    %2277 = vmatpush.bf16.msra.mxu0 %v2245
    %2278 = vmatpush.bf16.msra.mxu0 %v2244
    %2279 = vmatpush.bf16.msra.mxu0 %v2243
    %2280 = vmatpush.bf16.msra.mxu0 %v2242
    %2281 = vmatpush.bf16.msra.mxu0 %v2241
    %2282 = vmatpush.bf16.msra.mxu0 %v2240
    %2283 = vmatpush.bf16.msra.mxu0 %v2239
    %2284 = vmatmul.bf16.gmra.mxu0 %v2133
    %v2285 = vpop.f32.mrf.mxu0
    %v2286 = vadd.f32 %v2273, %v2285
    %v2287 = vpop.f32.mrf.mxu0
    %2288 = vdwg.mxu0
    %v2289 = vld [vmem:[%s376 + $0x8] sm:$0xff]
    %v2290 = vpack.c.bf16 %v2289, %v2289
    %v2291 = vpack.c.bf16 %v2129, %v2129
    %2292 = vmatpush.bf16.msra.mxu0 %v2238
    %2293 = vmatpush.bf16.msra.mxu0 %v2237
    %2294 = vmatpush.bf16.msra.mxu0 %v2236
    %2295 = vmatpush.bf16.msra.mxu0 %v2235
    %2296 = vmatpush.bf16.msra.mxu0 %v2234
    %2297 = vmatpush.bf16.msra.mxu0 %v2233
    %2298 = vmatpush.bf16.msra.mxu0 %v2232
    %2299 = vmatpush.bf16.msra.mxu0 %v2231
    %2300 = vmatmul.bf16.gmra.mxu0 %v2291
    %v2301 = vpop.f32.mrf.mxu0
    %v2302 = vadd.f32 %v413, %v2301
    %v2303 = vpop.f32.mrf.mxu0
    %2304 = vdwg.mxu0
    %2305 = vmatpush.bf16.msra.mxu0 %v2246
    %2306 = vmatpush.bf16.msra.mxu0 %v2245
    %2307 = vmatpush.bf16.msra.mxu0 %v2244
    %2308 = vmatpush.bf16.msra.mxu0 %v2243
    %2309 = vmatpush.bf16.msra.mxu0 %v2242
    %2310 = vmatpush.bf16.msra.mxu0 %v2241
    %2311 = vmatpush.bf16.msra.mxu0 %v2240
    %2312 = vmatpush.bf16.msra.mxu0 %v2239
    %2313 = vmatmul.bf16.gmra.mxu0 %v2290
    %v2314 = vpop.f32.mrf.mxu0
    %v2315 = vadd.f32 %v2302, %v2314
    %v2316 = vpop.f32.mrf.mxu0
    %2317 = vdwg.mxu0
    %v2318 = vtanh.pop %v2286
    %v2319 = vtanh.pop %v2315
    %2320 = vst [vmem:[%s376] sm:$0xff] %v2318
    %2321 = vst [vmem:[%s376 + $0x8] sm:$0xff] %v2319
    %v2322 = vld [vmem:[#allocation2 + $0x70] sm:$0xff]
    %v2323 = vld [vmem:[#allocation2 + $0x78] sm:$0xff]
    %v2324 = vld [vmem:[#allocation3] sm:$0xff]
    %v2325 = vpack.c.bf16 %v2324, %v2324
    %v2326 = vld [vmem:[#allocation10] sm:$0xf]
    %v2327 = vld [vmem:[#allocation10 + $0x4] sm:$0xf]
    %v2328 = vld [vmem:[#allocation10 + $0x8] sm:$0xf]
    %v2329 = vld [vmem:[#allocation10 + $0xc] sm:$0xf]
    %v2330 = vld [vmem:[#allocation10 + $0x10] sm:$0xf]
    %v2331 = vld [vmem:[#allocation10 + $0x14] sm:$0xf]
    %v2332 = vld [vmem:[#allocation10 + $0x18] sm:$0xf]
    %v2333 = vld [vmem:[#allocation10 + $0x1c] sm:$0xf]
    %v2334 = vld [vmem:[#allocation10 + $0x20] sm:$0xf]
    %v2335 = vld [vmem:[#allocation10 + $0x24] sm:$0xf]
    %v2336 = vld [vmem:[#allocation10 + $0x28] sm:$0xf]
    %v2337 = vld [vmem:[#allocation10 + $0x2c] sm:$0xf]
    %v2338 = vld [vmem:[#allocation10 + $0x30] sm:$0xf]
    %v2339 = vld [vmem:[#allocation10 + $0x34] sm:$0xf]
    %v2340 = vld [vmem:[#allocation10 + $0x38] sm:$0xf]
    %v2341 = vld [vmem:[#allocation10 + $0x3c] sm:$0xf]
    %v2358 = vunpack.c.l.b16 %v2326
    %v2359 = vunpack.c.l.b16 %v2327
    %v2360 = vunpack.c.l.b16 %v2328
    %v2361 = vunpack.c.l.b16 %v2329
    %v2362 = vunpack.c.l.b16 %v2330
    %v2363 = vunpack.c.l.b16 %v2331
    %v2364 = vunpack.c.l.b16 %v2332
    %v2365 = vunpack.c.l.b16 %v2333
    %v2366 = vunpack.c.l.b16 %v2334
    %v2367 = vunpack.c.l.b16 %v2335
    %v2368 = vunpack.c.l.b16 %v2336
    %v2369 = vunpack.c.l.b16 %v2337
    %v2370 = vunpack.c.l.b16 %v2338
    %v2371 = vunpack.c.l.b16 %v2339
    %v2372 = vunpack.c.l.b16 %v2340
    %v2373 = vunpack.c.l.b16 %v2341
    %v2374 = vpack.c.b16 %v2359, %v2358
    %v2375 = vpack.c.b16 %v2361, %v2360
    %v2376 = vpack.c.b16 %v2363, %v2362
    %v2377 = vpack.c.b16 %v2365, %v2364
    %v2378 = vpack.c.b16 %v2367, %v2366
    %v2379 = vpack.c.b16 %v2369, %v2368
    %v2380 = vpack.c.b16 %v2371, %v2370
    %v2381 = vpack.c.b16 %v2373, %v2372
    %2390 = vmatpush.bf16.msra.mxu0 %v2381
    %2391 = vmatpush.bf16.msra.mxu0 %v2380
    %2392 = vmatpush.bf16.msra.mxu0 %v2379
    %2393 = vmatpush.bf16.msra.mxu0 %v2378
    %2394 = vmatpush.bf16.msra.mxu0 %v2377
    %2395 = vmatpush.bf16.msra.mxu0 %v2376
    %2396 = vmatpush.bf16.msra.mxu0 %v2375
    %2397 = vmatpush.bf16.msra.mxu0 %v2374
    %2398 = vmatmul.bf16.gmra.mxu0 %v2325
    %v2399 = vpop.f32.mrf.mxu0
    %v2400 = vadd.f32 0.0, %v2399
    %v2401 = vpop.f32.mrf.mxu0
    %2402 = vdwg.mxu0
    %v2403 = vadd.f32 %v2322, %v2400
    %v2404 = vld [vmem:[#allocation3 + $0x8] sm:$0xff]
    %v2405 = vpack.c.bf16 %v2404, %v2404
    %2406 = vmatpush.bf16.msra.mxu0 %v2381
    %2407 = vmatpush.bf16.msra.mxu0 %v2380
    %2408 = vmatpush.bf16.msra.mxu0 %v2379
    %2409 = vmatpush.bf16.msra.mxu0 %v2378
    %2410 = vmatpush.bf16.msra.mxu0 %v2377
    %2411 = vmatpush.bf16.msra.mxu0 %v2376
    %2412 = vmatpush.bf16.msra.mxu0 %v2375
    %2413 = vmatpush.bf16.msra.mxu0 %v2374
    %2414 = vmatmul.bf16.gmra.mxu0 %v2405
    %v2415 = vpop.f32.mrf.mxu0
    %v2416 = vadd.f32 0.0, %v2415
    %v2417 = vpop.f32.mrf.mxu0
    %2418 = vdwg.mxu0
    %v2419 = vadd.f32 %v2323, %v2416
    %v2420 = vtanh.pop %v2403
    %v2421 = vtanh.pop %v2419
    %2422 = vst [vmem:[#allocation3] sm:$0xff] %v2420
    %2423 = vst [vmem:[#allocation3 + $0x8] sm:$0xff] %v2421
    %v2424 = vld [vmem:[%s376] sm:$0xff]
    %v2425 = vpack.c.bf16 %v2424, %v2424
    %v2426 = vpack.c.bf16 %v2420, %v2420
    %v2427 = vld [vmem:[#allocation9] sm:$0xf]
    %v2428 = vld [vmem:[#allocation9 + $0x4] sm:$0xf]
    %v2429 = vld [vmem:[#allocation9 + $0x8] sm:$0xf]
    %v2430 = vld [vmem:[#allocation9 + $0xc] sm:$0xf]
    %v2431 = vld [vmem:[#allocation9 + $0x10] sm:$0xf]
    %v2432 = vld [vmem:[#allocation9 + $0x14] sm:$0xf]
    %v2433 = vld [vmem:[#allocation9 + $0x18] sm:$0xf]
    %v2434 = vld [vmem:[#allocation9 + $0x1c] sm:$0xf]
    %v2435 = vld [vmem:[#allocation9 + $0x20] sm:$0xf]
    %v2436 = vld [vmem:[#allocation9 + $0x24] sm:$0xf]
    %v2437 = vld [vmem:[#allocation9 + $0x28] sm:$0xf]
    %v2438 = vld [vmem:[#allocation9 + $0x2c] sm:$0xf]
    %v2439 = vld [vmem:[#allocation9 + $0x30] sm:$0xf]
    %v2440 = vld [vmem:[#allocation9 + $0x34] sm:$0xf]
    %v2441 = vld [vmem:[#allocation9 + $0x38] sm:$0xf]
    %v2442 = vld [vmem:[#allocation9 + $0x3c] sm:$0xf]
    %v2443 = vld [vmem:[#allocation9 + $0x40] sm:$0xf]
    %v2444 = vld [vmem:[#allocation9 + $0x44] sm:$0xf]
    %v2445 = vld [vmem:[#allocation9 + $0x48] sm:$0xf]
    %v2446 = vld [vmem:[#allocation9 + $0x4c] sm:$0xf]
    %v2447 = vld [vmem:[#allocation9 + $0x50] sm:$0xf]
    %v2448 = vld [vmem:[#allocation9 + $0x54] sm:$0xf]
    %v2449 = vld [vmem:[#allocation9 + $0x58] sm:$0xf]
    %v2450 = vld [vmem:[#allocation9 + $0x5c] sm:$0xf]
    %v2451 = vld [vmem:[#allocation9 + $0x60] sm:$0xf]
    %v2452 = vld [vmem:[#allocation9 + $0x64] sm:$0xf]
    %v2453 = vld [vmem:[#allocation9 + $0x68] sm:$0xf]
    %v2454 = vld [vmem:[#allocation9 + $0x6c] sm:$0xf]
    %v2455 = vld [vmem:[#allocation9 + $0x70] sm:$0xf]
    %v2456 = vld [vmem:[#allocation9 + $0x74] sm:$0xf]
    %v2457 = vld [vmem:[#allocation9 + $0x78] sm:$0xf]
    %v2458 = vld [vmem:[#allocation9 + $0x7c] sm:$0xf]
    %v2491 = vunpack.c.l.b16 %v2427
    %v2492 = vunpack.c.l.b16 %v2428
    %v2493 = vunpack.c.l.b16 %v2429
    %v2494 = vunpack.c.l.b16 %v2430
    %v2495 = vunpack.c.l.b16 %v2431
    %v2496 = vunpack.c.l.b16 %v2432
    %v2497 = vunpack.c.l.b16 %v2433
    %v2498 = vunpack.c.l.b16 %v2434
    %v2499 = vunpack.c.l.b16 %v2435
    %v2500 = vunpack.c.l.b16 %v2436
    %v2501 = vunpack.c.l.b16 %v2437
    %v2502 = vunpack.c.l.b16 %v2438
    %v2503 = vunpack.c.l.b16 %v2439
    %v2504 = vunpack.c.l.b16 %v2440
    %v2505 = vunpack.c.l.b16 %v2441
    %v2506 = vunpack.c.l.b16 %v2442
    %v2507 = vunpack.c.l.b16 %v2443
    %v2508 = vunpack.c.l.b16 %v2444
    %v2509 = vunpack.c.l.b16 %v2445
    %v2510 = vunpack.c.l.b16 %v2446
    %v2511 = vunpack.c.l.b16 %v2447
    %v2512 = vunpack.c.l.b16 %v2448
    %v2513 = vunpack.c.l.b16 %v2449
    %v2514 = vunpack.c.l.b16 %v2450
    %v2515 = vunpack.c.l.b16 %v2451
    %v2516 = vunpack.c.l.b16 %v2452
    %v2517 = vunpack.c.l.b16 %v2453
    %v2518 = vunpack.c.l.b16 %v2454
    %v2519 = vunpack.c.l.b16 %v2455
    %v2520 = vunpack.c.l.b16 %v2456
    %v2521 = vunpack.c.l.b16 %v2457
    %v2522 = vunpack.c.l.b16 %v2458
    %v2523 = vpack.c.b16 %v2492, %v2491
    %v2524 = vpack.c.b16 %v2494, %v2493
    %v2525 = vpack.c.b16 %v2496, %v2495
    %v2526 = vpack.c.b16 %v2498, %v2497
    %v2527 = vpack.c.b16 %v2500, %v2499
    %v2528 = vpack.c.b16 %v2502, %v2501
    %v2529 = vpack.c.b16 %v2504, %v2503
    %v2530 = vpack.c.b16 %v2506, %v2505
    %v2531 = vpack.c.b16 %v2508, %v2507
    %v2532 = vpack.c.b16 %v2510, %v2509
    %v2533 = vpack.c.b16 %v2512, %v2511
    %v2534 = vpack.c.b16 %v2514, %v2513
    %v2535 = vpack.c.b16 %v2516, %v2515
    %v2536 = vpack.c.b16 %v2518, %v2517
    %v2537 = vpack.c.b16 %v2520, %v2519
    %v2538 = vpack.c.b16 %v2522, %v2521
    %2555 = vmatpush.bf16.msra.mxu0 %v2530
    %2556 = vmatpush.bf16.msra.mxu0 %v2529
    %2557 = vmatpush.bf16.msra.mxu0 %v2528
    %2558 = vmatpush.bf16.msra.mxu0 %v2527
    %2559 = vmatpush.bf16.msra.mxu0 %v2526
    %2560 = vmatpush.bf16.msra.mxu0 %v2525
    %2561 = vmatpush.bf16.msra.mxu0 %v2524
    %2562 = vmatpush.bf16.msra.mxu0 %v2523
    %2563 = vmatmul.bf16.gmra.mxu0 %v2426
    %v2564 = vpop.f32.mrf.mxu0
    %v2565 = vadd.f32 %v413, %v2564
    %v2566 = vpop.f32.mrf.mxu0
    %2567 = vdwg.mxu0
    %2568 = vmatpush.bf16.msra.mxu0 %v2538
    %2569 = vmatpush.bf16.msra.mxu0 %v2537
    %2570 = vmatpush.bf16.msra.mxu0 %v2536
    %2571 = vmatpush.bf16.msra.mxu0 %v2535
    %2572 = vmatpush.bf16.msra.mxu0 %v2534
    %2573 = vmatpush.bf16.msra.mxu0 %v2533
    %2574 = vmatpush.bf16.msra.mxu0 %v2532
    %2575 = vmatpush.bf16.msra.mxu0 %v2531
    %2576 = vmatmul.bf16.gmra.mxu0 %v2425
    %v2577 = vpop.f32.mrf.mxu0
    %v2578 = vadd.f32 %v2565, %v2577
    %v2579 = vpop.f32.mrf.mxu0
    %2580 = vdwg.mxu0
    %v2581 = vld [vmem:[%s376 + $0x8] sm:$0xff]
    %v2582 = vpack.c.bf16 %v2581, %v2581
    %v2583 = vpack.c.bf16 %v2421, %v2421
    %2584 = vmatpush.bf16.msra.mxu0 %v2530
    %2585 = vmatpush.bf16.msra.mxu0 %v2529
    %2586 = vmatpush.bf16.msra.mxu0 %v2528
    %2587 = vmatpush.bf16.msra.mxu0 %v2527
    %2588 = vmatpush.bf16.msra.mxu0 %v2526
    %2589 = vmatpush.bf16.msra.mxu0 %v2525
    %2590 = vmatpush.bf16.msra.mxu0 %v2524
    %2591 = vmatpush.bf16.msra.mxu0 %v2523
    %2592 = vmatmul.bf16.gmra.mxu0 %v2583
    %v2593 = vpop.f32.mrf.mxu0
    %v2594 = vadd.f32 %v413, %v2593
    %v2595 = vpop.f32.mrf.mxu0
    %2596 = vdwg.mxu0
    %2597 = vmatpush.bf16.msra.mxu0 %v2538
    %2598 = vmatpush.bf16.msra.mxu0 %v2537
    %2599 = vmatpush.bf16.msra.mxu0 %v2536
    %2600 = vmatpush.bf16.msra.mxu0 %v2535
    %2601 = vmatpush.bf16.msra.mxu0 %v2534
    %2602 = vmatpush.bf16.msra.mxu0 %v2533
    %2603 = vmatpush.bf16.msra.mxu0 %v2532
    %2604 = vmatpush.bf16.msra.mxu0 %v2531
    %2605 = vmatmul.bf16.gmra.mxu0 %v2582
    %v2606 = vpop.f32.mrf.mxu0
    %v2607 = vadd.f32 %v2594, %v2606
    %v2608 = vpop.f32.mrf.mxu0
    %2609 = vdwg.mxu0
    %v2610 = vtanh.pop %v2578
    %v2611 = vtanh.pop %v2607
    %2612 = vst [vmem:[%s376] sm:$0xff] %v2610
    %2613 = vst [vmem:[%s376 + $0x8] sm:$0xff] %v2611
    // Predicated region
    $region54: #{tpu_custom_call.1} parent=1 // pred_check
      %p2614 = pneg %p106
    $region55: #{tpu_custom_call.1} parent=1 // pred_check_branch
      %2616 = sbr.rel (%p2614) target = $region57
    $region56: #{tpu_custom_call.1} parent=1 // pred_region
      %v2617 = vld [vmem:[%s376] sm:$0xff]
      %v2618 = vld [vmem:[%s376 + $0x8] sm:$0xff]
      %v2619 = vmax.f32 %v2617, 0.0
      %v2620 = vmax.f32 %v2618, 0.0
      %v2621 = vpack.c.bf16 %v2620, %v2619
      %v2622 = vld [vmem:[#allocation12] sm:$0xf]
      %v2623 = vld [vmem:[#allocation12 + $0x4] sm:$0xf]
      %v2624 = vld [vmem:[#allocation12 + $0x8] sm:$0xf]
      %v2625 = vld [vmem:[#allocation12 + $0xc] sm:$0xf]
      %v2626 = vld [vmem:[#allocation12 + $0x10] sm:$0xf]
      %v2627 = vld [vmem:[#allocation12 + $0x14] sm:$0xf]
      %v2628 = vld [vmem:[#allocation12 + $0x18] sm:$0xf]
      %v2629 = vld [vmem:[#allocation12 + $0x1c] sm:$0xf]
      %v2630 = vld [vmem:[#allocation12 + $0x20] sm:$0xf]
      %v2631 = vld [vmem:[#allocation12 + $0x24] sm:$0xf]
      %v2632 = vld [vmem:[#allocation12 + $0x28] sm:$0xf]
      %v2633 = vld [vmem:[#allocation12 + $0x2c] sm:$0xf]
      %v2634 = vld [vmem:[#allocation12 + $0x30] sm:$0xf]
      %v2635 = vld [vmem:[#allocation12 + $0x34] sm:$0xf]
      %v2636 = vld [vmem:[#allocation12 + $0x38] sm:$0xf]
      %v2637 = vld [vmem:[#allocation12 + $0x3c] sm:$0xf]
      %v2638 = vld [vmem:[%s6] sm:$0x1]
      %v2640 = vperm.slane %v2638, 0
      %v2658 = vunpack.c.l.b16 %v2622
      %v2659 = vunpack.c.l.b16 %v2623
      %v2660 = vunpack.c.l.b16 %v2624
      %v2661 = vunpack.c.l.b16 %v2625
      %v2662 = vunpack.c.l.b16 %v2626
      %v2663 = vunpack.c.l.b16 %v2627
      %v2664 = vunpack.c.l.b16 %v2628
      %v2665 = vunpack.c.l.b16 %v2629
      %v2666 = vunpack.c.l.b16 %v2630
      %v2667 = vunpack.c.l.b16 %v2631
      %v2668 = vunpack.c.l.b16 %v2632
      %v2669 = vunpack.c.l.b16 %v2633
      %v2670 = vunpack.c.l.b16 %v2634
      %v2671 = vunpack.c.l.b16 %v2635
      %v2672 = vunpack.c.l.b16 %v2636
      %v2673 = vunpack.c.l.b16 %v2637
      %v2674 = vpack.c.b16 %v2659, %v2658
      %v2675 = vpack.c.b16 %v2661, %v2660
      %v2676 = vpack.c.b16 %v2663, %v2662
      %v2677 = vpack.c.b16 %v2665, %v2664
      %v2678 = vpack.c.b16 %v2667, %v2666
      %v2679 = vpack.c.b16 %v2669, %v2668
      %v2680 = vpack.c.b16 %v2671, %v2670
      %v2681 = vpack.c.b16 %v2673, %v2672
      %2690 = vmatpush.bf16.msra.mxu0 %v2681
      %2691 = vmatpush.bf16.msra.mxu0 %v2680
      %2692 = vmatpush.bf16.msra.mxu0 %v2679
      %2693 = vmatpush.bf16.msra.mxu0 %v2678
      %2694 = vmatpush.bf16.msra.mxu0 %v2677
      %2695 = vmatpush.bf16.msra.mxu0 %v2676
      %2696 = vmatpush.bf16.msra.mxu0 %v2675
      %2697 = vmatpush.bf16.msra.mxu0 %v2674
      %2698 = vmatmul.bf16.gmra.mxu0 %v2621
      %v2699 = vpop.f32.mrf.mxu0
      %v2700 = vadd.f32 %v2640, %v2699
      %v2701 = vpop.f32.mrf.mxu0
      %v2702 = vadd.f32 %v2640, %v2701
      %2703 = vdwg.mxu0
      %2704 = vst [vmem:[#allocation13] sm:$0xff] %v2700
      %2705 = vst [vmem:[#allocation13 + $0x8] sm:$0xff] %v2702
    $region57: #{tpu_custom_call.1} parent=1 // pred_fallthru
      _
    // Predicated region
    $region58: #{tpu_custom_call.1} parent=1 // pred_check
      _
    $region59: #{tpu_custom_call.1} parent=1 // pred_check_branch
      %2707 = sbr.rel (0) target = $region61
    $region60: #{tpu_custom_call.1} parent=1 // pred_region
      %2709 = vsyncadd [#allocation6], 0
      %s2710 = sshll.u32 [#allocation13], 4
      %s2711 = int_to_ptr.vmem [resolvable:$true] %s2710
      %s2712 = sshll.u32 %s7, 4
      %s2713 = int_to_ptr.hbm [resolvable:$true] %s2712
      %2718 = dma.vmem_to_hbm [thread:$0]  %s2711, 256, %s2713, [#allocation6], 128, 128, 8
    $region61: #{tpu_custom_call.1} parent=1 // pred_fallthru
      _
    // Predicated region
    $region62: #{tpu_custom_call.1} parent=1 // pred_check
      _
    $region63: #{tpu_custom_call.1} parent=1 // pred_check_branch
      %2720 = sbr.rel (0) target = $region65
    $region64: #{tpu_custom_call.1} parent=1 // pred_region
      %2722 = dma.done [#allocation6], 256
    $region65: #{tpu_custom_call.1} parent=1 // pred_fallthru
      _
    %2723 = vsyncpa [#allocation5], 1
    %2724 = vsyncpa [#allocation8], 1
    %2725 = vsyncpa [#allocation11], 1
    %2726 = vsyncpa [#allocation6], 1

</llo_original>
